<compile_context>
chip_gen: v5e
topology: v5e:2x2
jax: 0.10.0
libtpu: 0.0.40
codegen_flags: <defaults>
</compile_context>

<pallas_src>
import functools
import math

import jax
import jax.numpy as jnp
from jax.experimental import pallas as pl
from jax.experimental.pallas import tpu as pltpu


# ----------------------------- constants -----------------------------

DROPOUT = 0.05346129216584067  # identity at inference
HIDDEN_DIM = 128
INPUT_DIM = 4
NUM_CLASSES = 2
NUM_HEADS = 4
NUM_LAYERS = 4
SEQ_LEN_MAX = 800
K_PROJ = 256
CLS_PAD = 128  # lane-friendly padded classifier width


def _row_tile(m, cap=512):
    for t in (512, 256, 128, 64, 32, 16, 8):
        if t <= cap and m % t == 0:
            return t
    return m  # full-extent block is always legal


# exact (erf) GELU, built from exp/abs/where so it always lowers on Mosaic.
# Abramowitz & Stegun 7.1.26 rational approx: |err| < 1.5e-7 (float32-level exact).
def _erf(x):
    a1, a2, a3, a4, a5 = 0.254829592, -0.284496736, 1.421413741, -1.453152027, 1.061405429
    p = 0.3275911
    ax = jnp.abs(x)
    t = 1.0 / (1.0 + p * ax)
    poly = ((((a5 * t + a4) * t + a3) * t + a2) * t + a1) * t
    y = 1.0 - poly * jnp.exp(-ax * ax)
    return jnp.where(x >= 0, y, -y)


def _gelu_exact(x):
    return 0.5 * x * (1.0 + _erf(x * 0.7071067811865476))


# ----------------------------- kernels -----------------------------

def _embed_kernel(x_ref, w_ref, b_ref, pos_ref, o_ref):
    # x: (1, N, Din), w: (Din, D) bf16, b: (1, D), pos: (N, D)
    x = x_ref[0].astype(jnp.bfloat16)
    y = jnp.dot(x, w_ref[...], preferred_element_type=jnp.float32)
    o_ref[0] = y + b_ref[...] + pos_ref[...]


def embed(x, w_bf, b, pos):
    B, N, Din = x.shape
    D = w_bf.shape[1]
    return pl.pallas_call(
        _embed_kernel,
        out_shape=jax.ShapeDtypeStruct((B, N, D), jnp.float32),
        grid=(B,),
        in_specs=[pl.BlockSpec((1, N, Din), lambda b: (b, 0, 0)),
                  pl.BlockSpec((Din, D), lambda b: (0, 0)),
                  pl.BlockSpec((1, D), lambda b: (0, 0)),
                  pl.BlockSpec((N, D), lambda b: (0, 0))],
        out_specs=pl.BlockSpec((1, N, D), lambda b: (b, 0, 0)),
        compiler_params=pltpu.CompilerParams(dimension_semantics=("parallel",)),
    )(x, w_bf, b, pos)


def _attn_block_kernel(h_ref, g_ref, b_ref, wq_ref, wkv_ref, pkv_ref, wo_ref, bo_ref,
                       o_ref, *, heads, scale, proj_first):
    h = h_ref[0]                                             # (N, D) f32 residual
    # PreNorm LayerNorm (eps=1e-5, matches torch)
    mu = jnp.mean(h, axis=-1, keepdims=True)
    var = jnp.mean(jnp.square(h - mu), axis=-1, keepdims=True)
    hn = (h - mu) * jax.lax.rsqrt(var + 1e-5) * g_ref[...] + b_ref[...]
    hn_bf = hn.astype(jnp.bfloat16)

    D = wq_ref.shape[0]
    kp = pkv_ref.shape[1] // 2

    # Q projection (no bias)
    q = jnp.dot(hn_bf, wq_ref[...], preferred_element_type=jnp.float32)          # (N, D)

    if proj_first:
        # N > k: project the sequence first (one fused (2k, N)@(N, D) matmul), then Wk / Wv.
        pkv = jax.lax.dot_general(pkv_ref[...], hn_bf, (((0,), (0,)), ((), ())),
                                  preferred_element_type=jnp.float32)            # (2kp, D)
        pkv_bf = pkv.astype(jnp.bfloat16)
        wkv = wkv_ref[...]
        k = jnp.dot(pkv_bf[:kp], wkv[:, :D], preferred_element_type=jnp.float32)  # (kp, D)
        v = jnp.dot(pkv_bf[kp:], wkv[:, D:], preferred_element_type=jnp.float32)  # (kp, D)
    else:
        # N <= k: apply Wk / Wv first as one fused (N, D)@(D, 2D) matmul, then project.
        kvf = jnp.dot(hn_bf, wkv_ref[...], preferred_element_type=jnp.float32)    # (N, 2D)
        kvf_bf = kvf.astype(jnp.bfloat16)
        pall = pkv_ref[...]
        k = jax.lax.dot_general(pall[:, :kp], kvf_bf[:, :D], (((0,), (0,)), ((), ())),
                                preferred_element_type=jnp.float32)               # (kp, D)
        v = jax.lax.dot_general(pall[:, kp:], kvf_bf[:, D:], (((0,), (0,)), ((), ())),
                                preferred_element_type=jnp.float32)               # (kp, D)

    q_bf = q.astype(jnp.bfloat16)
    k_bf = k.astype(jnp.bfloat16)
    v_bf = v.astype(jnp.bfloat16)
    dh = D // heads

    head_outs = []
    for hh in range(heads):                                  # static unrolled, H=4
        sl = slice(hh * dh, (hh + 1) * dh)
        dots = jax.lax.dot_general(q_bf[:, sl], k_bf[:, sl], (((1,), (1,)), ((), ())),
                                   preferred_element_type=jnp.float32) * scale    # (N, kp)
        m = jnp.max(dots, axis=-1, keepdims=True)
        e = jnp.exp(dots - m)
        attn = e * pl.reciprocal(jnp.sum(e, axis=-1, keepdims=True), approx=True)
        head_outs.append(jnp.dot(attn.astype(jnp.bfloat16), v_bf[:, sl],
                                 preferred_element_type=jnp.float32))
    att = jnp.concatenate(head_outs, axis=-1)                # (N, D) lane-dense

    out = jnp.dot(att.astype(jnp.bfloat16), wo_ref[...],
                  preferred_element_type=jnp.float32) + bo_ref[...]
    o_ref[0] = h + out                                       # residual


def attention_block(h, ln_g, ln_b, wq, wkv, proj_kv, wo, bo, *, heads, scale):
    B, N, D = h.shape
    kp2 = proj_kv.shape[1]
    proj_first = N > (kp2 // 2)                              # static (trace-time) choice
    return pl.pallas_call(
        functools.partial(_attn_block_kernel, heads=heads, scale=scale,
                          proj_first=proj_first),
        out_shape=jax.ShapeDtypeStruct((B, N, D), jnp.float32),
        grid=(B,),
        in_specs=[pl.BlockSpec((1, N, D), lambda b: (b, 0, 0)),   # h
                  pl.BlockSpec((1, D), lambda b: (0, 0)),         # ln gamma
                  pl.BlockSpec((1, D), lambda b: (0, 0)),         # ln beta
                  pl.BlockSpec((D, D), lambda b: (0, 0)),         # wq (bf16)
                  pl.BlockSpec((D, 2 * D), lambda b: (0, 0)),     # [wk | wv] (bf16)
                  pl.BlockSpec((N, kp2), lambda b: (0, 0)),       # [proj_k | proj_v][:N] (bf16)
                  pl.BlockSpec((D, D), lambda b: (0, 0)),         # wo (bf16)
                  pl.BlockSpec((1, D), lambda b: (0, 0))],        # bo
        out_specs=pl.BlockSpec((1, N, D), lambda b: (b, 0, 0)),
        compiler_params=pltpu.CompilerParams(dimension_semantics=("parallel",)),
    )(h, ln_g, ln_b, wq, wkv, proj_kv, wo, bo)


def _ffn_kernel(h_ref, g_ref, b_ref, w1_ref, b1_ref, w2_ref, b2_ref, o_ref):
    h = h_ref[...]                                           # (tile_m, D)
    mu = jnp.mean(h, axis=-1, keepdims=True)
    var = jnp.mean(jnp.square(h - mu), axis=-1, keepdims=True)
    hn = (h - mu) * jax.lax.rsqrt(var + 1e-5) * g_ref[...] + b_ref[...]
    f = jnp.dot(hn.astype(jnp.bfloat16), w1_ref[...],
                preferred_element_type=jnp.float32) + b1_ref[...]
    f = _gelu_exact(f)
    out = jnp.dot(f.astype(jnp.bfloat16), w2_ref[...],
                  preferred_element_type=jnp.float32) + b2_ref[...]
    o_ref[...] = h + out                                     # residual


def ffn_block(h2d, ln_g, ln_b, w1, b1, w2, b2, *, tile_m):
    M, D = h2d.shape
    Dff = w1.shape[1]
    return pl.pallas_call(
        _ffn_kernel,
        out_shape=jax.ShapeDtypeStruct((M, D), jnp.float32),
        grid=(M // tile_m,),
        in_specs=[pl.BlockSpec((tile_m, D), lambda i: (i, 0)),
                  pl.BlockSpec((1, D), lambda i: (0, 0)),
                  pl.BlockSpec((1, D), lambda i: (0, 0)),
                  pl.BlockSpec((D, Dff), lambda i: (0, 0)),
                  pl.BlockSpec((1, Dff), lambda i: (0, 0)),
                  pl.BlockSpec((Dff, D), lambda i: (0, 0)),
                  pl.BlockSpec((1, D), lambda i: (0, 0))],
        out_specs=pl.BlockSpec((tile_m, D), lambda i: (i, 0)),
        compiler_params=pltpu.CompilerParams(dimension_semantics=("parallel",)),
    )(h2d, ln_g, ln_b, w1, b1, w2, b2)


def _mean_fc_kernel(x_ref, w_ref, b_ref, o_ref, acc_ref, *, inv_n):
    # accumulate sequence sums across the N-tile grid axis, matmul once at the end
    @pl.when(pl.program_id(0) == 0)
    def _():
        acc_ref[...] = jnp.zeros_like(acc_ref)

    acc_ref[...] += jnp.sum(x_ref[...], axis=1)              # (B, D)

    @pl.when(pl.program_id(0) == pl.num_programs(0) - 1)
    def _():
        xm = (acc_ref[...] * inv_n).astype(jnp.bfloat16)
        o_ref[...] = jnp.dot(xm, w_ref[...], preferred_element_type=jnp.float32) + b_ref[...]


def mean_classifier(h, w_pad, b_pad, *, tile_n):
    B, N, D = h.shape
    C = w_pad.shape[1]
    return pl.pallas_call(
        functools.partial(_mean_fc_kernel, inv_n=1.0 / N),
        out_shape=jax.ShapeDtypeStruct((B, C), jnp.float32),
        grid=(N // tile_n,),
        in_specs=[pl.BlockSpec((B, tile_n, D), lambda j: (0, j, 0)),
                  pl.BlockSpec((D, C), lambda j: (0, 0)),
                  pl.BlockSpec((1, C), lambda j: (0, 0))],
        out_specs=pl.BlockSpec((B, C), lambda j: (0, 0)),
        scratch_shapes=[pltpu.VMEM((B, D), jnp.float32)],
        compiler_params=pltpu.CompilerParams(dimension_semantics=("arbitrary",)),
    )(h, w_pad, b_pad)


# ----------------------------- model -----------------------------

def init_params(key):
    def dense(k, shape, scale):
        return (scale * jax.random.normal(k, shape)).astype(jnp.float32)

    keys = iter(jax.random.split(key, 8 + 12 * NUM_LAYERS))
    D = HIDDEN_DIM
    params = {
        "emb_w": dense(next(keys), (INPUT_DIM, D), 1.0 / math.sqrt(INPUT_DIM)),
        "emb_b": dense(next(keys), (1, D), 0.02),
        "pos": dense(next(keys), (1, SEQ_LEN_MAX, D), 0.02),
        "fc_w": dense(next(keys), (D, NUM_CLASSES), 1.0 / math.sqrt(D)),
        "fc_b": dense(next(keys), (1, NUM_CLASSES), 0.02),
        "layers": [],
    }
    for _ in range(NUM_LAYERS):
        lp = {
            "ln1_g": jnp.ones((1, D), jnp.float32),
            "ln1_b": jnp.zeros((1, D), jnp.float32),
            "wq": dense(next(keys), (D, D), 1.0 / math.sqrt(D)),
            "wk": dense(next(keys), (D, D), 1.0 / math.sqrt(D)),
            "wv": dense(next(keys), (D, D), 1.0 / math.sqrt(D)),
            "proj_k": dense(next(keys), (SEQ_LEN_MAX, K_PROJ), 1.0 / math.sqrt(K_PROJ)),
            "proj_v": dense(next(keys), (SEQ_LEN_MAX, K_PROJ), 1.0 / math.sqrt(K_PROJ)),
            "wo": dense(next(keys), (D, D), 1.0 / math.sqrt(D)),
            "bo": dense(next(keys), (1, D), 0.02),
            "ln2_g": jnp.ones((1, D), jnp.float32),
            "ln2_b": jnp.zeros((1, D), jnp.float32),
            "w1": dense(next(keys), (D, 4 * D), 1.0 / math.sqrt(D)),
            "b1": dense(next(keys), (1, 4 * D), 0.02),
            "w2": dense(next(keys), (4 * D, D), 1.0 / math.sqrt(4 * D)),
            "b2": dense(next(keys), (1, D), 0.02),
        }
        params["layers"].append(lp)
    return params


def linformer_transformer_forward(params, x):
    B, N, _ = x.shape
    D, H = HIDDEN_DIM, NUM_HEADS
    dh = D // H
    scale = dh ** -0.5
    bf = lambda a: a.astype(jnp.bfloat16)

    # embedding + positional encoding (pos added inside the kernel)
    pos = params["pos"][0, :N, :]                            # (N, D)
    h = embed(x, bf(params["emb_w"]), params["emb_b"], pos)  # (B, N, D) f32

    tile_m = _row_tile(B * N)

    for lp in params["layers"]:
        # fused PreNorm Linformer self-attention + residual (one kernel, grid over batch)
        wkv = jnp.concatenate([lp["wk"], lp["wv"]], axis=1)                  # (D, 2D)
        proj_kv = jnp.concatenate([lp["proj_k"][:N], lp["proj_v"][:N]], axis=1)  # (N, 2k)
        h = attention_block(
            h, lp["ln1_g"], lp["ln1_b"],
            bf(lp["wq"]), bf(wkv), bf(proj_kv),
            bf(lp["wo"]), lp["bo"],
            heads=H, scale=scale)

        # fused PreNorm FeedForward (exact GELU, mult=4) + residual (one kernel, M-tiled)
        h = ffn_block(h.reshape(B * N, D), lp["ln2_g"], lp["ln2_b"],
                      bf(lp["w1"]), lp["b1"], bf(lp["w2"]), lp["b2"],
                      tile_m=tile_m).reshape(B, N, D)

    # mean over sequence + classifier head; output padded to 128 lanes, sliced outside
    w_pad = jnp.pad(params["fc_w"], ((0, 0), (0, CLS_PAD - NUM_CLASSES)))
    b_pad = jnp.pad(params["fc_b"], ((0, 0), (0, CLS_PAD - NUM_CLASSES)))
    tile_n = _row_tile(N, cap=256)
    logits_pad = mean_classifier(h, bf(w_pad), b_pad, tile_n=tile_n)   # (B, 128)
    return logits_pad[:, :NUM_CLASSES]


# ----------------------------- main -----------------------------

if __name__ == "__main__":
    key = jax.random.PRNGKey(0)
    pkey, xkey = jax.random.split(key)

    params = init_params(pkey)

    B, N = 2, 16                                             # small shapes (N <= 800)
    x = jax.random.normal(xkey, (B, N, INPUT_DIM), dtype=jnp.float32)

    fwd = jax.jit(linformer_transformer_forward)
    logits = fwd(params, x)
    jax.block_until_ready(logits)

    assert logits.shape == (B, NUM_CLASSES)
    assert bool(jnp.all(jnp.isfinite(logits)))
    print("KERNEL_OK")
</pallas_src>

<mosaic_0001>
module attributes {stable_mosaic.version = 11 : i64} {
  func.func @_attn_block_kernel(%arg0: i32, %arg1: memref<1x16x128xf32, #tpu.memory_space<vmem>>, %arg2: memref<1x128xf32, #tpu.memory_space<vmem>>, %arg3: memref<1x128xf32, #tpu.memory_space<vmem>>, %arg4: memref<128x128xbf16, #tpu.memory_space<vmem>>, %arg5: memref<128x256xbf16, #tpu.memory_space<vmem>>, %arg6: memref<16x512xbf16, #tpu.memory_space<vmem>>, %arg7: memref<128x128xbf16, #tpu.memory_space<vmem>>, %arg8: memref<1x128xf32, #tpu.memory_space<vmem>>, %arg9: memref<1x16x128xf32, #tpu.memory_space<vmem>>) attributes {dimension_semantics = [#tpu.dimension_semantics<parallel>], iteration_bounds = array<i64: 2>, scalar_prefetch = 0 : i64, scratch_operands = 0 : i64, tpu.core_type = #tpu.core_type<tc>, window_params = [{transform_indices = @transform_0, window_bounds = array<i64: 1, 16, 128>}, {pipeline_mode = #tpu.pipeline_mode<synchronous>, transform_indices = @transform_1, window_bounds = array<i64: 1, 128>}, {pipeline_mode = #tpu.pipeline_mode<synchronous>, transform_indices = @transform_2, window_bounds = array<i64: 1, 128>}, {pipeline_mode = #tpu.pipeline_mode<synchronous>, transform_indices = @transform_3, window_bounds = array<i64: 128, 128>}, {pipeline_mode = #tpu.pipeline_mode<synchronous>, transform_indices = @transform_4, window_bounds = array<i64: 128, 256>}, {pipeline_mode = #tpu.pipeline_mode<synchronous>, transform_indices = @transform_5, window_bounds = array<i64: 16, 512>}, {pipeline_mode = #tpu.pipeline_mode<synchronous>, transform_indices = @transform_6, window_bounds = array<i64: 128, 128>}, {pipeline_mode = #tpu.pipeline_mode<synchronous>, transform_indices = @transform_7, window_bounds = array<i64: 1, 128>}, {transform_indices = @transform_8, window_bounds = array<i64: 1, 16, 128>}]} {
    %c0 = arith.constant 0 : index
    %c0_0 = arith.constant 0 : index
    %c0_1 = arith.constant 0 : index
    %0 = vector.load %arg1[%c0, %c0_0, %c0_1] : memref<1x16x128xf32, #tpu.memory_space<vmem>>, vector<1x16x128xf32>
    %1 = vector.shape_cast %0 : vector<1x16x128xf32> to vector<16x128xf32>
    %cst = arith.constant dense<0.000000e+00> : vector<16xf32>
    %2 = vector.multi_reduction <add>, %1, %cst [1] : vector<16x128xf32> to vector<16xf32>
    %3 = vector.shape_cast %2 : vector<16xf32> to vector<16x1xf32>
    %cst_2 = arith.constant 1.280000e+02 : f32
    %4 = vector.broadcast %cst_2 : f32 to vector<16x1xf32>
    %5 = arith.divf %3, %4 : vector<16x1xf32>
    %6 = vector.broadcast %5 : vector<16x1xf32> to vector<16x128xf32>
    %7 = arith.subf %1, %6 : vector<16x128xf32>
    %8 = arith.mulf %7, %7 : vector<16x128xf32>
    %cst_3 = arith.constant dense<0.000000e+00> : vector<16xf32>
    %9 = vector.multi_reduction <add>, %8, %cst_3 [1] : vector<16x128xf32> to vector<16xf32>
    %10 = vector.shape_cast %9 : vector<16xf32> to vector<16x1xf32>
    %cst_4 = arith.constant 1.280000e+02 : f32
    %11 = vector.broadcast %cst_4 : f32 to vector<16x1xf32>
    %12 = arith.divf %10, %11 : vector<16x1xf32>
    %13 = vector.broadcast %5 : vector<16x1xf32> to vector<16x128xf32>
    %14 = arith.subf %1, %13 : vector<16x128xf32>
    %cst_5 = arith.constant 9.99999974E-6 : f32
    %15 = vector.broadcast %cst_5 : f32 to vector<16x1xf32>
    %16 = arith.addf %12, %15 : vector<16x1xf32>
    %17 = math.rsqrt %16 : vector<16x1xf32>
    %18 = vector.broadcast %17 : vector<16x1xf32> to vector<16x128xf32>
    %19 = arith.mulf %14, %18 : vector<16x128xf32>
    %c0_6 = arith.constant 0 : index
    %c0_7 = arith.constant 0 : index
    %20 = vector.load %arg2[%c0_6, %c0_7] : memref<1x128xf32, #tpu.memory_space<vmem>>, vector<1x128xf32>
    %21 = vector.broadcast %20 : vector<1x128xf32> to vector<16x128xf32>
    %22 = arith.mulf %19, %21 : vector<16x128xf32>
    %c0_8 = arith.constant 0 : index
    %c0_9 = arith.constant 0 : index
    %23 = vector.load %arg3[%c0_8, %c0_9] : memref<1x128xf32, #tpu.memory_space<vmem>>, vector<1x128xf32>
    %24 = vector.broadcast %23 : vector<1x128xf32> to vector<16x128xf32>
    %25 = arith.addf %22, %24 : vector<16x128xf32>
    %26 = arith.truncf %25 : vector<16x128xf32> to vector<16x128xbf16>
    %c0_10 = arith.constant 0 : index
    %c0_11 = arith.constant 0 : index
    %27 = vector.load %arg4[%c0_10, %c0_11] : memref<128x128xbf16, #tpu.memory_space<vmem>>, vector<128x128xbf16>
    %cst_12 = arith.constant dense<0.000000e+00> : vector<16x128xf32>
    %28 = tpu.matmul %26, %27, %cst_12 {dimension_numbers = #tpu.dot_dimension_numbers<[1], [0], [0], [1], [0, 0, 1, 1], [], []>} : vector<16x128xbf16>, vector<128x128xbf16>, vector<16x128xf32> -> vector<16x128xf32>
    %c0_13 = arith.constant 0 : index
    %c0_14 = arith.constant 0 : index
    %29 = vector.load %arg5[%c0_13, %c0_14] : memref<128x256xbf16, #tpu.memory_space<vmem>>, vector<128x256xbf16>
    %cst_15 = arith.constant dense<0.000000e+00> : vector<16x256xf32>
    %30 = tpu.matmul %26, %29, %cst_15 {dimension_numbers = #tpu.dot_dimension_numbers<[1], [0], [0], [1], [0, 0, 1, 1], [], []>} : vector<16x128xbf16>, vector<128x256xbf16>, vector<16x256xf32> -> vector<16x256xf32>
    %31 = arith.truncf %30 : vector<16x256xf32> to vector<16x256xbf16>
    %c0_16 = arith.constant 0 : index
    %c0_17 = arith.constant 0 : index
    %32 = vector.load %arg6[%c0_16, %c0_17] : memref<16x512xbf16, #tpu.memory_space<vmem>>, vector<16x512xbf16>
    %33 = vector.extract_strided_slice %32 {offsets = [0, 0], sizes = [16, 256], strides = [1, 1]} : vector<16x512xbf16> to vector<16x256xbf16>
    %34 = vector.extract_strided_slice %31 {offsets = [0, 0], sizes = [16, 128], strides = [1, 1]} : vector<16x256xbf16> to vector<16x128xbf16>
    %cst_18 = arith.constant dense<0.000000e+00> : vector<256x128xf32>
    %35 = tpu.matmul %33, %34, %cst_18 {dimension_numbers = #tpu.dot_dimension_numbers<[0], [0], [1], [1], [0, 1, 1, 1], [], []>} : vector<16x256xbf16>, vector<16x128xbf16>, vector<256x128xf32> -> vector<256x128xf32>
    %36 = vector.extract_strided_slice %32 {offsets = [0, 256], sizes = [16, 256], strides = [1, 1]} : vector<16x512xbf16> to vector<16x256xbf16>
    %37 = vector.extract_strided_slice %31 {offsets = [0, 128], sizes = [16, 128], strides = [1, 1]} : vector<16x256xbf16> to vector<16x128xbf16>
    %cst_19 = arith.constant dense<0.000000e+00> : vector<256x128xf32>
    %38 = tpu.matmul %36, %37, %cst_19 {dimension_numbers = #tpu.dot_dimension_numbers<[0], [0], [1], [1], [0, 1, 1, 1], [], []>} : vector<16x256xbf16>, vector<16x128xbf16>, vector<256x128xf32> -> vector<256x128xf32>
    %39 = arith.truncf %28 : vector<16x128xf32> to vector<16x128xbf16>
    %40 = arith.truncf %35 : vector<256x128xf32> to vector<256x128xbf16>
    %41 = arith.truncf %38 : vector<256x128xf32> to vector<256x128xbf16>
    %42 = vector.extract_strided_slice %39 {offsets = [0, 0], sizes = [16, 32], strides = [1, 1]} : vector<16x128xbf16> to vector<16x32xbf16>
    %43 = vector.extract_strided_slice %40 {offsets = [0, 0], sizes = [256, 32], strides = [1, 1]} : vector<256x128xbf16> to vector<256x32xbf16>
    %cst_20 = arith.constant dense<0.000000e+00> : vector<16x256xf32>
    %44 = tpu.matmul %42, %43, %cst_20 {dimension_numbers = #tpu.dot_dimension_numbers<[1], [1], [0], [0], [0, 0, 1, 0], [], []>} : vector<16x32xbf16>, vector<256x32xbf16>, vector<16x256xf32> -> vector<16x256xf32>
    %cst_21 = arith.constant 0.176776692 : f32
    %45 = vector.broadcast %cst_21 : f32 to vector<16x256xf32>
    %46 = arith.mulf %44, %45 : vector<16x256xf32>
    %cst_22 = arith.constant dense<0xFF800000> : vector<16xf32>
    %47 = vector.multi_reduction <maximumf>, %46, %cst_22 [1] : vector<16x256xf32> to vector<16xf32>
    %48 = vector.shape_cast %47 : vector<16xf32> to vector<16x1xf32>
    %49 = vector.broadcast %48 : vector<16x1xf32> to vector<16x256xf32>
    %50 = arith.subf %46, %49 : vector<16x256xf32>
    %51 = math.exp %50 : vector<16x256xf32>
    %cst_23 = arith.constant dense<0.000000e+00> : vector<16xf32>
    %52 = vector.multi_reduction <add>, %51, %cst_23 [1] : vector<16x256xf32> to vector<16xf32>
    %53 = vector.shape_cast %52 : vector<16xf32> to vector<16x1xf32>
    %54 = tpu.reciprocal %53 {approx = true} : vector<16x1xf32> -> vector<16x1xf32>
    %55 = vector.broadcast %54 : vector<16x1xf32> to vector<16x256xf32>
    %56 = arith.mulf %51, %55 : vector<16x256xf32>
    %57 = arith.truncf %56 : vector<16x256xf32> to vector<16x256xbf16>
    %58 = vector.extract_strided_slice %41 {offsets = [0, 0], sizes = [256, 32], strides = [1, 1]} : vector<256x128xbf16> to vector<256x32xbf16>
    %cst_24 = arith.constant dense<0.000000e+00> : vector<16x32xf32>
    %59 = tpu.matmul %57, %58, %cst_24 {dimension_numbers = #tpu.dot_dimension_numbers<[1], [0], [0], [1], [0, 0, 1, 1], [], []>} : vector<16x256xbf16>, vector<256x32xbf16>, vector<16x32xf32> -> vector<16x32xf32>
    %60 = vector.extract_strided_slice %39 {offsets = [0, 32], sizes = [16, 32], strides = [1, 1]} : vector<16x128xbf16> to vector<16x32xbf16>
    %61 = vector.extract_strided_slice %40 {offsets = [0, 32], sizes = [256, 32], strides = [1, 1]} : vector<256x128xbf16> to vector<256x32xbf16>
    %cst_25 = arith.constant dense<0.000000e+00> : vector<16x256xf32>
    %62 = tpu.matmul %60, %61, %cst_25 {dimension_numbers = #tpu.dot_dimension_numbers<[1], [1], [0], [0], [0, 0, 1, 0], [], []>} : vector<16x32xbf16>, vector<256x32xbf16>, vector<16x256xf32> -> vector<16x256xf32>
    %cst_26 = arith.constant 0.176776692 : f32
    %63 = vector.broadcast %cst_26 : f32 to vector<16x256xf32>
    %64 = arith.mulf %62, %63 : vector<16x256xf32>
    %cst_27 = arith.constant dense<0xFF800000> : vector<16xf32>
    %65 = vector.multi_reduction <maximumf>, %64, %cst_27 [1] : vector<16x256xf32> to vector<16xf32>
    %66 = vector.shape_cast %65 : vector<16xf32> to vector<16x1xf32>
    %67 = vector.broadcast %66 : vector<16x1xf32> to vector<16x256xf32>
    %68 = arith.subf %64, %67 : vector<16x256xf32>
    %69 = math.exp %68 : vector<16x256xf32>
    %cst_28 = arith.constant dense<0.000000e+00> : vector<16xf32>
    %70 = vector.multi_reduction <add>, %69, %cst_28 [1] : vector<16x256xf32> to vector<16xf32>
    %71 = vector.shape_cast %70 : vector<16xf32> to vector<16x1xf32>
    %72 = tpu.reciprocal %71 {approx = true} : vector<16x1xf32> -> vector<16x1xf32>
    %73 = vector.broadcast %72 : vector<16x1xf32> to vector<16x256xf32>
    %74 = arith.mulf %69, %73 : vector<16x256xf32>
    %75 = arith.truncf %74 : vector<16x256xf32> to vector<16x256xbf16>
    %76 = vector.extract_strided_slice %41 {offsets = [0, 32], sizes = [256, 32], strides = [1, 1]} : vector<256x128xbf16> to vector<256x32xbf16>
    %cst_29 = arith.constant dense<0.000000e+00> : vector<16x32xf32>
    %77 = tpu.matmul %75, %76, %cst_29 {dimension_numbers = #tpu.dot_dimension_numbers<[1], [0], [0], [1], [0, 0, 1, 1], [], []>} : vector<16x256xbf16>, vector<256x32xbf16>, vector<16x32xf32> -> vector<16x32xf32>
    %78 = vector.extract_strided_slice %39 {offsets = [0, 64], sizes = [16, 32], strides = [1, 1]} : vector<16x128xbf16> to vector<16x32xbf16>
    %79 = vector.extract_strided_slice %40 {offsets = [0, 64], sizes = [256, 32], strides = [1, 1]} : vector<256x128xbf16> to vector<256x32xbf16>
    %cst_30 = arith.constant dense<0.000000e+00> : vector<16x256xf32>
    %80 = tpu.matmul %78, %79, %cst_30 {dimension_numbers = #tpu.dot_dimension_numbers<[1], [1], [0], [0], [0, 0, 1, 0], [], []>} : vector<16x32xbf16>, vector<256x32xbf16>, vector<16x256xf32> -> vector<16x256xf32>
    %cst_31 = arith.constant 0.176776692 : f32
    %81 = vector.broadcast %cst_31 : f32 to vector<16x256xf32>
    %82 = arith.mulf %80, %81 : vector<16x256xf32>
    %cst_32 = arith.constant dense<0xFF800000> : vector<16xf32>
    %83 = vector.multi_reduction <maximumf>, %82, %cst_32 [1] : vector<16x256xf32> to vector<16xf32>
    %84 = vector.shape_cast %83 : vector<16xf32> to vector<16x1xf32>
    %85 = vector.broadcast %84 : vector<16x1xf32> to vector<16x256xf32>
    %86 = arith.subf %82, %85 : vector<16x256xf32>
    %87 = math.exp %86 : vector<16x256xf32>
    %cst_33 = arith.constant dense<0.000000e+00> : vector<16xf32>
    %88 = vector.multi_reduction <add>, %87, %cst_33 [1] : vector<16x256xf32> to vector<16xf32>
    %89 = vector.shape_cast %88 : vector<16xf32> to vector<16x1xf32>
    %90 = tpu.reciprocal %89 {approx = true} : vector<16x1xf32> -> vector<16x1xf32>
    %91 = vector.broadcast %90 : vector<16x1xf32> to vector<16x256xf32>
    %92 = arith.mulf %87, %91 : vector<16x256xf32>
    %93 = arith.truncf %92 : vector<16x256xf32> to vector<16x256xbf16>
    %94 = vector.extract_strided_slice %41 {offsets = [0, 64], sizes = [256, 32], strides = [1, 1]} : vector<256x128xbf16> to vector<256x32xbf16>
    %cst_34 = arith.constant dense<0.000000e+00> : vector<16x32xf32>
    %95 = tpu.matmul %93, %94, %cst_34 {dimension_numbers = #tpu.dot_dimension_numbers<[1], [0], [0], [1], [0, 0, 1, 1], [], []>} : vector<16x256xbf16>, vector<256x32xbf16>, vector<16x32xf32> -> vector<16x32xf32>
    %96 = vector.extract_strided_slice %39 {offsets = [0, 96], sizes = [16, 32], strides = [1, 1]} : vector<16x128xbf16> to vector<16x32xbf16>
    %97 = vector.extract_strided_slice %40 {offsets = [0, 96], sizes = [256, 32], strides = [1, 1]} : vector<256x128xbf16> to vector<256x32xbf16>
    %cst_35 = arith.constant dense<0.000000e+00> : vector<16x256xf32>
    %98 = tpu.matmul %96, %97, %cst_35 {dimension_numbers = #tpu.dot_dimension_numbers<[1], [1], [0], [0], [0, 0, 1, 0], [], []>} : vector<16x32xbf16>, vector<256x32xbf16>, vector<16x256xf32> -> vector<16x256xf32>
    %cst_36 = arith.constant 0.176776692 : f32
    %99 = vector.broadcast %cst_36 : f32 to vector<16x256xf32>
    %100 = arith.mulf %98, %99 : vector<16x256xf32>
    %cst_37 = arith.constant dense<0xFF800000> : vector<16xf32>
    %101 = vector.multi_reduction <maximumf>, %100, %cst_37 [1] : vector<16x256xf32> to vector<16xf32>
    %102 = vector.shape_cast %101 : vector<16xf32> to vector<16x1xf32>
    %103 = vector.broadcast %102 : vector<16x1xf32> to vector<16x256xf32>
    %104 = arith.subf %100, %103 : vector<16x256xf32>
    %105 = math.exp %104 : vector<16x256xf32>
    %cst_38 = arith.constant dense<0.000000e+00> : vector<16xf32>
    %106 = vector.multi_reduction <add>, %105, %cst_38 [1] : vector<16x256xf32> to vector<16xf32>
    %107 = vector.shape_cast %106 : vector<16xf32> to vector<16x1xf32>
    %108 = tpu.reciprocal %107 {approx = true} : vector<16x1xf32> -> vector<16x1xf32>
    %109 = vector.broadcast %108 : vector<16x1xf32> to vector<16x256xf32>
    %110 = arith.mulf %105, %109 : vector<16x256xf32>
    %111 = arith.truncf %110 : vector<16x256xf32> to vector<16x256xbf16>
    %112 = vector.extract_strided_slice %41 {offsets = [0, 96], sizes = [256, 32], strides = [1, 1]} : vector<256x128xbf16> to vector<256x32xbf16>
    %cst_39 = arith.constant dense<0.000000e+00> : vector<16x32xf32>
    %113 = tpu.matmul %111, %112, %cst_39 {dimension_numbers = #tpu.dot_dimension_numbers<[1], [0], [0], [1], [0, 0, 1, 1], [], []>} : vector<16x256xbf16>, vector<256x32xbf16>, vector<16x32xf32> -> vector<16x32xf32>
    %114 = tpu.concatenate %59, %77, %95, %113 in 1 : vector<16x32xf32>, vector<16x32xf32>, vector<16x32xf32>, vector<16x32xf32> -> vector<16x128xf32>
    %115 = arith.truncf %114 : vector<16x128xf32> to vector<16x128xbf16>
    %c0_40 = arith.constant 0 : index
    %c0_41 = arith.constant 0 : index
    %116 = vector.load %arg7[%c0_40, %c0_41] : memref<128x128xbf16, #tpu.memory_space<vmem>>, vector<128x128xbf16>
    %cst_42 = arith.constant dense<0.000000e+00> : vector<16x128xf32>
    %117 = tpu.matmul %115, %116, %cst_42 {dimension_numbers = #tpu.dot_dimension_numbers<[1], [0], [0], [1], [0, 0, 1, 1], [], []>} : vector<16x128xbf16>, vector<128x128xbf16>, vector<16x128xf32> -> vector<16x128xf32>
    %c0_43 = arith.constant 0 : index
    %c0_44 = arith.constant 0 : index
    %118 = vector.load %arg8[%c0_43, %c0_44] : memref<1x128xf32, #tpu.memory_space<vmem>>, vector<1x128xf32>
    %119 = vector.broadcast %118 : vector<1x128xf32> to vector<16x128xf32>
    %120 = arith.addf %117, %119 : vector<16x128xf32>
    %121 = arith.addf %1, %120 : vector<16x128xf32>
    %c0_45 = arith.constant 0 : index
    %c0_46 = arith.constant 0 : index
    %c0_47 = arith.constant 0 : index
    %122 = vector.load %arg9[%c0_45, %c0_46, %c0_47] : memref<1x16x128xf32, #tpu.memory_space<vmem>>, vector<1x16x128xf32>
    %123 = vector.shape_cast %122 : vector<1x16x128xf32> to vector<16x128xf32>
    %124 = vector.shape_cast %121 : vector<16x128xf32> to vector<1x16x128xf32>
    tpu.vector_store %arg9[%c0_45, %c0_46, %c0_47], %124 {strides = array<i32>} : memref<1x16x128xf32, #tpu.memory_space<vmem>>, vector<1x16x128xf32>,
    return
  }
  func.func @transform_0(%arg0: i32) -> (i32, i32, i32) {
    %c0_i32 = arith.constant 0 : i32
    %c0_i32_0 = arith.constant 0 : i32
    %c0_i32_1 = arith.constant 0 : i32
    return %arg0, %c0_i32, %c0_i32_0 : i32, i32, i32
  }
  func.func @transform_1(%arg0: i32) -> (i32, i32) {
    %c0_i32 = arith.constant 0 : i32
    %c0_i32_0 = arith.constant 0 : i32
    %c0_i32_1 = arith.constant 0 : i32
    return %c0_i32, %c0_i32_0 : i32, i32
  }
  func.func @transform_2(%arg0: i32) -> (i32, i32) {
    %c0_i32 = arith.constant 0 : i32
    %c0_i32_0 = arith.constant 0 : i32
    %c0_i32_1 = arith.constant 0 : i32
    return %c0_i32, %c0_i32_0 : i32, i32
  }
  func.func @transform_3(%arg0: i32) -> (i32, i32) {
    %c0_i32 = arith.constant 0 : i32
    %c0_i32_0 = arith.constant 0 : i32
    %c0_i32_1 = arith.constant 0 : i32
    return %c0_i32, %c0_i32_0 : i32, i32
  }
  func.func @transform_4(%arg0: i32) -> (i32, i32) {
    %c0_i32 = arith.constant 0 : i32
    %c0_i32_0 = arith.constant 0 : i32
    %c0_i32_1 = arith.constant 0 : i32
    return %c0_i32, %c0_i32_0 : i32, i32
  }
  func.func @transform_5(%arg0: i32) -> (i32, i32) {
    %c0_i32 = arith.constant 0 : i32
    %c0_i32_0 = arith.constant 0 : i32
    %c0_i32_1 = arith.constant 0 : i32
    return %c0_i32, %c0_i32_0 : i32, i32
  }
  func.func @transform_6(%arg0: i32) -> (i32, i32) {
    %c0_i32 = arith.constant 0 : i32
    %c0_i32_0 = arith.constant 0 : i32
    %c0_i32_1 = arith.constant 0 : i32
    return %c0_i32, %c0_i32_0 : i32, i32
  }
  func.func @transform_7(%arg0: i32) -> (i32, i32) {
    %c0_i32 = arith.constant 0 : i32
    %c0_i32_0 = arith.constant 0 : i32
    %c0_i32_1 = arith.constant 0 : i32
    return %c0_i32, %c0_i32_0 : i32, i32
  }
  func.func @transform_8(%arg0: i32) -> (i32, i32, i32) {
    %c0_i32 = arith.constant 0 : i32
    %c0_i32_0 = arith.constant 0 : i32
    %c0_i32_1 = arith.constant 0 : i32
    return %arg0, %c0_i32, %c0_i32_0 : i32, i32, i32
  }
}

module attributes {stable_mosaic.version = 11 : i64} {
  func.func @_embed_kernel(%arg0: i32, %arg1: memref<1x16x4xf32, #tpu.memory_space<vmem>>, %arg2: memref<4x128xbf16, #tpu.memory_space<vmem>>, %arg3: memref<1x128xf32, #tpu.memory_space<vmem>>, %arg4: memref<16x128xf32, #tpu.memory_space<vmem>>, %arg5: memref<1x16x128xf32, #tpu.memory_space<vmem>>) attributes {dimension_semantics = [#tpu.dimension_semantics<parallel>], iteration_bounds = array<i64: 2>, scalar_prefetch = 0 : i64, scratch_operands = 0 : i64, tpu.core_type = #tpu.core_type<tc>, window_params = [{transform_indices = @transform_0, window_bounds = array<i64: 1, 16, 4>}, {pipeline_mode = #tpu.pipeline_mode<synchronous>, transform_indices = @transform_1, window_bounds = array<i64: 4, 128>}, {pipeline_mode = #tpu.pipeline_mode<synchronous>, transform_indices = @transform_2, window_bounds = array<i64: 1, 128>}, {pipeline_mode = #tpu.pipeline_mode<synchronous>, transform_indices = @transform_3, window_bounds = array<i64: 16, 128>}, {transform_indices = @transform_4, window_bounds = array<i64: 1, 16, 128>}]} {
    %c0 = arith.constant 0 : index
    %c0_0 = arith.constant 0 : index
    %c0_1 = arith.constant 0 : index
    %0 = vector.load %arg1[%c0, %c0_0, %c0_1] : memref<1x16x4xf32, #tpu.memory_space<vmem>>, vector<1x16x4xf32>
    %1 = vector.shape_cast %0 : vector<1x16x4xf32> to vector<16x4xf32>
    %2 = arith.truncf %1 : vector<16x4xf32> to vector<16x4xbf16>
    %c0_2 = arith.constant 0 : index
    %c0_3 = arith.constant 0 : index
    %3 = vector.load %arg2[%c0_2, %c0_3] : memref<4x128xbf16, #tpu.memory_space<vmem>>, vector<4x128xbf16>
    %cst = arith.constant dense<0.000000e+00> : vector<16x128xf32>
    %4 = tpu.matmul %2, %3, %cst {dimension_numbers = #tpu.dot_dimension_numbers<[1], [0], [0], [1], [0, 0, 1, 1], [], []>} : vector<16x4xbf16>, vector<4x128xbf16>, vector<16x128xf32> -> vector<16x128xf32>
    %c0_4 = arith.constant 0 : index
    %c0_5 = arith.constant 0 : index
    %5 = vector.load %arg3[%c0_4, %c0_5] : memref<1x128xf32, #tpu.memory_space<vmem>>, vector<1x128xf32>
    %6 = vector.broadcast %5 : vector<1x128xf32> to vector<16x128xf32>
    %7 = arith.addf %4, %6 : vector<16x128xf32>
    %c0_6 = arith.constant 0 : index
    %c0_7 = arith.constant 0 : index
    %8 = vector.load %arg4[%c0_6, %c0_7] : memref<16x128xf32, #tpu.memory_space<vmem>>, vector<16x128xf32>
    %9 = arith.addf %7, %8 : vector<16x128xf32>
    %c0_8 = arith.constant 0 : index
    %c0_9 = arith.constant 0 : index
    %c0_10 = arith.constant 0 : index
    %10 = vector.load %arg5[%c0_8, %c0_9, %c0_10] : memref<1x16x128xf32, #tpu.memory_space<vmem>>, vector<1x16x128xf32>
    %11 = vector.shape_cast %10 : vector<1x16x128xf32> to vector<16x128xf32>
    %12 = vector.shape_cast %9 : vector<16x128xf32> to vector<1x16x128xf32>
    tpu.vector_store %arg5[%c0_8, %c0_9, %c0_10], %12 {strides = array<i32>} : memref<1x16x128xf32, #tpu.memory_space<vmem>>, vector<1x16x128xf32>,
    return
  }
  func.func @transform_0(%arg0: i32) -> (i32, i32, i32) {
    %c0_i32 = arith.constant 0 : i32
    %c0_i32_0 = arith.constant 0 : i32
    %c0_i32_1 = arith.constant 0 : i32
    return %arg0, %c0_i32, %c0_i32_0 : i32, i32, i32
  }
  func.func @transform_1(%arg0: i32) -> (i32, i32) {
    %c0_i32 = arith.constant 0 : i32
    %c0_i32_0 = arith.constant 0 : i32
    %c0_i32_1 = arith.constant 0 : i32
    return %c0_i32, %c0_i32_0 : i32, i32
  }
  func.func @transform_2(%arg0: i32) -> (i32, i32) {
    %c0_i32 = arith.constant 0 : i32
    %c0_i32_0 = arith.constant 0 : i32
    %c0_i32_1 = arith.constant 0 : i32
    return %c0_i32, %c0_i32_0 : i32, i32
  }
  func.func @transform_3(%arg0: i32) -> (i32, i32) {
    %c0_i32 = arith.constant 0 : i32
    %c0_i32_0 = arith.constant 0 : i32
    %c0_i32_1 = arith.constant 0 : i32
    return %c0_i32, %c0_i32_0 : i32, i32
  }
  func.func @transform_4(%arg0: i32) -> (i32, i32, i32) {
    %c0_i32 = arith.constant 0 : i32
    %c0_i32_0 = arith.constant 0 : i32
    %c0_i32_1 = arith.constant 0 : i32
    return %arg0, %c0_i32, %c0_i32_0 : i32, i32, i32
  }
}

module attributes {stable_mosaic.version = 11 : i64} {
  func.func @_ffn_kernel(%arg0: i32, %arg1: memref<32x128xf32, #tpu.memory_space<vmem>>, %arg2: memref<1x128xf32, #tpu.memory_space<vmem>>, %arg3: memref<1x128xf32, #tpu.memory_space<vmem>>, %arg4: memref<128x512xbf16, #tpu.memory_space<vmem>>, %arg5: memref<1x512xf32, #tpu.memory_space<vmem>>, %arg6: memref<512x128xbf16, #tpu.memory_space<vmem>>, %arg7: memref<1x128xf32, #tpu.memory_space<vmem>>, %arg8: memref<32x128xf32, #tpu.memory_space<vmem>>) attributes {dimension_semantics = [#tpu.dimension_semantics<parallel>], iteration_bounds = array<i64: 1>, scalar_prefetch = 0 : i64, scratch_operands = 0 : i64, tpu.core_type = #tpu.core_type<tc>, window_params = [{transform_indices = @transform_0, window_bounds = array<i64: 32, 128>}, {pipeline_mode = #tpu.pipeline_mode<synchronous>, transform_indices = @transform_1, window_bounds = array<i64: 1, 128>}, {pipeline_mode = #tpu.pipeline_mode<synchronous>, transform_indices = @transform_2, window_bounds = array<i64: 1, 128>}, {pipeline_mode = #tpu.pipeline_mode<synchronous>, transform_indices = @transform_3, window_bounds = array<i64: 128, 512>}, {pipeline_mode = #tpu.pipeline_mode<synchronous>, transform_indices = @transform_4, window_bounds = array<i64: 1, 512>}, {pipeline_mode = #tpu.pipeline_mode<synchronous>, transform_indices = @transform_5, window_bounds = array<i64: 512, 128>}, {pipeline_mode = #tpu.pipeline_mode<synchronous>, transform_indices = @transform_6, window_bounds = array<i64: 1, 128>}, {transform_indices = @transform_7, window_bounds = array<i64: 32, 128>}]} {
    %c0 = arith.constant 0 : index
    %c0_0 = arith.constant 0 : index
    %0 = vector.load %arg1[%c0, %c0_0] : memref<32x128xf32, #tpu.memory_space<vmem>>, vector<32x128xf32>
    %cst = arith.constant dense<0.000000e+00> : vector<32xf32>
    %1 = vector.multi_reduction <add>, %0, %cst [1] : vector<32x128xf32> to vector<32xf32>
    %2 = vector.shape_cast %1 : vector<32xf32> to vector<32x1xf32>
    %cst_1 = arith.constant 1.280000e+02 : f32
    %3 = vector.broadcast %cst_1 : f32 to vector<32x1xf32>
    %4 = arith.divf %2, %3 : vector<32x1xf32>
    %5 = vector.broadcast %4 : vector<32x1xf32> to vector<32x128xf32>
    %6 = arith.subf %0, %5 : vector<32x128xf32>
    %7 = arith.mulf %6, %6 : vector<32x128xf32>
    %cst_2 = arith.constant dense<0.000000e+00> : vector<32xf32>
    %8 = vector.multi_reduction <add>, %7, %cst_2 [1] : vector<32x128xf32> to vector<32xf32>
    %9 = vector.shape_cast %8 : vector<32xf32> to vector<32x1xf32>
    %cst_3 = arith.constant 1.280000e+02 : f32
    %10 = vector.broadcast %cst_3 : f32 to vector<32x1xf32>
    %11 = arith.divf %9, %10 : vector<32x1xf32>
    %12 = vector.broadcast %4 : vector<32x1xf32> to vector<32x128xf32>
    %13 = arith.subf %0, %12 : vector<32x128xf32>
    %cst_4 = arith.constant 9.99999974E-6 : f32
    %14 = vector.broadcast %cst_4 : f32 to vector<32x1xf32>
    %15 = arith.addf %11, %14 : vector<32x1xf32>
    %16 = math.rsqrt %15 : vector<32x1xf32>
    %17 = vector.broadcast %16 : vector<32x1xf32> to vector<32x128xf32>
    %18 = arith.mulf %13, %17 : vector<32x128xf32>
    %c0_5 = arith.constant 0 : index
    %c0_6 = arith.constant 0 : index
    %19 = vector.load %arg2[%c0_5, %c0_6] : memref<1x128xf32, #tpu.memory_space<vmem>>, vector<1x128xf32>
    %20 = vector.broadcast %19 : vector<1x128xf32> to vector<32x128xf32>
    %21 = arith.mulf %18, %20 : vector<32x128xf32>
    %c0_7 = arith.constant 0 : index
    %c0_8 = arith.constant 0 : index
    %22 = vector.load %arg3[%c0_7, %c0_8] : memref<1x128xf32, #tpu.memory_space<vmem>>, vector<1x128xf32>
    %23 = vector.broadcast %22 : vector<1x128xf32> to vector<32x128xf32>
    %24 = arith.addf %21, %23 : vector<32x128xf32>
    %25 = arith.truncf %24 : vector<32x128xf32> to vector<32x128xbf16>
    %c0_9 = arith.constant 0 : index
    %c0_10 = arith.constant 0 : index
    %26 = vector.load %arg4[%c0_9, %c0_10] : memref<128x512xbf16, #tpu.memory_space<vmem>>, vector<128x512xbf16>
    %cst_11 = arith.constant dense<0.000000e+00> : vector<32x512xf32>
    %27 = tpu.matmul %25, %26, %cst_11 {dimension_numbers = #tpu.dot_dimension_numbers<[1], [0], [0], [1], [0, 0, 1, 1], [], []>} : vector<32x128xbf16>, vector<128x512xbf16>, vector<32x512xf32> -> vector<32x512xf32>
    %c0_12 = arith.constant 0 : index
    %c0_13 = arith.constant 0 : index
    %28 = vector.load %arg5[%c0_12, %c0_13] : memref<1x512xf32, #tpu.memory_space<vmem>>, vector<1x512xf32>
    %29 = vector.broadcast %28 : vector<1x512xf32> to vector<32x512xf32>
    %30 = arith.addf %27, %29 : vector<32x512xf32>
    %cst_14 = arith.constant 5.000000e-01 : f32
    %31 = vector.broadcast %cst_14 : f32 to vector<32x512xf32>
    %32 = arith.mulf %31, %30 : vector<32x512xf32>
    %cst_15 = arith.constant 0.707106769 : f32
    %33 = vector.broadcast %cst_15 : f32 to vector<32x512xf32>
    %34 = arith.mulf %30, %33 : vector<32x512xf32>
    %35 = math.absf %34 : vector<32x512xf32>
    %cst_16 = arith.constant 0.327591091 : f32
    %36 = vector.broadcast %cst_16 : f32 to vector<32x512xf32>
    %37 = arith.mulf %36, %35 : vector<32x512xf32>
    %cst_17 = arith.constant 1.000000e+00 : f32
    %38 = vector.broadcast %cst_17 : f32 to vector<32x512xf32>
    %39 = arith.addf %38, %37 : vector<32x512xf32>
    %cst_18 = arith.constant 1.000000e+00 : f32
    %40 = vector.broadcast %cst_18 : f32 to vector<32x512xf32>
    %41 = arith.divf %40, %39 : vector<32x512xf32>
    %cst_19 = arith.constant 1.06140542 : f32
    %42 = vector.broadcast %cst_19 : f32 to vector<32x512xf32>
    %43 = arith.mulf %42, %41 : vector<32x512xf32>
    %cst_20 = arith.constant -1.45315206 : f32
    %44 = vector.broadcast %cst_20 : f32 to vector<32x512xf32>
    %45 = arith.addf %43, %44 : vector<32x512xf32>
    %46 = arith.mulf %45, %41 : vector<32x512xf32>
    %cst_21 = arith.constant 1.42141378 : f32
    %47 = vector.broadcast %cst_21 : f32 to vector<32x512xf32>
    %48 = arith.addf %46, %47 : vector<32x512xf32>
    %49 = arith.mulf %48, %41 : vector<32x512xf32>
    %cst_22 = arith.constant -0.284496725 : f32
    %50 = vector.broadcast %cst_22 : f32 to vector<32x512xf32>
    %51 = arith.addf %49, %50 : vector<32x512xf32>
    %52 = arith.mulf %51, %41 : vector<32x512xf32>
    %cst_23 = arith.constant 0.254829586 : f32
    %53 = vector.broadcast %cst_23 : f32 to vector<32x512xf32>
    %54 = arith.addf %52, %53 : vector<32x512xf32>
    %55 = arith.mulf %54, %41 : vector<32x512xf32>
    %cst_24 = arith.constant 0.000000e+00 : f32
    %56 = vector.broadcast %cst_24 : f32 to vector<32x512xf32>
    %57 = arith.subf %56, %35 : vector<32x512xf32>
    %58 = arith.mulf %57, %35 : vector<32x512xf32>
    %59 = math.exp %58 : vector<32x512xf32>
    %60 = arith.mulf %55, %59 : vector<32x512xf32>
    %cst_25 = arith.constant 1.000000e+00 : f32
    %61 = vector.broadcast %cst_25 : f32 to vector<32x512xf32>
    %62 = arith.subf %61, %60 : vector<32x512xf32>
    %cst_26 = arith.constant 0.000000e+00 : f32
    %63 = vector.broadcast %cst_26 : f32 to vector<32x512xf32>
    %64 = arith.cmpf oge, %34, %63 : vector<32x512xf32>
    %cst_27 = arith.constant 0.000000e+00 : f32
    %65 = vector.broadcast %cst_27 : f32 to vector<32x512xf32>
    %66 = arith.subf %65, %62 : vector<32x512xf32>
    %67 = arith.select %64, %62, %66 : vector<32x512xi1>, vector<32x512xf32>
    %cst_28 = arith.constant 1.000000e+00 : f32
    %68 = vector.broadcast %cst_28 : f32 to vector<32x512xf32>
    %69 = arith.addf %68, %67 : vector<32x512xf32>
    %70 = arith.mulf %32, %69 : vector<32x512xf32>
    %71 = arith.truncf %70 : vector<32x512xf32> to vector<32x512xbf16>
    %c0_29 = arith.constant 0 : index
    %c0_30 = arith.constant 0 : index
    %72 = vector.load %arg6[%c0_29, %c0_30] : memref<512x128xbf16, #tpu.memory_space<vmem>>, vector<512x128xbf16>
    %cst_31 = arith.constant dense<0.000000e+00> : vector<32x128xf32>
    %73 = tpu.matmul %71, %72, %cst_31 {dimension_numbers = #tpu.dot_dimension_numbers<[1], [0], [0], [1], [0, 0, 1, 1], [], []>} : vector<32x512xbf16>, vector<512x128xbf16>, vector<32x128xf32> -> vector<32x128xf32>
    %c0_32 = arith.constant 0 : index
    %c0_33 = arith.constant 0 : index
    %74 = vector.load %arg7[%c0_32, %c0_33] : memref<1x128xf32, #tpu.memory_space<vmem>>, vector<1x128xf32>
    %75 = vector.broadcast %74 : vector<1x128xf32> to vector<32x128xf32>
    %76 = arith.addf %73, %75 : vector<32x128xf32>
    %77 = arith.addf %0, %76 : vector<32x128xf32>
    %c0_34 = arith.constant 0 : index
    %c0_35 = arith.constant 0 : index
    %78 = vector.load %arg8[%c0_34, %c0_35] : memref<32x128xf32, #tpu.memory_space<vmem>>, vector<32x128xf32>
    tpu.vector_store %arg8[%c0_34, %c0_35], %77 {strides = array<i32>} : memref<32x128xf32, #tpu.memory_space<vmem>>, vector<32x128xf32>,
    return
  }
  func.func @transform_0(%arg0: i32) -> (i32, i32) {
    %c0_i32 = arith.constant 0 : i32
    %c0_i32_0 = arith.constant 0 : i32
    return %arg0, %c0_i32 : i32, i32
  }
  func.func @transform_1(%arg0: i32) -> (i32, i32) {
    %c0_i32 = arith.constant 0 : i32
    %c0_i32_0 = arith.constant 0 : i32
    %c0_i32_1 = arith.constant 0 : i32
    return %c0_i32, %c0_i32_0 : i32, i32
  }
  func.func @transform_2(%arg0: i32) -> (i32, i32) {
    %c0_i32 = arith.constant 0 : i32
    %c0_i32_0 = arith.constant 0 : i32
    %c0_i32_1 = arith.constant 0 : i32
    return %c0_i32, %c0_i32_0 : i32, i32
  }
  func.func @transform_3(%arg0: i32) -> (i32, i32) {
    %c0_i32 = arith.constant 0 : i32
    %c0_i32_0 = arith.constant 0 : i32
    %c0_i32_1 = arith.constant 0 : i32
    return %c0_i32, %c0_i32_0 : i32, i32
  }
  func.func @transform_4(%arg0: i32) -> (i32, i32) {
    %c0_i32 = arith.constant 0 : i32
    %c0_i32_0 = arith.constant 0 : i32
    %c0_i32_1 = arith.constant 0 : i32
    return %c0_i32, %c0_i32_0 : i32, i32
  }
  func.func @transform_5(%arg0: i32) -> (i32, i32) {
    %c0_i32 = arith.constant 0 : i32
    %c0_i32_0 = arith.constant 0 : i32
    %c0_i32_1 = arith.constant 0 : i32
    return %c0_i32, %c0_i32_0 : i32, i32
  }
  func.func @transform_6(%arg0: i32) -> (i32, i32) {
    %c0_i32 = arith.constant 0 : i32
    %c0_i32_0 = arith.constant 0 : i32
    %c0_i32_1 = arith.constant 0 : i32
    return %c0_i32, %c0_i32_0 : i32, i32
  }
  func.func @transform_7(%arg0: i32) -> (i32, i32) {
    %c0_i32 = arith.constant 0 : i32
    %c0_i32_0 = arith.constant 0 : i32
    return %arg0, %c0_i32 : i32, i32
  }
}

module attributes {stable_mosaic.version = 11 : i64} {
  func.func @_mean_fc_kernel(%arg0: i32, %arg1: memref<2x16x128xf32, #tpu.memory_space<vmem>>, %arg2: memref<128x128xbf16, #tpu.memory_space<vmem>>, %arg3: memref<1x128xf32, #tpu.memory_space<vmem>>, %arg4: memref<2x128xf32, #tpu.memory_space<vmem>>, %arg5: memref<2x128xf32, #tpu.memory_space<vmem>>) attributes {dimension_semantics = [#tpu.dimension_semantics<arbitrary>], iteration_bounds = array<i64: 1>, scalar_prefetch = 0 : i64, scratch_operands = 1 : i64, tpu.core_type = #tpu.core_type<tc>, window_params = [{transform_indices = @transform_0, window_bounds = array<i64: 2, 16, 128>}, {pipeline_mode = #tpu.pipeline_mode<synchronous>, transform_indices = @transform_1, window_bounds = array<i64: 128, 128>}, {pipeline_mode = #tpu.pipeline_mode<synchronous>, transform_indices = @transform_2, window_bounds = array<i64: 1, 128>}, {pipeline_mode = #tpu.pipeline_mode<synchronous>, transform_indices = @transform_3, window_bounds = array<i64: 2, 128>}]} {
    %c0_i32 = arith.constant 0 : i32
    %0 = arith.cmpi eq, %arg0, %c0_i32 : i32
    %1 = arith.extui %0 : i1 to i32
    %c0_i32_0 = arith.constant 0 : i32
    %2 = arith.cmpi ne, %1, %c0_i32_0 : i32
    scf.if %2 {
      %cst_9 = arith.constant 0.000000e+00 : f32
      %11 = vector.broadcast %cst_9 : f32 to vector<2x128xf32>
      %c0_10 = arith.constant 0 : index
      %c0_11 = arith.constant 0 : index
      %12 = vector.load %arg5[%c0_10, %c0_11] : memref<2x128xf32, #tpu.memory_space<vmem>>, vector<2x128xf32>
      tpu.vector_store %arg5[%c0_10, %c0_11], %11 {strides = array<i32>} : memref<2x128xf32, #tpu.memory_space<vmem>>, vector<2x128xf32>,
    } else {
    }
    %c0 = arith.constant 0 : index
    %c0_1 = arith.constant 0 : index
    %3 = vector.load %arg5[%c0, %c0_1] : memref<2x128xf32, #tpu.memory_space<vmem>>, vector<2x128xf32>
    %c0_2 = arith.constant 0 : index
    %c0_3 = arith.constant 0 : index
    %c0_4 = arith.constant 0 : index
    %4 = vector.load %arg1[%c0_2, %c0_3, %c0_4] : memref<2x16x128xf32, #tpu.memory_space<vmem>>, vector<2x16x128xf32>
    %cst = arith.constant dense<0.000000e+00> : vector<2x128xf32>
    %5 = vector.multi_reduction <add>, %4, %cst [1] : vector<2x16x128xf32> to vector<2x128xf32>
    %6 = arith.addf %3, %5 : vector<2x128xf32>
    %c0_5 = arith.constant 0 : index
    %c0_6 = arith.constant 0 : index
    %7 = vector.load %arg5[%c0_5, %c0_6] : memref<2x128xf32, #tpu.memory_space<vmem>>, vector<2x128xf32>
    tpu.vector_store %arg5[%c0_5, %c0_6], %6 {strides = array<i32>} : memref<2x128xf32, #tpu.memory_space<vmem>>, vector<2x128xf32>,
    %c0_i32_7 = arith.constant 0 : i32
    %8 = arith.cmpi eq, %arg0, %c0_i32_7 : i32
    %9 = arith.extui %8 : i1 to i32
    %c0_i32_8 = arith.constant 0 : i32
    %10 = arith.cmpi ne, %9, %c0_i32_8 : i32
    scf.if %10 {
      %c0_9 = arith.constant 0 : index
      %c0_10 = arith.constant 0 : index
      %11 = vector.load %arg5[%c0_9, %c0_10] : memref<2x128xf32, #tpu.memory_space<vmem>>, vector<2x128xf32>
      %cst_11 = arith.constant 6.250000e-02 : f32
      %12 = vector.broadcast %cst_11 : f32 to vector<2x128xf32>
      %13 = arith.mulf %11, %12 : vector<2x128xf32>
      %14 = arith.truncf %13 : vector<2x128xf32> to vector<2x128xbf16>
      %c0_12 = arith.constant 0 : index
      %c0_13 = arith.constant 0 : index
      %15 = vector.load %arg2[%c0_12, %c0_13] : memref<128x128xbf16, #tpu.memory_space<vmem>>, vector<128x128xbf16>
      %cst_14 = arith.constant dense<0.000000e+00> : vector<2x128xf32>
      %16 = tpu.matmul %14, %15, %cst_14 {dimension_numbers = #tpu.dot_dimension_numbers<[1], [0], [0], [1], [0, 0, 1, 1], [], []>} : vector<2x128xbf16>, vector<128x128xbf16>, vector<2x128xf32> -> vector<2x128xf32>
      %c0_15 = arith.constant 0 : index
      %c0_16 = arith.constant 0 : index
      %17 = vector.load %arg3[%c0_15, %c0_16] : memref<1x128xf32, #tpu.memory_space<vmem>>, vector<1x128xf32>
      %18 = vector.broadcast %17 : vector<1x128xf32> to vector<2x128xf32>
      %19 = arith.addf %16, %18 : vector<2x128xf32>
      %c0_17 = arith.constant 0 : index
      %c0_18 = arith.constant 0 : index
      %20 = vector.load %arg4[%c0_17, %c0_18] : memref<2x128xf32, #tpu.memory_space<vmem>>, vector<2x128xf32>
      tpu.vector_store %arg4[%c0_17, %c0_18], %19 {strides = array<i32>} : memref<2x128xf32, #tpu.memory_space<vmem>>, vector<2x128xf32>,
    } else {
    }
    return
  }
  func.func @transform_0(%arg0: i32) -> (i32, i32, i32) {
    %c0_i32 = arith.constant 0 : i32
    %c0_i32_0 = arith.constant 0 : i32
    %c0_i32_1 = arith.constant 0 : i32
    return %c0_i32, %arg0, %c0_i32_0 : i32, i32, i32
  }
  func.func @transform_1(%arg0: i32) -> (i32, i32) {
    %c0_i32 = arith.constant 0 : i32
    %c0_i32_0 = arith.constant 0 : i32
    %c0_i32_1 = arith.constant 0 : i32
    return %c0_i32, %c0_i32_0 : i32, i32
  }
  func.func @transform_2(%arg0: i32) -> (i32, i32) {
    %c0_i32 = arith.constant 0 : i32
    %c0_i32_0 = arith.constant 0 : i32
    %c0_i32_1 = arith.constant 0 : i32
    return %c0_i32, %c0_i32_0 : i32, i32
  }
  func.func @transform_3(%arg0: i32) -> (i32, i32) {
    %c0_i32 = arith.constant 0 : i32
    %c0_i32_0 = arith.constant 0 : i32
    %c0_i32_1 = arith.constant 0 : i32
    return %c0_i32, %c0_i32_0 : i32, i32
  }
}

</mosaic_0001>

<llo_original>
// kernel: linformer_transformer_forward.10
$region0: #{linformer_transformer_forward.10}
  #allocation0 [shape = 'u32[]', space=smem, size = 0x4, offset = 0x4, fixed_abs, tag = 'smem constant byte address 0x4 - core index']
  #allocation1 [shape = 'u32[72,128]{1,0:T(1,128)}', space=vmem, size = 0x9000, scoped, tag = 'internal scratch']
  %s0 = inlined_call_operand.vmem [shape: f32[2,16,4], index: 0, kind: input, shape index: {}]
  %s1 = inlined_call_operand.vmem [shape: bf16[4,128], index: 1, kind: input, shape index: {}]
  %s2 = inlined_call_operand.vmem [shape: f32[1,128], index: 2, kind: input, shape index: {}]
  %s3 = inlined_call_operand.vmem [shape: f32[16,128], index: 3, kind: input, shape index: {}]
  %s4 = inlined_call_operand.vmem [shape: f32[2,16,128], index: 4, kind: output, shape index: {}]
  %s5 = sld [smem:[#allocation0]]
  $region49: #{linformer_transformer_forward.10} parent=0
    _
  %s7 = ssub.s32 1, %s5
  %s8 = scalar_select 0, %s7, %s5
  loop: start=0, step=1, limit=4
  $region2: #{linformer_transformer_forward.10} parent=0 // loop_pre_header
    _
  $region3: #{linformer_transformer_forward.10} parent=0 // loop_header
    %s10 = sphi 0, %s14
    %p11 = scmp.ge.s32.totalorder %s10, 4
    %s20 = sphi 0, %s22
    %s23 = sphi 0, %s20
    %s24 = sphi 0, %s23
    %s40 = sphi 0, %s24
    %s44 = sphi 0, %s44
    %s46 = sphi 0, %s44
    %s47 = sphi 0, %s46
    %s61 = sphi 0, %s47
    %s65 = sphi 0, %s65
    %s67 = sphi 0, %s65
    %s68 = sphi 0, %s67
    %s82 = sphi 0, %s68
    %s86 = sphi 0, %s86
    %s88 = sphi 0, %s86
    %s89 = sphi 0, %s88
    %s103 = sphi 0, %s89
    %s109 = sphi 0, %s111
    %s112 = sphi 0, %s109
    %s113 = sphi 0, %s112
    %s129 = sphi 0, %s113
  $region4: #{linformer_transformer_forward.10} parent=0 // loop_header_branch
    %13 = sbr.rel (%p11) target = $region8
  $region5: #{linformer_transformer_forward.10} parent=0 // loop_body
    %s15 = ssub.s32 %s10, 1
    %s16 = ssub.s32 %s10, 2
    %s17 = sadd.s32 %s10, 1
    %s18 = ssub.s32 %s10, %s17
    %p19 = scmp.eq.s32.totalorder %s18, 0
    %s21 = sadd.s32 %s20, 1
    %s22 = scalar_select %p19, %s20, %s21
    %p25 = pneg %p19
    %p26 = scmp.eq.s32.totalorder %s10, 1
    %p27 = por %p25, %p26
    %p28 = scmp.ne.s32.totalorder %s20, %s23
    %p29 = scmp.eq.s32.totalorder %s10, 0
    %p30 = por %p28, %p29
    %p31 = scmp.ne.s32.totalorder %s20, %s23
    %p32 = scmp.eq.s32.totalorder %s15, 1
    %p33 = por %p31, %p32
    %p34 = scmp.ne.s32.totalorder %s23, %s24
    %p35 = scmp.eq.s32.totalorder %s15, 0
    %p36 = por %p34, %p35
    %p37 = scmp.ne.s32.totalorder %s23, %s24
    %p38 = scmp.eq.s32.totalorder %s16, 1
    %p39 = por %p37, %p38
    %p41 = scmp.ne.s32.totalorder %s24, %s40
    %p42 = scmp.eq.s32.totalorder %s16, 0
    %p43 = por %p41, %p42
    %s45 = sadd.s32 %s44, 1
    %p48 = scmp.eq.s32.totalorder %s10, 1
    %p49 = scmp.ne.s32.totalorder %s44, %s46
    %p50 = scmp.eq.s32.totalorder %s10, 0
    %p51 = por %p49, %p50
    %p52 = scmp.ne.s32.totalorder %s44, %s46
    %p53 = scmp.eq.s32.totalorder %s15, 1
    %p54 = por %p52, %p53
    %p55 = scmp.ne.s32.totalorder %s46, %s47
    %p56 = scmp.eq.s32.totalorder %s15, 0
    %p57 = por %p55, %p56
    %p58 = scmp.ne.s32.totalorder %s46, %s47
    %p59 = scmp.eq.s32.totalorder %s16, 1
    %p60 = por %p58, %p59
    %p62 = scmp.ne.s32.totalorder %s47, %s61
    %p63 = scmp.eq.s32.totalorder %s16, 0
    %p64 = por %p62, %p63
    %s66 = sadd.s32 %s65, 1
    %p69 = scmp.eq.s32.totalorder %s10, 1
    %p70 = scmp.ne.s32.totalorder %s65, %s67
    %p71 = scmp.eq.s32.totalorder %s10, 0
    %p72 = por %p70, %p71
    %p73 = scmp.ne.s32.totalorder %s65, %s67
    %p74 = scmp.eq.s32.totalorder %s15, 1
    %p75 = por %p73, %p74
    %p76 = scmp.ne.s32.totalorder %s67, %s68
    %p77 = scmp.eq.s32.totalorder %s15, 0
    %p78 = por %p76, %p77
    %p79 = scmp.ne.s32.totalorder %s67, %s68
    %p80 = scmp.eq.s32.totalorder %s16, 1
    %p81 = por %p79, %p80
    %p83 = scmp.ne.s32.totalorder %s68, %s82
    %p84 = scmp.eq.s32.totalorder %s16, 0
    %p85 = por %p83, %p84
    %s87 = sadd.s32 %s86, 1
    %p90 = scmp.eq.s32.totalorder %s10, 1
    %p91 = scmp.ne.s32.totalorder %s86, %s88
    %p92 = scmp.eq.s32.totalorder %s10, 0
    %p93 = por %p91, %p92
    %p94 = scmp.ne.s32.totalorder %s86, %s88
    %p95 = scmp.eq.s32.totalorder %s15, 1
    %p96 = por %p94, %p95
    %p97 = scmp.ne.s32.totalorder %s88, %s89
    %p98 = scmp.eq.s32.totalorder %s15, 0
    %p99 = por %p97, %p98
    %p100 = scmp.ne.s32.totalorder %s88, %s89
    %p101 = scmp.eq.s32.totalorder %s16, 1
    %p102 = por %p100, %p101
    %p104 = scmp.ne.s32.totalorder %s89, %s103
    %p105 = scmp.eq.s32.totalorder %s16, 0
    %p106 = por %p104, %p105
    %s107 = ssub.s32 %s10, %s17
    %p108 = scmp.eq.s32.totalorder %s107, 0
    %s110 = sadd.s32 %s109, 1
    %s111 = scalar_select %p108, %s109, %s110
    %p114 = pneg %p108
    %p115 = scmp.eq.s32.totalorder %s10, 1
    %p116 = por %p114, %p115
    %p117 = scmp.ne.s32.totalorder %s109, %s112
    %p118 = scmp.eq.s32.totalorder %s10, 0
    %p119 = por %p117, %p118
    %p120 = scmp.ne.s32.totalorder %s109, %s112
    %p121 = scmp.eq.s32.totalorder %s15, 1
    %p122 = por %p120, %p121
    %p123 = scmp.ne.s32.totalorder %s112, %s113
    %p124 = scmp.eq.s32.totalorder %s15, 0
    %p125 = por %p123, %p124
    %p126 = scmp.ne.s32.totalorder %s112, %s113
    %p127 = scmp.eq.s32.totalorder %s16, 1
    %p128 = por %p126, %p127
    %p130 = scmp.ne.s32.totalorder %s113, %s129
    %p131 = scmp.eq.s32.totalorder %s16, 0
    %p132 = por %p130, %p131
    %p133 = scmp.le.s32.totalorder 1, %s10
    %p134 = scmp.lt.s32.totalorder %s10, 3
    %p135 = pnand %p133, %p134
    %p136 = pneg %p135
    // Predicated region
    $region9: #{linformer_transformer_forward.10} parent=5 // pred_check
      _
    $region10: #{linformer_transformer_forward.10} parent=5 // pred_check_branch
      %138 = sbr.rel (%p135) target = $region12
    $region11: #{linformer_transformer_forward.10} parent=5 // pred_region
      %s139 = ssub.s32 %s10, 1
      // Predicated region
      $region13: #{linformer_transformer_forward.10} parent=11 // pred_check
        %p140 = pneg %p57
      $region14: #{linformer_transformer_forward.10} parent=11 // pred_check_branch
        %142 = sbr.rel (%p140) target = $region16
      $region15: #{linformer_transformer_forward.10} parent=11 // pred_region
        _
      $region16: #{linformer_transformer_forward.10} parent=11 // pred_fallthru
        _
      // Predicated region
      $region17: #{linformer_transformer_forward.10} parent=11 // pred_check
        %p143 = pneg %p78
      $region18: #{linformer_transformer_forward.10} parent=11 // pred_check_branch
        %145 = sbr.rel (%p143) target = $region20
      $region19: #{linformer_transformer_forward.10} parent=11 // pred_region
        _
      $region20: #{linformer_transformer_forward.10} parent=11 // pred_fallthru
        _
      // Predicated region
      $region21: #{linformer_transformer_forward.10} parent=11 // pred_check
        %p146 = pneg %p99
      $region22: #{linformer_transformer_forward.10} parent=11 // pred_check_branch
        %148 = sbr.rel (%p146) target = $region24
      $region23: #{linformer_transformer_forward.10} parent=11 // pred_region
        _
      $region24: #{linformer_transformer_forward.10} parent=11 // pred_fallthru
        _
    $region12: #{linformer_transformer_forward.10} parent=5 // pred_fallthru
      _
    %p149 = scmp.lt.s32.totalorder %s10, 2
    // Predicated region
    $region25: #{linformer_transformer_forward.10} parent=5 // pred_check
      %p150 = pneg %p149
    $region26: #{linformer_transformer_forward.10} parent=5 // pred_check_branch
      %152 = sbr.rel (%p150) target = $region28
    $region27: #{linformer_transformer_forward.10} parent=5 // pred_region
      // Predicated region
      $region29: #{linformer_transformer_forward.10} parent=27 // pred_check
        %p153 = pneg %p30
      $region30: #{linformer_transformer_forward.10} parent=27 // pred_check_branch
        %155 = sbr.rel (%p153) target = $region32
      $region31: #{linformer_transformer_forward.10} parent=27 // pred_region
        %p156 = scmp.lt.s32.totalorder %s10, 1
        %s157 = scalar_select %p156, %s10, 1
        %s158 = smul.addr %s157, 2
        %s159 = smul.addr %s158, 8
        %s160 = scalar_lea.vmem %s0, %s159
      $region32: #{linformer_transformer_forward.10} parent=27 // pred_fallthru
        _
    $region28: #{linformer_transformer_forward.10} parent=5 // pred_fallthru
      _
    %p161 = scmp.le.s32.totalorder 1, %s10
    %p162 = scmp.lt.s32.totalorder %s10, 3
    %p163 = pnand %p161, %p162
    %p164 = pneg %p163
    // Predicated region
    $region33: #{linformer_transformer_forward.10} parent=5 // pred_check
      _
    $region34: #{linformer_transformer_forward.10} parent=5 // pred_check_branch
      %166 = sbr.rel (%p163) target = $region36
    $region35: #{linformer_transformer_forward.10} parent=5 // pred_region
      %s167 = ssub.s32 %s10, 1
      %p168 = scmp.lt.s32.totalorder %s15, 1
      %s169 = scalar_select %p168, %s15, 1
      %s170 = smul.addr %s169, 2
      %s171 = smul.addr %s170, 8
      %s172 = scalar_lea.vmem %s0, %s171
      %p173 = pneg %p36
      %p174 = pneg %p33
      %p175 = pneg %p57
      %p176 = pneg %p54
      %p177 = pneg %p78
      %p178 = pneg %p75
      %p179 = pneg %p99
      %p180 = pneg %p96
      %p181 = pneg %p125
      %p182 = pneg %p122
      %p183 = scmp.lt.s32.totalorder %s15, 1
      %s184 = scalar_select %p183, %s15, 1
      %s185 = smul.addr %s184, 2
      %s186 = smul.addr %s185, 8
      %s187 = scalar_lea.vmem %s4, %s186
      %p188 = scmp.lt.s32.totalorder %s15, 1
      %s189 = scalar_select %p188, %s15, 1
      %s190 = smul.addr %s189, 2
      %s191 = smul.addr %s190, 8
      %s192 = scalar_lea.vmem %s0, %s191
      %p193 = scmp.lt.s32.totalorder %s15, 1
      %s194 = scalar_select %p193, %s15, 1
      %s195 = smul.addr %s194, 2
      %s196 = smul.addr %s195, 8
      %s197 = scalar_lea.vmem %s4, %s196
      %v199 = vld [vmem:[%s192] sm:$0xff]
      %v200 = vld [vmem:[%s192 + $0x8] sm:$0xff]
      %v201 = vpack.c.bf16 %v200, %v199
      %v202 = vld [vmem:[%s1] sm:$0x3]
      %v203 = vld [vmem:[%s2] sm:$0x1]
      %v205 = vperm.slane %v203, 0
      %vm207 = vcmask 31744
      %v209 = vsel %vm207, %v201, 0
      %vm211 = vcmask 1041408
      %v213 = vsel %vm211, %v202, 0
      %215 = vmatpush.bf16.msra.mxu0 0
      %216 = vmatpush.bf16.msra.mxu0 0
      %217 = vmatpush.bf16.msra.mxu0 0
      %218 = vmatpush.bf16.msra.mxu0 0
      %219 = vmatpush.bf16.msra.mxu0 0
      %220 = vmatpush.bf16.msra.mxu0 0
      %221 = vmatpush.bf16.msra.mxu0 0
      %222 = vmatpush.bf16.msra.mxu0 %v213
      %223 = vmatmul.bf16.gmra.mxu0 %v209
      %v224 = vpop.f32.mrf.mxu0
      %v225 = vadd.f32 %v205, %v224
      %v226 = vpop.f32.mrf.mxu0
      %v227 = vadd.f32 %v205, %v226
      %228 = vdwg.mxu0
      %v229 = vld [vmem:[%s3] sm:$0xff]
      %v230 = vld [vmem:[%s3 + $0x8] sm:$0xff]
      %v231 = vadd.f32 %v225, %v229
      %v232 = vadd.f32 %v227, %v230
      %233 = vst [vmem:[%s197] sm:$0xff] %v231
      %234 = vst [vmem:[%s197 + $0x8] sm:$0xff] %v232
      %p235 = scmp.lt.s32.totalorder %s15, 1
      %s236 = scalar_select %p235, %s15, 1
      %s237 = smul.addr %s236, 2
      %s238 = smul.addr %s237, 8
      %s239 = scalar_lea.vmem %s4, %s238
      // Predicated region
      $region37: #{linformer_transformer_forward.10} parent=35 // pred_check
        %p240 = pneg %p122
      $region38: #{linformer_transformer_forward.10} parent=35 // pred_check_branch
        %242 = sbr.rel (%p240) target = $region40
      $region39: #{linformer_transformer_forward.10} parent=35 // pred_region
        _
      $region40: #{linformer_transformer_forward.10} parent=35 // pred_fallthru
        _
    $region36: #{linformer_transformer_forward.10} parent=5 // pred_fallthru
      _
    %p243 = scmp.le.s32.totalorder 2, %s10
    // Predicated region
    $region41: #{linformer_transformer_forward.10} parent=5 // pred_check
      %p244 = pneg %p243
    $region42: #{linformer_transformer_forward.10} parent=5 // pred_check_branch
      %246 = sbr.rel (%p244) target = $region44
    $region43: #{linformer_transformer_forward.10} parent=5 // pred_region
      %s247 = ssub.s32 %s10, 2
      // Predicated region
      $region45: #{linformer_transformer_forward.10} parent=43 // pred_check
        %p248 = pneg %p128
      $region46: #{linformer_transformer_forward.10} parent=43 // pred_check_branch
        %250 = sbr.rel (%p248) target = $region48
      $region47: #{linformer_transformer_forward.10} parent=43 // pred_region
        %p251 = scmp.lt.s32.totalorder %s16, 1
        %s252 = scalar_select %p251, %s16, 1
        %s253 = smul.addr %s252, 2
        %s254 = smul.addr %s253, 8
        %s255 = scalar_lea.vmem %s4, %s254
      $region48: #{linformer_transformer_forward.10} parent=43 // pred_fallthru
        _
    $region44: #{linformer_transformer_forward.10} parent=5 // pred_fallthru
      _
  $region6: #{linformer_transformer_forward.10} parent=0 // loop_footer
    %s14 = sadd.s32 1, %s10
  $region7: #{linformer_transformer_forward.10} parent=0 // loop_footer_branch
    %9 = sbr.rel target = $region3
  $region8: #{linformer_transformer_forward.10} parent=0 // loop_exit
    _

// kernel: linformer_transformer_forward.19
$region0: #{linformer_transformer_forward.19}
  #allocation0 [shape = 'u32[]', space=smem, size = 0x4, offset = 0x4, fixed_abs, tag = 'smem constant byte address 0x4 - core index']
  #allocation1 [shape = 'u32[72,128]{1,0:T(1,128)}', space=vmem, size = 0x9000, scoped, tag = 'internal scratch']
  #allocation2 [shape = 'f32[2,128]{1,0:T(2,128)}', space=vmem, size = 0x400, scoped, tag = 'scratch operand']
  %s0 = inlined_call_operand.vmem [shape: f32[2,16,128], index: 0, kind: input, shape index: {}]
  %s1 = inlined_call_operand.vmem [shape: bf16[128,128], index: 1, kind: input, shape index: {}]
  %s2 = inlined_call_operand.vmem [shape: f32[1,128], index: 2, kind: input, shape index: {}]
  %s3 = inlined_call_operand.hbm [shape: f32[2,128], index: 3, kind: output, shape index: {}]
  %s4 = sld [smem:[#allocation0]]
  $region30: #{linformer_transformer_forward.19} parent=0
    _
  %s6 = ssub.s32 1, %s4
  %s7 = scalar_select 0, %s6, %s4
  $region1: #{linformer_transformer_forward.19} parent=0
    #allocation3 [shape = 'u8[1024]{0}', space=vmem, size = 0x400, scoped, tag = 'output window, operand 0, single buffered']
    #allocation4 [shape = 's32[1]{0}', space=sflag, size = 0x4, scoped, tag = 'scoped memory for linformer_transformer_forward.19']
    %8 = vsyncpa [#allocation4], 0
    // Predicated region
    $region2: #{linformer_transformer_forward.19} parent=1 // pred_check
      _
    $region3: #{linformer_transformer_forward.19} parent=1 // pred_check_branch
      %10 = sbr.rel (0) target = $region5
    $region4: #{linformer_transformer_forward.19} parent=1 // pred_region
      _
    $region5: #{linformer_transformer_forward.19} parent=1 // pred_fallthru
      _
    // Predicated region
    $region6: #{linformer_transformer_forward.19} parent=1 // pred_check
      _
    $region7: #{linformer_transformer_forward.19} parent=1 // pred_check_branch
      %12 = sbr.rel (0) target = $region9
    $region8: #{linformer_transformer_forward.19} parent=1 // pred_region
      _
    $region9: #{linformer_transformer_forward.19} parent=1 // pred_fallthru
      _
    // Predicated region
    $region10: #{linformer_transformer_forward.19} parent=1 // pred_check
      _
    $region11: #{linformer_transformer_forward.19} parent=1 // pred_check_branch
      %14 = sbr.rel (0) target = $region13
    $region12: #{linformer_transformer_forward.19} parent=1 // pred_region
      _
    $region13: #{linformer_transformer_forward.19} parent=1 // pred_fallthru
      _
    %p15 = scmp.eq.s32.totalorder 0, 0
    // Predicated region
    $region14: #{linformer_transformer_forward.19} parent=1 // pred_check
      %p16 = pneg %p15
    $region15: #{linformer_transformer_forward.19} parent=1 // pred_check_branch
      %18 = sbr.rel (%p16) target = $region17
    $region16: #{linformer_transformer_forward.19} parent=1 // pred_region
      %19 = vst [vmem:[#allocation2] sm:$0x3] 0.0
    $region17: #{linformer_transformer_forward.19} parent=1 // pred_fallthru
      _
    %v20 = vld [vmem:[#allocation2] sm:$0x3]
    %v21 = vld [vmem:[%s0] sm:$0xff]
    %v22 = vld [vmem:[%s0 + $0x8] sm:$0xff]
    %v23 = vld [vmem:[%s0 + $0x10] sm:$0xff]
    %v24 = vld [vmem:[%s0 + $0x18] sm:$0xff]
    %v25 = vadd.f32 %v21, %v22
    %v26 = vrot.slane %v25, 4
    %v27 = vadd.f32 %v25, %v26
    %v28 = vrot.slane %v27, 2
    %v29 = vadd.f32 %v27, %v28
    %v30 = vrot.slane %v29, 1
    %v31 = vadd.f32 %v29, %v30
    %v32 = vadd.f32 %v23, %v24
    %v33 = vrot.slane %v32, 4
    %v34 = vadd.f32 %v32, %v33
    %v35 = vrot.slane %v34, 2
    %v36 = vadd.f32 %v34, %v35
    %v37 = vrot.slane %v36, 1
    %v38 = vadd.f32 %v36, %v37
    %vm41 = vcmask 1041409
    %v42 = vsel %vm41, %v38, %v31
    %v44 = vadd.f32 %v20, %v42
    %45 = vst [vmem:[#allocation2] sm:$0x3] %v44
    // Predicated region
    $region18: #{linformer_transformer_forward.19} parent=1 // pred_check
      %p46 = pneg %p15
    $region19: #{linformer_transformer_forward.19} parent=1 // pred_check_branch
      %48 = sbr.rel (%p46) target = $region21
    $region20: #{linformer_transformer_forward.19} parent=1 // pred_region
      %v49 = vld [vmem:[#allocation2] sm:$0x3]
      %v50 = vmul.f32 %v49, 0.0625
      %v51 = vpack.c.bf16 %v50, %v50
      %v52 = vld [vmem:[%s1] sm:$0xf]
      %v53 = vld [vmem:[%s1 + $0x4] sm:$0xf]
      %v54 = vld [vmem:[%s1 + $0x8] sm:$0xf]
      %v55 = vld [vmem:[%s1 + $0xc] sm:$0xf]
      %v56 = vld [vmem:[%s1 + $0x10] sm:$0xf]
      %v57 = vld [vmem:[%s1 + $0x14] sm:$0xf]
      %v58 = vld [vmem:[%s1 + $0x18] sm:$0xf]
      %v59 = vld [vmem:[%s1 + $0x1c] sm:$0xf]
      %v60 = vld [vmem:[%s1 + $0x20] sm:$0xf]
      %v61 = vld [vmem:[%s1 + $0x24] sm:$0xf]
      %v62 = vld [vmem:[%s1 + $0x28] sm:$0xf]
      %v63 = vld [vmem:[%s1 + $0x2c] sm:$0xf]
      %v64 = vld [vmem:[%s1 + $0x30] sm:$0xf]
      %v65 = vld [vmem:[%s1 + $0x34] sm:$0xf]
      %v66 = vld [vmem:[%s1 + $0x38] sm:$0xf]
      %v67 = vld [vmem:[%s1 + $0x3c] sm:$0xf]
      %v68 = vld [vmem:[%s2] sm:$0x1]
      %v70 = vperm.slane %v68, 0
      %v88 = vunpack.c.l.b16 %v52
      %v89 = vunpack.c.l.b16 %v53
      %v90 = vunpack.c.l.b16 %v54
      %v91 = vunpack.c.l.b16 %v55
      %v92 = vunpack.c.l.b16 %v56
      %v93 = vunpack.c.l.b16 %v57
      %v94 = vunpack.c.l.b16 %v58
      %v95 = vunpack.c.l.b16 %v59
      %v96 = vunpack.c.l.b16 %v60
      %v97 = vunpack.c.l.b16 %v61
      %v98 = vunpack.c.l.b16 %v62
      %v99 = vunpack.c.l.b16 %v63
      %v100 = vunpack.c.l.b16 %v64
      %v101 = vunpack.c.l.b16 %v65
      %v102 = vunpack.c.l.b16 %v66
      %v103 = vunpack.c.l.b16 %v67
      %v104 = vpack.c.b16 %v89, %v88
      %v105 = vpack.c.b16 %v91, %v90
      %v106 = vpack.c.b16 %v93, %v92
      %v107 = vpack.c.b16 %v95, %v94
      %v108 = vpack.c.b16 %v97, %v96
      %v109 = vpack.c.b16 %v99, %v98
      %v110 = vpack.c.b16 %v101, %v100
      %v111 = vpack.c.b16 %v103, %v102
      %120 = vmatpush.bf16.msra.mxu0 %v111
      %121 = vmatpush.bf16.msra.mxu0 %v110
      %122 = vmatpush.bf16.msra.mxu0 %v109
      %123 = vmatpush.bf16.msra.mxu0 %v108
      %124 = vmatpush.bf16.msra.mxu0 %v107
      %125 = vmatpush.bf16.msra.mxu0 %v106
      %126 = vmatpush.bf16.msra.mxu0 %v105
      %127 = vmatpush.bf16.msra.mxu0 %v104
      %128 = vmatmul.bf16.gmra.mxu0 %v51
      %v129 = vpop.f32.mrf.mxu0
      %v130 = vadd.f32 %v70, %v129
      %v131 = vpop.f32.mrf.mxu0
      %132 = vdwg.mxu0
      %133 = vst [vmem:[#allocation3] sm:$0x3] %v130
    $region21: #{linformer_transformer_forward.19} parent=1 // pred_fallthru
      _
    // Predicated region
    $region22: #{linformer_transformer_forward.19} parent=1 // pred_check
      _
    $region23: #{linformer_transformer_forward.19} parent=1 // pred_check_branch
      %135 = sbr.rel (0) target = $region25
    $region24: #{linformer_transformer_forward.19} parent=1 // pred_region
      %137 = vsyncadd [#allocation4], 0
      %s139 = sshll.u32 [#allocation3], 4
      %s140 = int_to_ptr.vmem [resolvable:$true] %s139
      %s141 = sshll.u32 %s3, 4
      %s142 = int_to_ptr.hbm [resolvable:$true] %s141
      %144 = dma.vmem_to_hbm [thread:$0]  %s140, 32, %s142, [#allocation4]
    $region25: #{linformer_transformer_forward.19} parent=1 // pred_fallthru
      _
    // Predicated region
    $region26: #{linformer_transformer_forward.19} parent=1 // pred_check
      _
    $region27: #{linformer_transformer_forward.19} parent=1 // pred_check_branch
      %146 = sbr.rel (0) target = $region29
    $region28: #{linformer_transformer_forward.19} parent=1 // pred_region
      %148 = dma.done [#allocation4], 32
    $region29: #{linformer_transformer_forward.19} parent=1 // pred_fallthru
      _
    %149 = vsyncpa [#allocation4], 1

// kernel: linformer_transformer_forward.12
$region0: #{linformer_transformer_forward.12}
  #allocation0 [shape = 'u32[]', space=smem, size = 0x4, offset = 0x4, fixed_abs, tag = 'smem constant byte address 0x4 - core index']
  #allocation1 [shape = 'u32[72,128]{1,0:T(1,128)}', space=vmem, size = 0x9000, scoped, tag = 'internal scratch']
  %s0 = inlined_call_operand.vmem [shape: f32[32,128], index: 0, kind: input, shape index: {}]
  %s1 = inlined_call_operand.vmem [shape: f32[1,128], index: 1, kind: input, shape index: {}]
  %s2 = inlined_call_operand.vmem [shape: f32[1,128], index: 2, kind: input, shape index: {}]
  %s3 = inlined_call_operand.vmem [shape: bf16[128,512], index: 3, kind: input, shape index: {}]
  %s4 = inlined_call_operand.vmem [shape: f32[1,512], index: 4, kind: input, shape index: {}]
  %s5 = inlined_call_operand.vmem [shape: bf16[512,128], index: 5, kind: input, shape index: {}]
  %s6 = inlined_call_operand.vmem [shape: f32[1,128], index: 6, kind: input, shape index: {}]
  %s7 = inlined_call_operand.vmem [shape: f32[32,128], index: 7, kind: output, shape index: {}]
  %s8 = sld [smem:[#allocation0]]
  $region38: #{linformer_transformer_forward.12} parent=0
    _
  %s10 = ssub.s32 1, %s8
  %s11 = scalar_select 0, %s10, %s8
  // Predicated region
  $region2: #{linformer_transformer_forward.12} parent=0 // pred_check
    _
  $region3: #{linformer_transformer_forward.12} parent=0 // pred_check_branch
    %13 = sbr.rel (0) target = $region5
  $region4: #{linformer_transformer_forward.12} parent=0 // pred_region
    _
  $region5: #{linformer_transformer_forward.12} parent=0 // pred_fallthru
    _
  // Predicated region
  $region6: #{linformer_transformer_forward.12} parent=0 // pred_check
    _
  $region7: #{linformer_transformer_forward.12} parent=0 // pred_check_branch
    %15 = sbr.rel (0) target = $region9
  $region8: #{linformer_transformer_forward.12} parent=0 // pred_region
    _
  $region9: #{linformer_transformer_forward.12} parent=0 // pred_fallthru
    _
  // Predicated region
  $region10: #{linformer_transformer_forward.12} parent=0 // pred_check
    _
  $region11: #{linformer_transformer_forward.12} parent=0 // pred_check_branch
    %17 = sbr.rel (0) target = $region13
  $region12: #{linformer_transformer_forward.12} parent=0 // pred_region
    _
  $region13: #{linformer_transformer_forward.12} parent=0 // pred_fallthru
    _
  // Predicated region
  $region14: #{linformer_transformer_forward.12} parent=0 // pred_check
    _
  $region15: #{linformer_transformer_forward.12} parent=0 // pred_check_branch
    %19 = sbr.rel (0) target = $region17
  $region16: #{linformer_transformer_forward.12} parent=0 // pred_region
    _
  $region17: #{linformer_transformer_forward.12} parent=0 // pred_fallthru
    _
  // Predicated region
  $region18: #{linformer_transformer_forward.12} parent=0 // pred_check
    _
  $region19: #{linformer_transformer_forward.12} parent=0 // pred_check_branch
    %21 = sbr.rel (0) target = $region21
  $region20: #{linformer_transformer_forward.12} parent=0 // pred_region
    _
  $region21: #{linformer_transformer_forward.12} parent=0 // pred_fallthru
    _
  // Predicated region
  $region22: #{linformer_transformer_forward.12} parent=0 // pred_check
    _
  $region23: #{linformer_transformer_forward.12} parent=0 // pred_check_branch
    %23 = sbr.rel (0) target = $region25
  $region24: #{linformer_transformer_forward.12} parent=0 // pred_region
    _
  $region25: #{linformer_transformer_forward.12} parent=0 // pred_fallthru
    _
  // Predicated region
  $region26: #{linformer_transformer_forward.12} parent=0 // pred_check
    _
  $region27: #{linformer_transformer_forward.12} parent=0 // pred_check_branch
    %25 = sbr.rel (0) target = $region29
  $region28: #{linformer_transformer_forward.12} parent=0 // pred_region
    _
  $region29: #{linformer_transformer_forward.12} parent=0 // pred_fallthru
    _
  %v26 = vld [vmem:[%s0] sm:$0xff]
  %v27 = vld [vmem:[%s0 + $0x8] sm:$0xff]
  %v28 = vld [vmem:[%s0 + $0x10] sm:$0xff]
  %v29 = vld [vmem:[%s0 + $0x18] sm:$0xff]
  %30 = vadd.xlane.f32.xlu0 %v26
  %v31 = vpop.xlane.xlu0 %30
  %32 = vadd.xlane.f32.xlu0 %v27
  %v33 = vpop.xlane.xlu0 %32
  %34 = vadd.xlane.f32.xlu0 %v28
  %v35 = vpop.xlane.xlu0 %34
  %36 = vadd.xlane.f32.xlu0 %v29
  %v37 = vpop.xlane.xlu0 %36
  %v38 = vrcp.pop 128.0
  %v39 = vmul.f32 128.0, %v38
  %v40 = vsub.f32 1.0, %v39
  %v41 = vmul.f32 %v38, %v40
  %v42 = vadd.f32 %v38, %v41
  %vm43 = vweird.f32 %v38
  %v44 = vsel %vm43, %v38, %v42
  %v45 = vmul.f32 %v31, %v44
  %v46 = vmul.f32 %v33, %v44
  %v47 = vmul.f32 %v35, %v44
  %v48 = vmul.f32 %v37, %v44
  %v49 = vsub.f32 %v26, %v45
  %v50 = vsub.f32 %v27, %v46
  %v51 = vsub.f32 %v28, %v47
  %v52 = vsub.f32 %v29, %v48
  %v53 = vmul.f32 %v49, %v49
  %v54 = vmul.f32 %v50, %v50
  %v55 = vmul.f32 %v51, %v51
  %v56 = vmul.f32 %v52, %v52
  %57 = vadd.xlane.f32.xlu0 %v53
  %v58 = vpop.xlane.xlu0 %57
  %59 = vadd.xlane.f32.xlu0 %v54
  %v60 = vpop.xlane.xlu0 %59
  %61 = vadd.xlane.f32.xlu0 %v55
  %v62 = vpop.xlane.xlu0 %61
  %63 = vadd.xlane.f32.xlu0 %v56
  %v64 = vpop.xlane.xlu0 %63
  %v65 = vmul.f32 %v58, %v44
  %v66 = vmul.f32 %v60, %v44
  %v67 = vmul.f32 %v62, %v44
  %v68 = vmul.f32 %v64, %v44
  %v69 = vadd.f32 %v65, 1e-05
  %v70 = vadd.f32 %v66, 1e-05
  %v71 = vadd.f32 %v67, 1e-05
  %v72 = vadd.f32 %v68, 1e-05
  %v73 = vrsqrt.pop %v69
  %v74 = vmul.f32 %v73, %v69
  %v75 = vmul.f32 %v74, %v73
  %v76 = vmul.f32 0.5, %v75
  %v77 = vsub.f32 1.5, %v76
  %v78 = vmul.f32 %v73, %v77
  %vm79 = vweird.f32 %v69
  %vm80 = vweird.f32 %v73
  %vm81 = vmor %vm79, %vm80
  %v82 = vsel %vm81, %v73, %v78
  %v83 = vrsqrt.pop %v70
  %v84 = vmul.f32 %v83, %v70
  %v85 = vmul.f32 %v84, %v83
  %v86 = vmul.f32 0.5, %v85
  %v87 = vsub.f32 1.5, %v86
  %v88 = vmul.f32 %v83, %v87
  %vm89 = vweird.f32 %v70
  %vm90 = vweird.f32 %v83
  %vm91 = vmor %vm89, %vm90
  %v92 = vsel %vm91, %v83, %v88
  %v93 = vrsqrt.pop %v71
  %v94 = vmul.f32 %v93, %v71
  %v95 = vmul.f32 %v94, %v93
  %v96 = vmul.f32 0.5, %v95
  %v97 = vsub.f32 1.5, %v96
  %v98 = vmul.f32 %v93, %v97
  %vm99 = vweird.f32 %v71
  %vm100 = vweird.f32 %v93
  %vm101 = vmor %vm99, %vm100
  %v102 = vsel %vm101, %v93, %v98
  %v103 = vrsqrt.pop %v72
  %v104 = vmul.f32 %v103, %v72
  %v105 = vmul.f32 %v104, %v103
  %v106 = vmul.f32 0.5, %v105
  %v107 = vsub.f32 1.5, %v106
  %v108 = vmul.f32 %v103, %v107
  %vm109 = vweird.f32 %v72
  %vm110 = vweird.f32 %v103
  %vm111 = vmor %vm109, %vm110
  %v112 = vsel %vm111, %v103, %v108
  %v113 = vmul.f32 %v49, %v82
  %v114 = vmul.f32 %v50, %v92
  %v115 = vmul.f32 %v51, %v102
  %v116 = vmul.f32 %v52, %v112
  %v117 = vld [vmem:[%s1] sm:$0x1]
  %v119 = vperm.slane %v117, 0
  %v121 = vmul.f32 %v113, %v119
  %v122 = vmul.f32 %v114, %v119
  %v123 = vmul.f32 %v115, %v119
  %v124 = vmul.f32 %v116, %v119
  %v125 = vld [vmem:[%s2] sm:$0x1]
  %v127 = vperm.slane %v125, 0
  %v129 = vadd.f32 %v121, %v127
  %v130 = vadd.f32 %v122, %v127
  %v131 = vadd.f32 %v123, %v127
  %v132 = vadd.f32 %v124, %v127
  %v133 = vpack.c.bf16 %v130, %v129
  %v134 = vpack.c.bf16 %v132, %v131
  %v135 = vld [vmem:[%s3] sm:$0xff]
  %v136 = vld [vmem:[%s3 + $0x8] sm:$0xff]
  %v137 = vld [vmem:[%s3 + $0x10] sm:$0xff]
  %v138 = vld [vmem:[%s3 + $0x18] sm:$0xff]
  %v139 = vld [vmem:[%s3 + $0x20] sm:$0xff]
  %v140 = vld [vmem:[%s3 + $0x28] sm:$0xff]
  %v141 = vld [vmem:[%s3 + $0x30] sm:$0xff]
  %v142 = vld [vmem:[%s3 + $0x38] sm:$0xff]
  %v143 = vld [vmem:[%s3 + $0x40] sm:$0xff]
  %v144 = vld [vmem:[%s3 + $0x48] sm:$0xff]
  %v145 = vld [vmem:[%s3 + $0x50] sm:$0xff]
  %v146 = vld [vmem:[%s3 + $0x58] sm:$0xff]
  %v147 = vld [vmem:[%s3 + $0x60] sm:$0xff]
  %v148 = vld [vmem:[%s3 + $0x68] sm:$0xff]
  %v149 = vld [vmem:[%s3 + $0x70] sm:$0xff]
  %v150 = vld [vmem:[%s3 + $0x78] sm:$0xff]
  %v151 = vld [vmem:[%s3 + $0x80] sm:$0xff]
  %v152 = vld [vmem:[%s3 + $0x88] sm:$0xff]
  %v153 = vld [vmem:[%s3 + $0x90] sm:$0xff]
  %v154 = vld [vmem:[%s3 + $0x98] sm:$0xff]
  %v155 = vld [vmem:[%s3 + $0xa0] sm:$0xff]
  %v156 = vld [vmem:[%s3 + $0xa8] sm:$0xff]
  %v157 = vld [vmem:[%s3 + $0xb0] sm:$0xff]
  %v158 = vld [vmem:[%s3 + $0xb8] sm:$0xff]
  %v159 = vld [vmem:[%s3 + $0xc0] sm:$0xff]
  %v160 = vld [vmem:[%s3 + $0xc8] sm:$0xff]
  %v161 = vld [vmem:[%s3 + $0xd0] sm:$0xff]
  %v162 = vld [vmem:[%s3 + $0xd8] sm:$0xff]
  %v163 = vld [vmem:[%s3 + $0xe0] sm:$0xff]
  %v164 = vld [vmem:[%s3 + $0xe8] sm:$0xff]
  %v165 = vld [vmem:[%s3 + $0xf0] sm:$0xff]
  %v166 = vld [vmem:[%s3 + $0xf8] sm:$0xff]
  %v167 = vld [vmem:[%s4] sm:$0xf]
  %v169 = vperm.slane %v167, 0
  %v170 = vperm.slane %v167, 1
  %v171 = vperm.slane %v167, 2
  %v172 = vperm.slane %v167, 3
  %v209 = vunpack.c.l.b16 %v135
  %v210 = vunpack.c.h.b16 %v135
  %v211 = vunpack.c.l.b16 %v136
  %v212 = vunpack.c.h.b16 %v136
  %v213 = vunpack.c.l.b16 %v137
  %v214 = vunpack.c.h.b16 %v137
  %v215 = vunpack.c.l.b16 %v138
  %v216 = vunpack.c.h.b16 %v138
  %v217 = vunpack.c.l.b16 %v139
  %v218 = vunpack.c.h.b16 %v139
  %v219 = vunpack.c.l.b16 %v140
  %v220 = vunpack.c.h.b16 %v140
  %v221 = vunpack.c.l.b16 %v141
  %v222 = vunpack.c.h.b16 %v141
  %v223 = vunpack.c.l.b16 %v142
  %v224 = vunpack.c.h.b16 %v142
  %v225 = vunpack.c.l.b16 %v143
  %v226 = vunpack.c.h.b16 %v143
  %v227 = vunpack.c.l.b16 %v144
  %v228 = vunpack.c.h.b16 %v144
  %v229 = vunpack.c.l.b16 %v145
  %v230 = vunpack.c.h.b16 %v145
  %v231 = vunpack.c.l.b16 %v146
  %v232 = vunpack.c.h.b16 %v146
  %v233 = vunpack.c.l.b16 %v147
  %v234 = vunpack.c.h.b16 %v147
  %v235 = vunpack.c.l.b16 %v148
  %v236 = vunpack.c.h.b16 %v148
  %v237 = vunpack.c.l.b16 %v149
  %v238 = vunpack.c.h.b16 %v149
  %v239 = vunpack.c.l.b16 %v150
  %v240 = vunpack.c.h.b16 %v150
  %v241 = vunpack.c.l.b16 %v151
  %v242 = vunpack.c.h.b16 %v151
  %v243 = vunpack.c.l.b16 %v152
  %v244 = vunpack.c.h.b16 %v152
  %v245 = vunpack.c.l.b16 %v153
  %v246 = vunpack.c.h.b16 %v153
  %v247 = vunpack.c.l.b16 %v154
  %v248 = vunpack.c.h.b16 %v154
  %v249 = vunpack.c.l.b16 %v155
  %v250 = vunpack.c.h.b16 %v155
  %v251 = vunpack.c.l.b16 %v156
  %v252 = vunpack.c.h.b16 %v156
  %v253 = vunpack.c.l.b16 %v157
  %v254 = vunpack.c.h.b16 %v157
  %v255 = vunpack.c.l.b16 %v158
  %v256 = vunpack.c.h.b16 %v158
  %v257 = vunpack.c.l.b16 %v159
  %v258 = vunpack.c.h.b16 %v159
  %v259 = vunpack.c.l.b16 %v160
  %v260 = vunpack.c.h.b16 %v160
  %v261 = vunpack.c.l.b16 %v161
  %v262 = vunpack.c.h.b16 %v161
  %v263 = vunpack.c.l.b16 %v162
  %v264 = vunpack.c.h.b16 %v162
  %v265 = vunpack.c.l.b16 %v163
  %v266 = vunpack.c.h.b16 %v163
  %v267 = vunpack.c.l.b16 %v164
  %v268 = vunpack.c.h.b16 %v164
  %v269 = vunpack.c.l.b16 %v165
  %v270 = vunpack.c.h.b16 %v165
  %v271 = vunpack.c.l.b16 %v166
  %v272 = vunpack.c.h.b16 %v166
  %v273 = vpack.c.b16 %v213, %v209
  %v274 = vpack.c.b16 %v214, %v210
  %v275 = vpack.c.b16 %v215, %v211
  %v276 = vpack.c.b16 %v216, %v212
  %v277 = vpack.c.b16 %v221, %v217
  %v278 = vpack.c.b16 %v222, %v218
  %v279 = vpack.c.b16 %v223, %v219
  %v280 = vpack.c.b16 %v224, %v220
  %v281 = vpack.c.b16 %v229, %v225
  %v282 = vpack.c.b16 %v230, %v226
  %v283 = vpack.c.b16 %v231, %v227
  %v284 = vpack.c.b16 %v232, %v228
  %v285 = vpack.c.b16 %v237, %v233
  %v286 = vpack.c.b16 %v238, %v234
  %v287 = vpack.c.b16 %v239, %v235
  %v288 = vpack.c.b16 %v240, %v236
  %v289 = vpack.c.b16 %v245, %v241
  %v290 = vpack.c.b16 %v246, %v242
  %v291 = vpack.c.b16 %v247, %v243
  %v292 = vpack.c.b16 %v248, %v244
  %v293 = vpack.c.b16 %v253, %v249
  %v294 = vpack.c.b16 %v254, %v250
  %v295 = vpack.c.b16 %v255, %v251
  %v296 = vpack.c.b16 %v256, %v252
  %v297 = vpack.c.b16 %v261, %v257
  %v298 = vpack.c.b16 %v262, %v258
  %v299 = vpack.c.b16 %v263, %v259
  %v300 = vpack.c.b16 %v264, %v260
  %v301 = vpack.c.b16 %v269, %v265
  %v302 = vpack.c.b16 %v270, %v266
  %v303 = vpack.c.b16 %v271, %v267
  %v304 = vpack.c.b16 %v272, %v268
  %337 = vmatpush.bf16.msra.mxu0 %v301
  %338 = vmatpush.bf16.msra.mxu0 %v297
  %339 = vmatpush.bf16.msra.mxu0 %v293
  %340 = vmatpush.bf16.msra.mxu0 %v289
  %341 = vmatpush.bf16.msra.mxu0 %v285
  %342 = vmatpush.bf16.msra.mxu0 %v281
  %343 = vmatpush.bf16.msra.mxu0 %v277
  %344 = vmatpush.bf16.msra.mxu0 %v273
  %345 = vmatmul.bf16.gmra.mxu0 %v133
  %v346 = vpop.f32.mrf.mxu0
  %v347 = vadd.f32 %v169, %v346
  %v348 = vpop.f32.mrf.mxu0
  %v349 = vadd.f32 %v169, %v348
  %350 = vmatmul.bf16.gmra.mxu0 %v134
  %v351 = vpop.f32.mrf.mxu0
  %v352 = vadd.f32 %v169, %v351
  %v353 = vpop.f32.mrf.mxu0
  %v354 = vadd.f32 %v169, %v353
  %355 = vdwg.mxu0
  %356 = vmatpush.bf16.msra.mxu0 %v302
  %357 = vmatpush.bf16.msra.mxu0 %v298
  %358 = vmatpush.bf16.msra.mxu0 %v294
  %359 = vmatpush.bf16.msra.mxu0 %v290
  %360 = vmatpush.bf16.msra.mxu0 %v286
  %361 = vmatpush.bf16.msra.mxu0 %v282
  %362 = vmatpush.bf16.msra.mxu0 %v278
  %363 = vmatpush.bf16.msra.mxu0 %v274
  %364 = vmatmul.bf16.gmra.mxu0 %v133
  %v365 = vpop.f32.mrf.mxu0
  %v366 = vadd.f32 %v170, %v365
  %v367 = vpop.f32.mrf.mxu0
  %v368 = vadd.f32 %v170, %v367
  %369 = vmatmul.bf16.gmra.mxu0 %v134
  %v370 = vpop.f32.mrf.mxu0
  %v371 = vadd.f32 %v170, %v370
  %v372 = vpop.f32.mrf.mxu0
  %v373 = vadd.f32 %v170, %v372
  %374 = vdwg.mxu0
  %375 = vmatpush.bf16.msra.mxu0 %v303
  %376 = vmatpush.bf16.msra.mxu0 %v299
  %377 = vmatpush.bf16.msra.mxu0 %v295
  %378 = vmatpush.bf16.msra.mxu0 %v291
  %379 = vmatpush.bf16.msra.mxu0 %v287
  %380 = vmatpush.bf16.msra.mxu0 %v283
  %381 = vmatpush.bf16.msra.mxu0 %v279
  %382 = vmatpush.bf16.msra.mxu0 %v275
  %383 = vmatmul.bf16.gmra.mxu0 %v133
  %v384 = vpop.f32.mrf.mxu0
  %v385 = vadd.f32 %v171, %v384
  %v386 = vpop.f32.mrf.mxu0
  %v387 = vadd.f32 %v171, %v386
  %388 = vmatmul.bf16.gmra.mxu0 %v134
  %v389 = vpop.f32.mrf.mxu0
  %v390 = vadd.f32 %v171, %v389
  %v391 = vpop.f32.mrf.mxu0
  %v392 = vadd.f32 %v171, %v391
  %393 = vdwg.mxu0
  %394 = vmatpush.bf16.msra.mxu0 %v304
  %395 = vmatpush.bf16.msra.mxu0 %v300
  %396 = vmatpush.bf16.msra.mxu0 %v296
  %397 = vmatpush.bf16.msra.mxu0 %v292
  %398 = vmatpush.bf16.msra.mxu0 %v288
  %399 = vmatpush.bf16.msra.mxu0 %v284
  %400 = vmatpush.bf16.msra.mxu0 %v280
  %401 = vmatpush.bf16.msra.mxu0 %v276
  %402 = vmatmul.bf16.gmra.mxu0 %v133
  %v403 = vpop.f32.mrf.mxu0
  %v404 = vadd.f32 %v172, %v403
  %v405 = vpop.f32.mrf.mxu0
  %v406 = vadd.f32 %v172, %v405
  %407 = vmatmul.bf16.gmra.mxu0 %v134
  %v408 = vpop.f32.mrf.mxu0
  %v409 = vadd.f32 %v172, %v408
  %v410 = vpop.f32.mrf.mxu0
  %v411 = vadd.f32 %v172, %v410
  %412 = vdwg.mxu0
  %v413 = vmul.f32 %v347, 0.5
  %v414 = vmul.f32 %v366, 0.5
  %v415 = vmul.f32 %v385, 0.5
  %v416 = vmul.f32 %v404, 0.5
  %v417 = vmul.f32 %v349, 0.5
  %v418 = vmul.f32 %v368, 0.5
  %v419 = vmul.f32 %v387, 0.5
  %v420 = vmul.f32 %v406, 0.5
  %v421 = vmul.f32 %v352, 0.5
  %v422 = vmul.f32 %v371, 0.5
  %v423 = vmul.f32 %v390, 0.5
  %v424 = vmul.f32 %v409, 0.5
  %v425 = vmul.f32 %v354, 0.5
  %v426 = vmul.f32 %v373, 0.5
  %v427 = vmul.f32 %v392, 0.5
  %v428 = vmul.f32 %v411, 0.5
  %v429 = vmul.f32 %v347, 0.70710677
  %v430 = vmul.f32 %v366, 0.70710677
  %v431 = vmul.f32 %v385, 0.70710677
  %v432 = vmul.f32 %v404, 0.70710677
  %v433 = vmul.f32 %v349, 0.70710677
  %v434 = vmul.f32 %v368, 0.70710677
  %v435 = vmul.f32 %v387, 0.70710677
  %v436 = vmul.f32 %v406, 0.70710677
  %v437 = vmul.f32 %v352, 0.70710677
  %v438 = vmul.f32 %v371, 0.70710677
  %v439 = vmul.f32 %v390, 0.70710677
  %v440 = vmul.f32 %v409, 0.70710677
  %v441 = vmul.f32 %v354, 0.70710677
  %v442 = vmul.f32 %v373, 0.70710677
  %v443 = vmul.f32 %v392, 0.70710677
  %v444 = vmul.f32 %v411, 0.70710677
  %v445 = vand.u32 2147483647, %v429
  %v446 = vand.u32 2147483647, %v430
  %v447 = vand.u32 2147483647, %v431
  %v448 = vand.u32 2147483647, %v432
  %v449 = vand.u32 2147483647, %v433
  %v450 = vand.u32 2147483647, %v434
  %v451 = vand.u32 2147483647, %v435
  %v452 = vand.u32 2147483647, %v436
  %v453 = vand.u32 2147483647, %v437
  %v454 = vand.u32 2147483647, %v438
  %v455 = vand.u32 2147483647, %v439
  %v456 = vand.u32 2147483647, %v440
  %v457 = vand.u32 2147483647, %v441
  %v458 = vand.u32 2147483647, %v442
  %v459 = vand.u32 2147483647, %v443
  %v460 = vand.u32 2147483647, %v444
  %v461 = vmul.f32 %v445, 0.3275911
  %v462 = vmul.f32 %v446, 0.3275911
  %v463 = vmul.f32 %v447, 0.3275911
  %v464 = vmul.f32 %v448, 0.3275911
  %v465 = vmul.f32 %v449, 0.3275911
  %v466 = vmul.f32 %v450, 0.3275911
  %v467 = vmul.f32 %v451, 0.3275911
  %v468 = vmul.f32 %v452, 0.3275911
  %v469 = vmul.f32 %v453, 0.3275911
  %v470 = vmul.f32 %v454, 0.3275911
  %v471 = vmul.f32 %v455, 0.3275911
  %v472 = vmul.f32 %v456, 0.3275911
  %v473 = vmul.f32 %v457, 0.3275911
  %v474 = vmul.f32 %v458, 0.3275911
  %v475 = vmul.f32 %v459, 0.3275911
  %v476 = vmul.f32 %v460, 0.3275911
  %v477 = vadd.f32 %v461, 1.0
  %v478 = vadd.f32 %v462, 1.0
  %v479 = vadd.f32 %v463, 1.0
  %v480 = vadd.f32 %v464, 1.0
  %v481 = vadd.f32 %v465, 1.0
  %v482 = vadd.f32 %v466, 1.0
  %v483 = vadd.f32 %v467, 1.0
  %v484 = vadd.f32 %v468, 1.0
  %v485 = vadd.f32 %v469, 1.0
  %v486 = vadd.f32 %v470, 1.0
  %v487 = vadd.f32 %v471, 1.0
  %v488 = vadd.f32 %v472, 1.0
  %v489 = vadd.f32 %v473, 1.0
  %v490 = vadd.f32 %v474, 1.0
  %v491 = vadd.f32 %v475, 1.0
  %v492 = vadd.f32 %v476, 1.0
  %v493 = vrcp.pop %v477
  %v494 = vmul.f32 %v477, %v493
  %v495 = vsub.f32 1.0, %v494
  %v496 = vmul.f32 %v493, %v495
  %v497 = vadd.f32 %v493, %v496
  %vm498 = vweird.f32 %v477
  %vm499 = vweird.f32 %v493
  %vm500 = vmor %vm498, %vm499
  %v501 = vsel %vm500, %v493, %v497
  %v502 = vand.u32 2147483647, %v477
  %vm503 = vcmp.eq.f32.partialorder %v502, 8.507059e+37
  %v504 = vand.u32 %v477, 2147483648
  %v505 = vor.u32 1.1754944e-38, %v504
  %v506 = vsel %vm503, %v505, %v501
  %v507 = vmul.f32 1.0, %v506
  %v508 = vrcp.pop %v478
  %v509 = vmul.f32 %v478, %v508
  %v510 = vsub.f32 1.0, %v509
  %v511 = vmul.f32 %v508, %v510
  %v512 = vadd.f32 %v508, %v511
  %vm513 = vweird.f32 %v478
  %vm514 = vweird.f32 %v508
  %vm515 = vmor %vm513, %vm514
  %v516 = vsel %vm515, %v508, %v512
  %v517 = vand.u32 2147483647, %v478
  %vm518 = vcmp.eq.f32.partialorder %v517, 8.507059e+37
  %v519 = vand.u32 %v478, 2147483648
  %v520 = vor.u32 1.1754944e-38, %v519
  %v521 = vsel %vm518, %v520, %v516
  %v522 = vmul.f32 1.0, %v521
  %v523 = vrcp.pop %v479
  %v524 = vmul.f32 %v479, %v523
  %v525 = vsub.f32 1.0, %v524
  %v526 = vmul.f32 %v523, %v525
  %v527 = vadd.f32 %v523, %v526
  %vm528 = vweird.f32 %v479
  %vm529 = vweird.f32 %v523
  %vm530 = vmor %vm528, %vm529
  %v531 = vsel %vm530, %v523, %v527
  %v532 = vand.u32 2147483647, %v479
  %vm533 = vcmp.eq.f32.partialorder %v532, 8.507059e+37
  %v534 = vand.u32 %v479, 2147483648
  %v535 = vor.u32 1.1754944e-38, %v534
  %v536 = vsel %vm533, %v535, %v531
  %v537 = vmul.f32 1.0, %v536
  %v538 = vrcp.pop %v480
  %v539 = vmul.f32 %v480, %v538
  %v540 = vsub.f32 1.0, %v539
  %v541 = vmul.f32 %v538, %v540
  %v542 = vadd.f32 %v538, %v541
  %vm543 = vweird.f32 %v480
  %vm544 = vweird.f32 %v538
  %vm545 = vmor %vm543, %vm544
  %v546 = vsel %vm545, %v538, %v542
  %v547 = vand.u32 2147483647, %v480
  %vm548 = vcmp.eq.f32.partialorder %v547, 8.507059e+37
  %v549 = vand.u32 %v480, 2147483648
  %v550 = vor.u32 1.1754944e-38, %v549
  %v551 = vsel %vm548, %v550, %v546
  %v552 = vmul.f32 1.0, %v551
  %v553 = vrcp.pop %v481
  %v554 = vmul.f32 %v481, %v553
  %v555 = vsub.f32 1.0, %v554
  %v556 = vmul.f32 %v553, %v555
  %v557 = vadd.f32 %v553, %v556
  %vm558 = vweird.f32 %v481
  %vm559 = vweird.f32 %v553
  %vm560 = vmor %vm558, %vm559
  %v561 = vsel %vm560, %v553, %v557
  %v562 = vand.u32 2147483647, %v481
  %vm563 = vcmp.eq.f32.partialorder %v562, 8.507059e+37
  %v564 = vand.u32 %v481, 2147483648
  %v565 = vor.u32 1.1754944e-38, %v564
  %v566 = vsel %vm563, %v565, %v561
  %v567 = vmul.f32 1.0, %v566
  %v568 = vrcp.pop %v482
  %v569 = vmul.f32 %v482, %v568
  %v570 = vsub.f32 1.0, %v569
  %v571 = vmul.f32 %v568, %v570
  %v572 = vadd.f32 %v568, %v571
  %vm573 = vweird.f32 %v482
  %vm574 = vweird.f32 %v568
  %vm575 = vmor %vm573, %vm574
  %v576 = vsel %vm575, %v568, %v572
  %v577 = vand.u32 2147483647, %v482
  %vm578 = vcmp.eq.f32.partialorder %v577, 8.507059e+37
  %v579 = vand.u32 %v482, 2147483648
  %v580 = vor.u32 1.1754944e-38, %v579
  %v581 = vsel %vm578, %v580, %v576
  %v582 = vmul.f32 1.0, %v581
  %v583 = vrcp.pop %v483
  %v584 = vmul.f32 %v483, %v583
  %v585 = vsub.f32 1.0, %v584
  %v586 = vmul.f32 %v583, %v585
  %v587 = vadd.f32 %v583, %v586
  %vm588 = vweird.f32 %v483
  %vm589 = vweird.f32 %v583
  %vm590 = vmor %vm588, %vm589
  %v591 = vsel %vm590, %v583, %v587
  %v592 = vand.u32 2147483647, %v483
  %vm593 = vcmp.eq.f32.partialorder %v592, 8.507059e+37
  %v594 = vand.u32 %v483, 2147483648
  %v595 = vor.u32 1.1754944e-38, %v594
  %v596 = vsel %vm593, %v595, %v591
  %v597 = vmul.f32 1.0, %v596
  %v598 = vrcp.pop %v484
  %v599 = vmul.f32 %v484, %v598
  %v600 = vsub.f32 1.0, %v599
  %v601 = vmul.f32 %v598, %v600
  %v602 = vadd.f32 %v598, %v601
  %vm603 = vweird.f32 %v484
  %vm604 = vweird.f32 %v598
  %vm605 = vmor %vm603, %vm604
  %v606 = vsel %vm605, %v598, %v602
  %v607 = vand.u32 2147483647, %v484
  %vm608 = vcmp.eq.f32.partialorder %v607, 8.507059e+37
  %v609 = vand.u32 %v484, 2147483648
  %v610 = vor.u32 1.1754944e-38, %v609
  %v611 = vsel %vm608, %v610, %v606
  %v612 = vmul.f32 1.0, %v611
  %v613 = vrcp.pop %v485
  %v614 = vmul.f32 %v485, %v613
  %v615 = vsub.f32 1.0, %v614
  %v616 = vmul.f32 %v613, %v615
  %v617 = vadd.f32 %v613, %v616
  %vm618 = vweird.f32 %v485
  %vm619 = vweird.f32 %v613
  %vm620 = vmor %vm618, %vm619
  %v621 = vsel %vm620, %v613, %v617
  %v622 = vand.u32 2147483647, %v485
  %vm623 = vcmp.eq.f32.partialorder %v622, 8.507059e+37
  %v624 = vand.u32 %v485, 2147483648
  %v625 = vor.u32 1.1754944e-38, %v624
  %v626 = vsel %vm623, %v625, %v621
  %v627 = vmul.f32 1.0, %v626
  %v628 = vrcp.pop %v486
  %v629 = vmul.f32 %v486, %v628
  %v630 = vsub.f32 1.0, %v629
  %v631 = vmul.f32 %v628, %v630
  %v632 = vadd.f32 %v628, %v631
  %vm633 = vweird.f32 %v486
  %vm634 = vweird.f32 %v628
  %vm635 = vmor %vm633, %vm634
  %v636 = vsel %vm635, %v628, %v632
  %v637 = vand.u32 2147483647, %v486
  %vm638 = vcmp.eq.f32.partialorder %v637, 8.507059e+37
  %v639 = vand.u32 %v486, 2147483648
  %v640 = vor.u32 1.1754944e-38, %v639
  %v641 = vsel %vm638, %v640, %v636
  %v642 = vmul.f32 1.0, %v641
  %v643 = vrcp.pop %v487
  %v644 = vmul.f32 %v487, %v643
  %v645 = vsub.f32 1.0, %v644
  %v646 = vmul.f32 %v643, %v645
  %v647 = vadd.f32 %v643, %v646
  %vm648 = vweird.f32 %v487
  %vm649 = vweird.f32 %v643
  %vm650 = vmor %vm648, %vm649
  %v651 = vsel %vm650, %v643, %v647
  %v652 = vand.u32 2147483647, %v487
  %vm653 = vcmp.eq.f32.partialorder %v652, 8.507059e+37
  %v654 = vand.u32 %v487, 2147483648
  %v655 = vor.u32 1.1754944e-38, %v654
  %v656 = vsel %vm653, %v655, %v651
  %v657 = vmul.f32 1.0, %v656
  %v658 = vrcp.pop %v488
  %v659 = vmul.f32 %v488, %v658
  %v660 = vsub.f32 1.0, %v659
  %v661 = vmul.f32 %v658, %v660
  %v662 = vadd.f32 %v658, %v661
  %vm663 = vweird.f32 %v488
  %vm664 = vweird.f32 %v658
  %vm665 = vmor %vm663, %vm664
  %v666 = vsel %vm665, %v658, %v662
  %v667 = vand.u32 2147483647, %v488
  %vm668 = vcmp.eq.f32.partialorder %v667, 8.507059e+37
  %v669 = vand.u32 %v488, 2147483648
  %v670 = vor.u32 1.1754944e-38, %v669
  %v671 = vsel %vm668, %v670, %v666
  %v672 = vmul.f32 1.0, %v671
  %v673 = vrcp.pop %v489
  %v674 = vmul.f32 %v489, %v673
  %v675 = vsub.f32 1.0, %v674
  %v676 = vmul.f32 %v673, %v675
  %v677 = vadd.f32 %v673, %v676
  %vm678 = vweird.f32 %v489
  %vm679 = vweird.f32 %v673
  %vm680 = vmor %vm678, %vm679
  %v681 = vsel %vm680, %v673, %v677
  %v682 = vand.u32 2147483647, %v489
  %vm683 = vcmp.eq.f32.partialorder %v682, 8.507059e+37
  %v684 = vand.u32 %v489, 2147483648
  %v685 = vor.u32 1.1754944e-38, %v684
  %v686 = vsel %vm683, %v685, %v681
  %v687 = vmul.f32 1.0, %v686
  %v688 = vrcp.pop %v490
  %v689 = vmul.f32 %v490, %v688
  %v690 = vsub.f32 1.0, %v689
  %v691 = vmul.f32 %v688, %v690
  %v692 = vadd.f32 %v688, %v691
  %vm693 = vweird.f32 %v490
  %vm694 = vweird.f32 %v688
  %vm695 = vmor %vm693, %vm694
  %v696 = vsel %vm695, %v688, %v692
  %v697 = vand.u32 2147483647, %v490
  %vm698 = vcmp.eq.f32.partialorder %v697, 8.507059e+37
  %v699 = vand.u32 %v490, 2147483648
  %v700 = vor.u32 1.1754944e-38, %v699
  %v701 = vsel %vm698, %v700, %v696
  %v702 = vmul.f32 1.0, %v701
  %v703 = vrcp.pop %v491
  %v704 = vmul.f32 %v491, %v703
  %v705 = vsub.f32 1.0, %v704
  %v706 = vmul.f32 %v703, %v705
  %v707 = vadd.f32 %v703, %v706
  %vm708 = vweird.f32 %v491
  %vm709 = vweird.f32 %v703
  %vm710 = vmor %vm708, %vm709
  %v711 = vsel %vm710, %v703, %v707
  %v712 = vand.u32 2147483647, %v491
  %vm713 = vcmp.eq.f32.partialorder %v712, 8.507059e+37
  %v714 = vand.u32 %v491, 2147483648
  %v715 = vor.u32 1.1754944e-38, %v714
  %v716 = vsel %vm713, %v715, %v711
  %v717 = vmul.f32 1.0, %v716
  %v718 = vrcp.pop %v492
  %v719 = vmul.f32 %v492, %v718
  %v720 = vsub.f32 1.0, %v719
  %v721 = vmul.f32 %v718, %v720
  %v722 = vadd.f32 %v718, %v721
  %vm723 = vweird.f32 %v492
  %vm724 = vweird.f32 %v718
  %vm725 = vmor %vm723, %vm724
  %v726 = vsel %vm725, %v718, %v722
  %v727 = vand.u32 2147483647, %v492
  %vm728 = vcmp.eq.f32.partialorder %v727, 8.507059e+37
  %v729 = vand.u32 %v492, 2147483648
  %v730 = vor.u32 1.1754944e-38, %v729
  %v731 = vsel %vm728, %v730, %v726
  %v732 = vmul.f32 1.0, %v731
  %v733 = vmul.f32 %v507, 1.0614054
  %v734 = vmul.f32 %v522, 1.0614054
  %v735 = vmul.f32 %v537, 1.0614054
  %v736 = vmul.f32 %v552, 1.0614054
  %v737 = vmul.f32 %v567, 1.0614054
  %v738 = vmul.f32 %v582, 1.0614054
  %v739 = vmul.f32 %v597, 1.0614054
  %v740 = vmul.f32 %v612, 1.0614054
  %v741 = vmul.f32 %v627, 1.0614054
  %v742 = vmul.f32 %v642, 1.0614054
  %v743 = vmul.f32 %v657, 1.0614054
  %v744 = vmul.f32 %v672, 1.0614054
  %v745 = vmul.f32 %v687, 1.0614054
  %v746 = vmul.f32 %v702, 1.0614054
  %v747 = vmul.f32 %v717, 1.0614054
  %v748 = vmul.f32 %v732, 1.0614054
  %v749 = vadd.f32 %v733, -1.4531521
  %v750 = vadd.f32 %v734, -1.4531521
  %v751 = vadd.f32 %v735, -1.4531521
  %v752 = vadd.f32 %v736, -1.4531521
  %v753 = vadd.f32 %v737, -1.4531521
  %v754 = vadd.f32 %v738, -1.4531521
  %v755 = vadd.f32 %v739, -1.4531521
  %v756 = vadd.f32 %v740, -1.4531521
  %v757 = vadd.f32 %v741, -1.4531521
  %v758 = vadd.f32 %v742, -1.4531521
  %v759 = vadd.f32 %v743, -1.4531521
  %v760 = vadd.f32 %v744, -1.4531521
  %v761 = vadd.f32 %v745, -1.4531521
  %v762 = vadd.f32 %v746, -1.4531521
  %v763 = vadd.f32 %v747, -1.4531521
  %v764 = vadd.f32 %v748, -1.4531521
  %v765 = vmul.f32 %v749, %v507
  %v766 = vmul.f32 %v750, %v522
  %v767 = vmul.f32 %v751, %v537
  %v768 = vmul.f32 %v752, %v552
  %v769 = vmul.f32 %v753, %v567
  %v770 = vmul.f32 %v754, %v582
  %v771 = vmul.f32 %v755, %v597
  %v772 = vmul.f32 %v756, %v612
  %v773 = vmul.f32 %v757, %v627
  %v774 = vmul.f32 %v758, %v642
  %v775 = vmul.f32 %v759, %v657
  %v776 = vmul.f32 %v760, %v672
  %v777 = vmul.f32 %v761, %v687
  %v778 = vmul.f32 %v762, %v702
  %v779 = vmul.f32 %v763, %v717
  %v780 = vmul.f32 %v764, %v732
  %v781 = vadd.f32 %v765, 1.4214138
  %v782 = vadd.f32 %v766, 1.4214138
  %v783 = vadd.f32 %v767, 1.4214138
  %v784 = vadd.f32 %v768, 1.4214138
  %v785 = vadd.f32 %v769, 1.4214138
  %v786 = vadd.f32 %v770, 1.4214138
  %v787 = vadd.f32 %v771, 1.4214138
  %v788 = vadd.f32 %v772, 1.4214138
  %v789 = vadd.f32 %v773, 1.4214138
  %v790 = vadd.f32 %v774, 1.4214138
  %v791 = vadd.f32 %v775, 1.4214138
  %v792 = vadd.f32 %v776, 1.4214138
  %v793 = vadd.f32 %v777, 1.4214138
  %v794 = vadd.f32 %v778, 1.4214138
  %v795 = vadd.f32 %v779, 1.4214138
  %v796 = vadd.f32 %v780, 1.4214138
  %v797 = vmul.f32 %v781, %v507
  %v798 = vmul.f32 %v782, %v522
  %v799 = vmul.f32 %v783, %v537
  %v800 = vmul.f32 %v784, %v552
  %v801 = vmul.f32 %v785, %v567
  %v802 = vmul.f32 %v786, %v582
  %v803 = vmul.f32 %v787, %v597
  %v804 = vmul.f32 %v788, %v612
  %v805 = vmul.f32 %v789, %v627
  %v806 = vmul.f32 %v790, %v642
  %v807 = vmul.f32 %v791, %v657
  %v808 = vmul.f32 %v792, %v672
  %v809 = vmul.f32 %v793, %v687
  %v810 = vmul.f32 %v794, %v702
  %v811 = vmul.f32 %v795, %v717
  %v812 = vmul.f32 %v796, %v732
  %v813 = vadd.f32 %v797, -0.28449672
  %v814 = vadd.f32 %v798, -0.28449672
  %v815 = vadd.f32 %v799, -0.28449672
  %v816 = vadd.f32 %v800, -0.28449672
  %v817 = vadd.f32 %v801, -0.28449672
  %v818 = vadd.f32 %v802, -0.28449672
  %v819 = vadd.f32 %v803, -0.28449672
  %v820 = vadd.f32 %v804, -0.28449672
  %v821 = vadd.f32 %v805, -0.28449672
  %v822 = vadd.f32 %v806, -0.28449672
  %v823 = vadd.f32 %v807, -0.28449672
  %v824 = vadd.f32 %v808, -0.28449672
  %v825 = vadd.f32 %v809, -0.28449672
  %v826 = vadd.f32 %v810, -0.28449672
  %v827 = vadd.f32 %v811, -0.28449672
  %v828 = vadd.f32 %v812, -0.28449672
  %v829 = vmul.f32 %v813, %v507
  %v830 = vmul.f32 %v814, %v522
  %v831 = vmul.f32 %v815, %v537
  %v832 = vmul.f32 %v816, %v552
  %v833 = vmul.f32 %v817, %v567
  %v834 = vmul.f32 %v818, %v582
  %v835 = vmul.f32 %v819, %v597
  %v836 = vmul.f32 %v820, %v612
  %v837 = vmul.f32 %v821, %v627
  %v838 = vmul.f32 %v822, %v642
  %v839 = vmul.f32 %v823, %v657
  %v840 = vmul.f32 %v824, %v672
  %v841 = vmul.f32 %v825, %v687
  %v842 = vmul.f32 %v826, %v702
  %v843 = vmul.f32 %v827, %v717
  %v844 = vmul.f32 %v828, %v732
  %v845 = vadd.f32 %v829, 0.2548296
  %v846 = vadd.f32 %v830, 0.2548296
  %v847 = vadd.f32 %v831, 0.2548296
  %v848 = vadd.f32 %v832, 0.2548296
  %v849 = vadd.f32 %v833, 0.2548296
  %v850 = vadd.f32 %v834, 0.2548296
  %v851 = vadd.f32 %v835, 0.2548296
  %v852 = vadd.f32 %v836, 0.2548296
  %v853 = vadd.f32 %v837, 0.2548296
  %v854 = vadd.f32 %v838, 0.2548296
  %v855 = vadd.f32 %v839, 0.2548296
  %v856 = vadd.f32 %v840, 0.2548296
  %v857 = vadd.f32 %v841, 0.2548296
  %v858 = vadd.f32 %v842, 0.2548296
  %v859 = vadd.f32 %v843, 0.2548296
  %v860 = vadd.f32 %v844, 0.2548296
  %v861 = vmul.f32 %v845, %v507
  %v862 = vmul.f32 %v846, %v522
  %v863 = vmul.f32 %v847, %v537
  %v864 = vmul.f32 %v848, %v552
  %v865 = vmul.f32 %v849, %v567
  %v866 = vmul.f32 %v850, %v582
  %v867 = vmul.f32 %v851, %v597
  %v868 = vmul.f32 %v852, %v612
  %v869 = vmul.f32 %v853, %v627
  %v870 = vmul.f32 %v854, %v642
  %v871 = vmul.f32 %v855, %v657
  %v872 = vmul.f32 %v856, %v672
  %v873 = vmul.f32 %v857, %v687
  %v874 = vmul.f32 %v858, %v702
  %v875 = vmul.f32 %v859, %v717
  %v876 = vmul.f32 %v860, %v732
  %v877 = vsub.f32 0.0, %v445
  %v878 = vsub.f32 0.0, %v446
  %v879 = vsub.f32 0.0, %v447
  %v880 = vsub.f32 0.0, %v448
  %v881 = vsub.f32 0.0, %v449
  %v882 = vsub.f32 0.0, %v450
  %v883 = vsub.f32 0.0, %v451
  %v884 = vsub.f32 0.0, %v452
  %v885 = vsub.f32 0.0, %v453
  %v886 = vsub.f32 0.0, %v454
  %v887 = vsub.f32 0.0, %v455
  %v888 = vsub.f32 0.0, %v456
  %v889 = vsub.f32 0.0, %v457
  %v890 = vsub.f32 0.0, %v458
  %v891 = vsub.f32 0.0, %v459
  %v892 = vsub.f32 0.0, %v460
  %v893 = vmul.f32 %v877, %v445
  %v894 = vmul.f32 %v878, %v446
  %v895 = vmul.f32 %v879, %v447
  %v896 = vmul.f32 %v880, %v448
  %v897 = vmul.f32 %v881, %v449
  %v898 = vmul.f32 %v882, %v450
  %v899 = vmul.f32 %v883, %v451
  %v900 = vmul.f32 %v884, %v452
  %v901 = vmul.f32 %v885, %v453
  %v902 = vmul.f32 %v886, %v454
  %v903 = vmul.f32 %v887, %v455
  %v904 = vmul.f32 %v888, %v456
  %v905 = vmul.f32 %v889, %v457
  %v906 = vmul.f32 %v890, %v458
  %v907 = vmul.f32 %v891, %v459
  %v908 = vmul.f32 %v892, %v460
  %v909 = vmul.f32 %v893, 1.442695
  %v910 = vpow.pop %v909
  %v911 = vmul.f32 %v894, 1.442695
  %v912 = vpow.pop %v911
  %v913 = vmul.f32 %v895, 1.442695
  %v914 = vpow.pop %v913
  %v915 = vmul.f32 %v896, 1.442695
  %v916 = vpow.pop %v915
  %v917 = vmul.f32 %v897, 1.442695
  %v918 = vpow.pop %v917
  %v919 = vmul.f32 %v898, 1.442695
  %v920 = vpow.pop %v919
  %v921 = vmul.f32 %v899, 1.442695
  %v922 = vpow.pop %v921
  %v923 = vmul.f32 %v900, 1.442695
  %v924 = vpow.pop %v923
  %v925 = vmul.f32 %v901, 1.442695
  %v926 = vpow.pop %v925
  %v927 = vmul.f32 %v902, 1.442695
  %v928 = vpow.pop %v927
  %v929 = vmul.f32 %v903, 1.442695
  %v930 = vpow.pop %v929
  %v931 = vmul.f32 %v904, 1.442695
  %v932 = vpow.pop %v931
  %v933 = vmul.f32 %v905, 1.442695
  %v934 = vpow.pop %v933
  %v935 = vmul.f32 %v906, 1.442695
  %v936 = vpow.pop %v935
  %v937 = vmul.f32 %v907, 1.442695
  %v938 = vpow.pop %v937
  %v939 = vmul.f32 %v908, 1.442695
  %v940 = vpow.pop %v939
  %v941 = vmul.f32 %v861, %v910
  %v942 = vmul.f32 %v862, %v912
  %v943 = vmul.f32 %v863, %v914
  %v944 = vmul.f32 %v864, %v916
  %v945 = vmul.f32 %v865, %v918
  %v946 = vmul.f32 %v866, %v920
  %v947 = vmul.f32 %v867, %v922
  %v948 = vmul.f32 %v868, %v924
  %v949 = vmul.f32 %v869, %v926
  %v950 = vmul.f32 %v870, %v928
  %v951 = vmul.f32 %v871, %v930
  %v952 = vmul.f32 %v872, %v932
  %v953 = vmul.f32 %v873, %v934
  %v954 = vmul.f32 %v874, %v936
  %v955 = vmul.f32 %v875, %v938
  %v956 = vmul.f32 %v876, %v940
  %v957 = vsub.f32 1.0, %v941
  %v958 = vsub.f32 1.0, %v942
  %v959 = vsub.f32 1.0, %v943
  %v960 = vsub.f32 1.0, %v944
  %v961 = vsub.f32 1.0, %v945
  %v962 = vsub.f32 1.0, %v946
  %v963 = vsub.f32 1.0, %v947
  %v964 = vsub.f32 1.0, %v948
  %v965 = vsub.f32 1.0, %v949
  %v966 = vsub.f32 1.0, %v950
  %v967 = vsub.f32 1.0, %v951
  %v968 = vsub.f32 1.0, %v952
  %v969 = vsub.f32 1.0, %v953
  %v970 = vsub.f32 1.0, %v954
  %v971 = vsub.f32 1.0, %v955
  %v972 = vsub.f32 1.0, %v956
  %vm973 = vcmp.ge.f32.partialorder %v429, 0.0
  %vm974 = vcmp.ge.f32.partialorder %v430, 0.0
  %vm975 = vcmp.ge.f32.partialorder %v431, 0.0
  %vm976 = vcmp.ge.f32.partialorder %v432, 0.0
  %vm977 = vcmp.ge.f32.partialorder %v433, 0.0
  %vm978 = vcmp.ge.f32.partialorder %v434, 0.0
  %vm979 = vcmp.ge.f32.partialorder %v435, 0.0
  %vm980 = vcmp.ge.f32.partialorder %v436, 0.0
  %vm981 = vcmp.ge.f32.partialorder %v437, 0.0
  %vm982 = vcmp.ge.f32.partialorder %v438, 0.0
  %vm983 = vcmp.ge.f32.partialorder %v439, 0.0
  %vm984 = vcmp.ge.f32.partialorder %v440, 0.0
  %vm985 = vcmp.ge.f32.partialorder %v441, 0.0
  %vm986 = vcmp.ge.f32.partialorder %v442, 0.0
  %vm987 = vcmp.ge.f32.partialorder %v443, 0.0
  %vm988 = vcmp.ge.f32.partialorder %v444, 0.0
  %v989 = vsub.f32 0.0, %v957
  %v990 = vsub.f32 0.0, %v958
  %v991 = vsub.f32 0.0, %v959
  %v992 = vsub.f32 0.0, %v960
  %v993 = vsub.f32 0.0, %v961
  %v994 = vsub.f32 0.0, %v962
  %v995 = vsub.f32 0.0, %v963
  %v996 = vsub.f32 0.0, %v964
  %v997 = vsub.f32 0.0, %v965
  %v998 = vsub.f32 0.0, %v966
  %v999 = vsub.f32 0.0, %v967
  %v1000 = vsub.f32 0.0, %v968
  %v1001 = vsub.f32 0.0, %v969
  %v1002 = vsub.f32 0.0, %v970
  %v1003 = vsub.f32 0.0, %v971
  %v1004 = vsub.f32 0.0, %v972
  %v1005 = vsel %vm973, %v957, %v989
  %v1006 = vsel %vm974, %v958, %v990
  %v1007 = vsel %vm975, %v959, %v991
  %v1008 = vsel %vm976, %v960, %v992
  %v1009 = vsel %vm977, %v961, %v993
  %v1010 = vsel %vm978, %v962, %v994
  %v1011 = vsel %vm979, %v963, %v995
  %v1012 = vsel %vm980, %v964, %v996
  %v1013 = vsel %vm981, %v965, %v997
  %v1014 = vsel %vm982, %v966, %v998
  %v1015 = vsel %vm983, %v967, %v999
  %v1016 = vsel %vm984, %v968, %v1000
  %v1017 = vsel %vm985, %v969, %v1001
  %v1018 = vsel %vm986, %v970, %v1002
  %v1019 = vsel %vm987, %v971, %v1003
  %v1020 = vsel %vm988, %v972, %v1004
  %v1021 = vadd.f32 %v1005, 1.0
  %v1022 = vadd.f32 %v1006, 1.0
  %v1023 = vadd.f32 %v1007, 1.0
  %v1024 = vadd.f32 %v1008, 1.0
  %v1025 = vadd.f32 %v1009, 1.0
  %v1026 = vadd.f32 %v1010, 1.0
  %v1027 = vadd.f32 %v1011, 1.0
  %v1028 = vadd.f32 %v1012, 1.0
  %v1029 = vadd.f32 %v1013, 1.0
  %v1030 = vadd.f32 %v1014, 1.0
  %v1031 = vadd.f32 %v1015, 1.0
  %v1032 = vadd.f32 %v1016, 1.0
  %v1033 = vadd.f32 %v1017, 1.0
  %v1034 = vadd.f32 %v1018, 1.0
  %v1035 = vadd.f32 %v1019, 1.0
  %v1036 = vadd.f32 %v1020, 1.0
  %v1037 = vmul.f32 %v413, %v1021
  %v1038 = vmul.f32 %v414, %v1022
  %v1039 = vmul.f32 %v415, %v1023
  %v1040 = vmul.f32 %v416, %v1024
  %v1041 = vmul.f32 %v417, %v1025
  %v1042 = vmul.f32 %v418, %v1026
  %v1043 = vmul.f32 %v419, %v1027
  %v1044 = vmul.f32 %v420, %v1028
  %v1045 = vmul.f32 %v421, %v1029
  %v1046 = vmul.f32 %v422, %v1030
  %v1047 = vmul.f32 %v423, %v1031
  %v1048 = vmul.f32 %v424, %v1032
  %v1049 = vmul.f32 %v425, %v1033
  %v1050 = vmul.f32 %v426, %v1034
  %v1051 = vmul.f32 %v427, %v1035
  %v1052 = vmul.f32 %v428, %v1036
  %v1053 = vpack.c.bf16 %v1041, %v1037
  %v1054 = vpack.c.bf16 %v1042, %v1038
  %v1055 = vpack.c.bf16 %v1043, %v1039
  %v1056 = vpack.c.bf16 %v1044, %v1040
  %v1057 = vpack.c.bf16 %v1049, %v1045
  %v1058 = vpack.c.bf16 %v1050, %v1046
  %v1059 = vpack.c.bf16 %v1051, %v1047
  %v1060 = vpack.c.bf16 %v1052, %v1048
  %v1061 = vld [vmem:[%s5] sm:$0xf]
  %v1062 = vld [vmem:[%s5 + $0x4] sm:$0xf]
  %v1063 = vld [vmem:[%s5 + $0x8] sm:$0xf]
  %v1064 = vld [vmem:[%s5 + $0xc] sm:$0xf]
  %v1065 = vld [vmem:[%s5 + $0x10] sm:$0xf]
  %v1066 = vld [vmem:[%s5 + $0x14] sm:$0xf]
  %v1067 = vld [vmem:[%s5 + $0x18] sm:$0xf]
  %v1068 = vld [vmem:[%s5 + $0x1c] sm:$0xf]
  %v1069 = vld [vmem:[%s5 + $0x20] sm:$0xf]
  %v1070 = vld [vmem:[%s5 + $0x24] sm:$0xf]
  %v1071 = vld [vmem:[%s5 + $0x28] sm:$0xf]
  %v1072 = vld [vmem:[%s5 + $0x2c] sm:$0xf]
  %v1073 = vld [vmem:[%s5 + $0x30] sm:$0xf]
  %v1074 = vld [vmem:[%s5 + $0x34] sm:$0xf]
  %v1075 = vld [vmem:[%s5 + $0x38] sm:$0xf]
  %v1076 = vld [vmem:[%s5 + $0x3c] sm:$0xf]
  %v1077 = vld [vmem:[%s5 + $0x40] sm:$0xf]
  %v1078 = vld [vmem:[%s5 + $0x44] sm:$0xf]
  %v1079 = vld [vmem:[%s5 + $0x48] sm:$0xf]
  %v1080 = vld [vmem:[%s5 + $0x4c] sm:$0xf]
  %v1081 = vld [vmem:[%s5 + $0x50] sm:$0xf]
  %v1082 = vld [vmem:[%s5 + $0x54] sm:$0xf]
  %v1083 = vld [vmem:[%s5 + $0x58] sm:$0xf]
  %v1084 = vld [vmem:[%s5 + $0x5c] sm:$0xf]
  %v1085 = vld [vmem:[%s5 + $0x60] sm:$0xf]
  %v1086 = vld [vmem:[%s5 + $0x64] sm:$0xf]
  %v1087 = vld [vmem:[%s5 + $0x68] sm:$0xf]
  %v1088 = vld [vmem:[%s5 + $0x6c] sm:$0xf]
  %v1089 = vld [vmem:[%s5 + $0x70] sm:$0xf]
  %v1090 = vld [vmem:[%s5 + $0x74] sm:$0xf]
  %v1091 = vld [vmem:[%s5 + $0x78] sm:$0xf]
  %v1092 = vld [vmem:[%s5 + $0x7c] sm:$0xf]
  %v1093 = vld [vmem:[%s5 + $0x80] sm:$0xf]
  %v1094 = vld [vmem:[%s5 + $0x84] sm:$0xf]
  %v1095 = vld [vmem:[%s5 + $0x88] sm:$0xf]
  %v1096 = vld [vmem:[%s5 + $0x8c] sm:$0xf]
  %v1097 = vld [vmem:[%s5 + $0x90] sm:$0xf]
  %v1098 = vld [vmem:[%s5 + $0x94] sm:$0xf]
  %v1099 = vld [vmem:[%s5 + $0x98] sm:$0xf]
  %v1100 = vld [vmem:[%s5 + $0x9c] sm:$0xf]
  %v1101 = vld [vmem:[%s5 + $0xa0] sm:$0xf]
  %v1102 = vld [vmem:[%s5 + $0xa4] sm:$0xf]
  %v1103 = vld [vmem:[%s5 + $0xa8] sm:$0xf]
  %v1104 = vld [vmem:[%s5 + $0xac] sm:$0xf]
  %v1105 = vld [vmem:[%s5 + $0xb0] sm:$0xf]
  %v1106 = vld [vmem:[%s5 + $0xb4] sm:$0xf]
  %v1107 = vld [vmem:[%s5 + $0xb8] sm:$0xf]
  %v1108 = vld [vmem:[%s5 + $0xbc] sm:$0xf]
  %v1109 = vld [vmem:[%s5 + $0xc0] sm:$0xf]
  %v1110 = vld [vmem:[%s5 + $0xc4] sm:$0xf]
  %v1111 = vld [vmem:[%s5 + $0xc8] sm:$0xf]
  %v1112 = vld [vmem:[%s5 + $0xcc] sm:$0xf]
  %v1113 = vld [vmem:[%s5 + $0xd0] sm:$0xf]
  %v1114 = vld [vmem:[%s5 + $0xd4] sm:$0xf]
  %v1115 = vld [vmem:[%s5 + $0xd8] sm:$0xf]
  %v1116 = vld [vmem:[%s5 + $0xdc] sm:$0xf]
  %v1117 = vld [vmem:[%s5 + $0xe0] sm:$0xf]
  %v1118 = vld [vmem:[%s5 + $0xe4] sm:$0xf]
  %v1119 = vld [vmem:[%s5 + $0xe8] sm:$0xf]
  %v1120 = vld [vmem:[%s5 + $0xec] sm:$0xf]
  %v1121 = vld [vmem:[%s5 + $0xf0] sm:$0xf]
  %v1122 = vld [vmem:[%s5 + $0xf4] sm:$0xf]
  %v1123 = vld [vmem:[%s5 + $0xf8] sm:$0xf]
  %v1124 = vld [vmem:[%s5 + $0xfc] sm:$0xf]
  %v1125 = vld [vmem:[%s6] sm:$0x1]
  %v1127 = vperm.slane %v1125, 0
  %v1193 = vunpack.c.l.b16 %v1061
  %v1194 = vunpack.c.l.b16 %v1062
  %v1195 = vunpack.c.l.b16 %v1063
  %v1196 = vunpack.c.l.b16 %v1064
  %v1197 = vunpack.c.l.b16 %v1065
  %v1198 = vunpack.c.l.b16 %v1066
  %v1199 = vunpack.c.l.b16 %v1067
  %v1200 = vunpack.c.l.b16 %v1068
  %v1201 = vunpack.c.l.b16 %v1069
  %v1202 = vunpack.c.l.b16 %v1070
  %v1203 = vunpack.c.l.b16 %v1071
  %v1204 = vunpack.c.l.b16 %v1072
  %v1205 = vunpack.c.l.b16 %v1073
  %v1206 = vunpack.c.l.b16 %v1074
  %v1207 = vunpack.c.l.b16 %v1075
  %v1208 = vunpack.c.l.b16 %v1076
  %v1209 = vunpack.c.l.b16 %v1077
  %v1210 = vunpack.c.l.b16 %v1078
  %v1211 = vunpack.c.l.b16 %v1079
  %v1212 = vunpack.c.l.b16 %v1080
  %v1213 = vunpack.c.l.b16 %v1081
  %v1214 = vunpack.c.l.b16 %v1082
  %v1215 = vunpack.c.l.b16 %v1083
  %v1216 = vunpack.c.l.b16 %v1084
  %v1217 = vunpack.c.l.b16 %v1085
  %v1218 = vunpack.c.l.b16 %v1086
  %v1219 = vunpack.c.l.b16 %v1087
  %v1220 = vunpack.c.l.b16 %v1088
  %v1221 = vunpack.c.l.b16 %v1089
  %v1222 = vunpack.c.l.b16 %v1090
  %v1223 = vunpack.c.l.b16 %v1091
  %v1224 = vunpack.c.l.b16 %v1092
  %v1225 = vunpack.c.l.b16 %v1093
  %v1226 = vunpack.c.l.b16 %v1094
  %v1227 = vunpack.c.l.b16 %v1095
  %v1228 = vunpack.c.l.b16 %v1096
  %v1229 = vunpack.c.l.b16 %v1097
  %v1230 = vunpack.c.l.b16 %v1098
  %v1231 = vunpack.c.l.b16 %v1099
  %v1232 = vunpack.c.l.b16 %v1100
  %v1233 = vunpack.c.l.b16 %v1101
  %v1234 = vunpack.c.l.b16 %v1102
  %v1235 = vunpack.c.l.b16 %v1103
  %v1236 = vunpack.c.l.b16 %v1104
  %v1237 = vunpack.c.l.b16 %v1105
  %v1238 = vunpack.c.l.b16 %v1106
  %v1239 = vunpack.c.l.b16 %v1107
  %v1240 = vunpack.c.l.b16 %v1108
  %v1241 = vunpack.c.l.b16 %v1109
  %v1242 = vunpack.c.l.b16 %v1110
  %v1243 = vunpack.c.l.b16 %v1111
  %v1244 = vunpack.c.l.b16 %v1112
  %v1245 = vunpack.c.l.b16 %v1113
  %v1246 = vunpack.c.l.b16 %v1114
  %v1247 = vunpack.c.l.b16 %v1115
  %v1248 = vunpack.c.l.b16 %v1116
  %v1249 = vunpack.c.l.b16 %v1117
  %v1250 = vunpack.c.l.b16 %v1118
  %v1251 = vunpack.c.l.b16 %v1119
  %v1252 = vunpack.c.l.b16 %v1120
  %v1253 = vunpack.c.l.b16 %v1121
  %v1254 = vunpack.c.l.b16 %v1122
  %v1255 = vunpack.c.l.b16 %v1123
  %v1256 = vunpack.c.l.b16 %v1124
  %v1257 = vpack.c.b16 %v1194, %v1193
  %v1258 = vpack.c.b16 %v1196, %v1195
  %v1259 = vpack.c.b16 %v1198, %v1197
  %v1260 = vpack.c.b16 %v1200, %v1199
  %v1261 = vpack.c.b16 %v1202, %v1201
  %v1262 = vpack.c.b16 %v1204, %v1203
  %v1263 = vpack.c.b16 %v1206, %v1205
  %v1264 = vpack.c.b16 %v1208, %v1207
  %v1265 = vpack.c.b16 %v1210, %v1209
  %v1266 = vpack.c.b16 %v1212, %v1211
  %v1267 = vpack.c.b16 %v1214, %v1213
  %v1268 = vpack.c.b16 %v1216, %v1215
  %v1269 = vpack.c.b16 %v1218, %v1217
  %v1270 = vpack.c.b16 %v1220, %v1219
  %v1271 = vpack.c.b16 %v1222, %v1221
  %v1272 = vpack.c.b16 %v1224, %v1223
  %v1273 = vpack.c.b16 %v1226, %v1225
  %v1274 = vpack.c.b16 %v1228, %v1227
  %v1275 = vpack.c.b16 %v1230, %v1229
  %v1276 = vpack.c.b16 %v1232, %v1231
  %v1277 = vpack.c.b16 %v1234, %v1233
  %v1278 = vpack.c.b16 %v1236, %v1235
  %v1279 = vpack.c.b16 %v1238, %v1237
  %v1280 = vpack.c.b16 %v1240, %v1239
  %v1281 = vpack.c.b16 %v1242, %v1241
  %v1282 = vpack.c.b16 %v1244, %v1243
  %v1283 = vpack.c.b16 %v1246, %v1245
  %v1284 = vpack.c.b16 %v1248, %v1247
  %v1285 = vpack.c.b16 %v1250, %v1249
  %v1286 = vpack.c.b16 %v1252, %v1251
  %v1287 = vpack.c.b16 %v1254, %v1253
  %v1288 = vpack.c.b16 %v1256, %v1255
  %1321 = vmatpush.bf16.msra.mxu0 %v1264
  %1322 = vmatpush.bf16.msra.mxu0 %v1263
  %1323 = vmatpush.bf16.msra.mxu0 %v1262
  %1324 = vmatpush.bf16.msra.mxu0 %v1261
  %1325 = vmatpush.bf16.msra.mxu0 %v1260
  %1326 = vmatpush.bf16.msra.mxu0 %v1259
  %1327 = vmatpush.bf16.msra.mxu0 %v1258
  %1328 = vmatpush.bf16.msra.mxu0 %v1257
  %1329 = vmatmul.bf16.gmra.mxu0 %v1053
  %v1330 = vpop.f32.mrf.mxu0
  %v1331 = vadd.f32 %v1127, %v1330
  %v1332 = vpop.f32.mrf.mxu0
  %v1333 = vadd.f32 %v1127, %v1332
  %1334 = vmatmul.bf16.gmra.mxu0 %v1057
  %v1335 = vpop.f32.mrf.mxu0
  %v1336 = vadd.f32 %v1127, %v1335
  %v1337 = vpop.f32.mrf.mxu0
  %v1338 = vadd.f32 %v1127, %v1337
  %1339 = vdwg.mxu0
  %1340 = vmatpush.bf16.msra.mxu0 %v1272
  %1341 = vmatpush.bf16.msra.mxu0 %v1271
  %1342 = vmatpush.bf16.msra.mxu0 %v1270
  %1343 = vmatpush.bf16.msra.mxu0 %v1269
  %1344 = vmatpush.bf16.msra.mxu0 %v1268
  %1345 = vmatpush.bf16.msra.mxu0 %v1267
  %1346 = vmatpush.bf16.msra.mxu0 %v1266
  %1347 = vmatpush.bf16.msra.mxu0 %v1265
  %1348 = vmatmul.bf16.gmra.mxu0 %v1054
  %v1349 = vpop.f32.mrf.mxu0
  %v1350 = vadd.f32 %v1331, %v1349
  %v1351 = vpop.f32.mrf.mxu0
  %v1352 = vadd.f32 %v1333, %v1351
  %1353 = vmatmul.bf16.gmra.mxu0 %v1058
  %v1354 = vpop.f32.mrf.mxu0
  %v1355 = vadd.f32 %v1336, %v1354
  %v1356 = vpop.f32.mrf.mxu0
  %v1357 = vadd.f32 %v1338, %v1356
  %1358 = vdwg.mxu0
  %1359 = vmatpush.bf16.msra.mxu0 %v1280
  %1360 = vmatpush.bf16.msra.mxu0 %v1279
  %1361 = vmatpush.bf16.msra.mxu0 %v1278
  %1362 = vmatpush.bf16.msra.mxu0 %v1277
  %1363 = vmatpush.bf16.msra.mxu0 %v1276
  %1364 = vmatpush.bf16.msra.mxu0 %v1275
  %1365 = vmatpush.bf16.msra.mxu0 %v1274
  %1366 = vmatpush.bf16.msra.mxu0 %v1273
  %1367 = vmatmul.bf16.gmra.mxu0 %v1055
  %v1368 = vpop.f32.mrf.mxu0
  %v1369 = vadd.f32 %v1350, %v1368
  %v1370 = vpop.f32.mrf.mxu0
  %v1371 = vadd.f32 %v1352, %v1370
  %1372 = vmatmul.bf16.gmra.mxu0 %v1059
  %v1373 = vpop.f32.mrf.mxu0
  %v1374 = vadd.f32 %v1355, %v1373
  %v1375 = vpop.f32.mrf.mxu0
  %v1376 = vadd.f32 %v1357, %v1375
  %1377 = vdwg.mxu0
  %1378 = vmatpush.bf16.msra.mxu0 %v1288
  %1379 = vmatpush.bf16.msra.mxu0 %v1287
  %1380 = vmatpush.bf16.msra.mxu0 %v1286
  %1381 = vmatpush.bf16.msra.mxu0 %v1285
  %1382 = vmatpush.bf16.msra.mxu0 %v1284
  %1383 = vmatpush.bf16.msra.mxu0 %v1283
  %1384 = vmatpush.bf16.msra.mxu0 %v1282
  %1385 = vmatpush.bf16.msra.mxu0 %v1281
  %1386 = vmatmul.bf16.gmra.mxu0 %v1056
  %v1387 = vpop.f32.mrf.mxu0
  %v1388 = vadd.f32 %v1369, %v1387
  %v1389 = vpop.f32.mrf.mxu0
  %v1390 = vadd.f32 %v1371, %v1389
  %1391 = vmatmul.bf16.gmra.mxu0 %v1060
  %v1392 = vpop.f32.mrf.mxu0
  %v1393 = vadd.f32 %v1374, %v1392
  %v1394 = vpop.f32.mrf.mxu0
  %v1395 = vadd.f32 %v1376, %v1394
  %1396 = vdwg.mxu0
  %v1397 = vadd.f32 %v26, %v1388
  %v1398 = vadd.f32 %v27, %v1390
  %v1399 = vadd.f32 %v28, %v1393
  %v1400 = vadd.f32 %v29, %v1395
  %1401 = vst [vmem:[%s7] sm:$0xff] %v1397
  %1402 = vst [vmem:[%s7 + $0x8] sm:$0xff] %v1398
  %1403 = vst [vmem:[%s7 + $0x10] sm:$0xff] %v1399
  %1404 = vst [vmem:[%s7 + $0x18] sm:$0xff] %v1400
  // Predicated region
  $region30: #{linformer_transformer_forward.12} parent=0 // pred_check
    _
  $region31: #{linformer_transformer_forward.12} parent=0 // pred_check_branch
    %1406 = sbr.rel (0) target = $region33
  $region32: #{linformer_transformer_forward.12} parent=0 // pred_region
    _
  $region33: #{linformer_transformer_forward.12} parent=0 // pred_fallthru
    _
  // Predicated region
  $region34: #{linformer_transformer_forward.12} parent=0 // pred_check
    _
  $region35: #{linformer_transformer_forward.12} parent=0 // pred_check_branch
    %1408 = sbr.rel (0) target = $region37
  $region36: #{linformer_transformer_forward.12} parent=0 // pred_region
    _
  $region37: #{linformer_transformer_forward.12} parent=0 // pred_fallthru
    _

// kernel: linformer_transformer_forward.11
$region0: #{linformer_transformer_forward.11}
  #allocation0 [shape = 'u32[]', space=smem, size = 0x4, offset = 0x4, fixed_abs, tag = 'smem constant byte address 0x4 - core index']
  #allocation1 [shape = 'u32[72,128]{1,0:T(1,128)}', space=vmem, size = 0x9000, scoped, tag = 'internal scratch']
  %s0 = inlined_call_operand.vmem [shape: f32[2,16,128], index: 0, kind: input, shape index: {}]
  %s1 = inlined_call_operand.vmem [shape: f32[1,128], index: 1, kind: input, shape index: {}]
  %s2 = inlined_call_operand.vmem [shape: f32[1,128], index: 2, kind: input, shape index: {}]
  %s3 = inlined_call_operand.vmem [shape: bf16[128,128], index: 3, kind: input, shape index: {}]
  %s4 = inlined_call_operand.vmem [shape: bf16[128,256], index: 4, kind: input, shape index: {}]
  %s5 = inlined_call_operand.vmem [shape: bf16[16,512], index: 5, kind: input, shape index: {}]
  %s6 = inlined_call_operand.vmem [shape: bf16[128,128], index: 6, kind: input, shape index: {}]
  %s7 = inlined_call_operand.vmem [shape: f32[1,128], index: 7, kind: input, shape index: {}]
  %s8 = inlined_call_operand.vmem [shape: f32[2,16,128], index: 8, kind: output, shape index: {}]
  %s9 = sld [smem:[#allocation0]]
  $region65: #{linformer_transformer_forward.11} parent=0
    _
  %s11 = ssub.s32 1, %s9
  %s12 = scalar_select 0, %s11, %s9
  loop: start=0, step=1, limit=4
  $region2: #{linformer_transformer_forward.11} parent=0 // loop_pre_header
    _
  $region3: #{linformer_transformer_forward.11} parent=0 // loop_header
    %s14 = sphi 0, %s18
    %p15 = scmp.ge.s32.totalorder %s14, 4
    %s24 = sphi 0, %s26
    %s27 = sphi 0, %s24
    %s28 = sphi 0, %s27
    %s44 = sphi 0, %s28
    %s48 = sphi 0, %s48
    %s50 = sphi 0, %s48
    %s51 = sphi 0, %s50
    %s65 = sphi 0, %s51
    %s69 = sphi 0, %s69
    %s71 = sphi 0, %s69
    %s72 = sphi 0, %s71
    %s86 = sphi 0, %s72
    %s90 = sphi 0, %s90
    %s92 = sphi 0, %s90
    %s93 = sphi 0, %s92
    %s107 = sphi 0, %s93
    %s111 = sphi 0, %s111
    %s113 = sphi 0, %s111
    %s114 = sphi 0, %s113
    %s128 = sphi 0, %s114
    %s132 = sphi 0, %s132
    %s134 = sphi 0, %s132
    %s135 = sphi 0, %s134
    %s149 = sphi 0, %s135
    %s153 = sphi 0, %s153
    %s155 = sphi 0, %s153
    %s156 = sphi 0, %s155
    %s170 = sphi 0, %s156
    %s174 = sphi 0, %s174
    %s176 = sphi 0, %s174
    %s177 = sphi 0, %s176
    %s191 = sphi 0, %s177
    %s197 = sphi 0, %s199
    %s200 = sphi 0, %s197
    %s201 = sphi 0, %s200
    %s217 = sphi 0, %s201
  $region4: #{linformer_transformer_forward.11} parent=0 // loop_header_branch
    %17 = sbr.rel (%p15) target = $region8
  $region5: #{linformer_transformer_forward.11} parent=0 // loop_body
    %s19 = ssub.s32 %s14, 1
    %s20 = ssub.s32 %s14, 2
    %s21 = sadd.s32 %s14, 1
    %s22 = ssub.s32 %s14, %s21
    %p23 = scmp.eq.s32.totalorder %s22, 0
    %s25 = sadd.s32 %s24, 1
    %s26 = scalar_select %p23, %s24, %s25
    %p29 = pneg %p23
    %p30 = scmp.eq.s32.totalorder %s14, 1
    %p31 = por %p29, %p30
    %p32 = scmp.ne.s32.totalorder %s24, %s27
    %p33 = scmp.eq.s32.totalorder %s14, 0
    %p34 = por %p32, %p33
    %p35 = scmp.ne.s32.totalorder %s24, %s27
    %p36 = scmp.eq.s32.totalorder %s19, 1
    %p37 = por %p35, %p36
    %p38 = scmp.ne.s32.totalorder %s27, %s28
    %p39 = scmp.eq.s32.totalorder %s19, 0
    %p40 = por %p38, %p39
    %p41 = scmp.ne.s32.totalorder %s27, %s28
    %p42 = scmp.eq.s32.totalorder %s20, 1
    %p43 = por %p41, %p42
    %p45 = scmp.ne.s32.totalorder %s28, %s44
    %p46 = scmp.eq.s32.totalorder %s20, 0
    %p47 = por %p45, %p46
    %s49 = sadd.s32 %s48, 1
    %p52 = scmp.eq.s32.totalorder %s14, 1
    %p53 = scmp.ne.s32.totalorder %s48, %s50
    %p54 = scmp.eq.s32.totalorder %s14, 0
    %p55 = por %p53, %p54
    %p56 = scmp.ne.s32.totalorder %s48, %s50
    %p57 = scmp.eq.s32.totalorder %s19, 1
    %p58 = por %p56, %p57
    %p59 = scmp.ne.s32.totalorder %s50, %s51
    %p60 = scmp.eq.s32.totalorder %s19, 0
    %p61 = por %p59, %p60
    %p62 = scmp.ne.s32.totalorder %s50, %s51
    %p63 = scmp.eq.s32.totalorder %s20, 1
    %p64 = por %p62, %p63
    %p66 = scmp.ne.s32.totalorder %s51, %s65
    %p67 = scmp.eq.s32.totalorder %s20, 0
    %p68 = por %p66, %p67
    %s70 = sadd.s32 %s69, 1
    %p73 = scmp.eq.s32.totalorder %s14, 1
    %p74 = scmp.ne.s32.totalorder %s69, %s71
    %p75 = scmp.eq.s32.totalorder %s14, 0
    %p76 = por %p74, %p75
    %p77 = scmp.ne.s32.totalorder %s69, %s71
    %p78 = scmp.eq.s32.totalorder %s19, 1
    %p79 = por %p77, %p78
    %p80 = scmp.ne.s32.totalorder %s71, %s72
    %p81 = scmp.eq.s32.totalorder %s19, 0
    %p82 = por %p80, %p81
    %p83 = scmp.ne.s32.totalorder %s71, %s72
    %p84 = scmp.eq.s32.totalorder %s20, 1
    %p85 = por %p83, %p84
    %p87 = scmp.ne.s32.totalorder %s72, %s86
    %p88 = scmp.eq.s32.totalorder %s20, 0
    %p89 = por %p87, %p88
    %s91 = sadd.s32 %s90, 1
    %p94 = scmp.eq.s32.totalorder %s14, 1
    %p95 = scmp.ne.s32.totalorder %s90, %s92
    %p96 = scmp.eq.s32.totalorder %s14, 0
    %p97 = por %p95, %p96
    %p98 = scmp.ne.s32.totalorder %s90, %s92
    %p99 = scmp.eq.s32.totalorder %s19, 1
    %p100 = por %p98, %p99
    %p101 = scmp.ne.s32.totalorder %s92, %s93
    %p102 = scmp.eq.s32.totalorder %s19, 0
    %p103 = por %p101, %p102
    %p104 = scmp.ne.s32.totalorder %s92, %s93
    %p105 = scmp.eq.s32.totalorder %s20, 1
    %p106 = por %p104, %p105
    %p108 = scmp.ne.s32.totalorder %s93, %s107
    %p109 = scmp.eq.s32.totalorder %s20, 0
    %p110 = por %p108, %p109
    %s112 = sadd.s32 %s111, 1
    %p115 = scmp.eq.s32.totalorder %s14, 1
    %p116 = scmp.ne.s32.totalorder %s111, %s113
    %p117 = scmp.eq.s32.totalorder %s14, 0
    %p118 = por %p116, %p117
    %p119 = scmp.ne.s32.totalorder %s111, %s113
    %p120 = scmp.eq.s32.totalorder %s19, 1
    %p121 = por %p119, %p120
    %p122 = scmp.ne.s32.totalorder %s113, %s114
    %p123 = scmp.eq.s32.totalorder %s19, 0
    %p124 = por %p122, %p123
    %p125 = scmp.ne.s32.totalorder %s113, %s114
    %p126 = scmp.eq.s32.totalorder %s20, 1
    %p127 = por %p125, %p126
    %p129 = scmp.ne.s32.totalorder %s114, %s128
    %p130 = scmp.eq.s32.totalorder %s20, 0
    %p131 = por %p129, %p130
    %s133 = sadd.s32 %s132, 1
    %p136 = scmp.eq.s32.totalorder %s14, 1
    %p137 = scmp.ne.s32.totalorder %s132, %s134
    %p138 = scmp.eq.s32.totalorder %s14, 0
    %p139 = por %p137, %p138
    %p140 = scmp.ne.s32.totalorder %s132, %s134
    %p141 = scmp.eq.s32.totalorder %s19, 1
    %p142 = por %p140, %p141
    %p143 = scmp.ne.s32.totalorder %s134, %s135
    %p144 = scmp.eq.s32.totalorder %s19, 0
    %p145 = por %p143, %p144
    %p146 = scmp.ne.s32.totalorder %s134, %s135
    %p147 = scmp.eq.s32.totalorder %s20, 1
    %p148 = por %p146, %p147
    %p150 = scmp.ne.s32.totalorder %s135, %s149
    %p151 = scmp.eq.s32.totalorder %s20, 0
    %p152 = por %p150, %p151
    %s154 = sadd.s32 %s153, 1
    %p157 = scmp.eq.s32.totalorder %s14, 1
    %p158 = scmp.ne.s32.totalorder %s153, %s155
    %p159 = scmp.eq.s32.totalorder %s14, 0
    %p160 = por %p158, %p159
    %p161 = scmp.ne.s32.totalorder %s153, %s155
    %p162 = scmp.eq.s32.totalorder %s19, 1
    %p163 = por %p161, %p162
    %p164 = scmp.ne.s32.totalorder %s155, %s156
    %p165 = scmp.eq.s32.totalorder %s19, 0
    %p166 = por %p164, %p165
    %p167 = scmp.ne.s32.totalorder %s155, %s156
    %p168 = scmp.eq.s32.totalorder %s20, 1
    %p169 = por %p167, %p168
    %p171 = scmp.ne.s32.totalorder %s156, %s170
    %p172 = scmp.eq.s32.totalorder %s20, 0
    %p173 = por %p171, %p172
    %s175 = sadd.s32 %s174, 1
    %p178 = scmp.eq.s32.totalorder %s14, 1
    %p179 = scmp.ne.s32.totalorder %s174, %s176
    %p180 = scmp.eq.s32.totalorder %s14, 0
    %p181 = por %p179, %p180
    %p182 = scmp.ne.s32.totalorder %s174, %s176
    %p183 = scmp.eq.s32.totalorder %s19, 1
    %p184 = por %p182, %p183
    %p185 = scmp.ne.s32.totalorder %s176, %s177
    %p186 = scmp.eq.s32.totalorder %s19, 0
    %p187 = por %p185, %p186
    %p188 = scmp.ne.s32.totalorder %s176, %s177
    %p189 = scmp.eq.s32.totalorder %s20, 1
    %p190 = por %p188, %p189
    %p192 = scmp.ne.s32.totalorder %s177, %s191
    %p193 = scmp.eq.s32.totalorder %s20, 0
    %p194 = por %p192, %p193
    %s195 = ssub.s32 %s14, %s21
    %p196 = scmp.eq.s32.totalorder %s195, 0
    %s198 = sadd.s32 %s197, 1
    %s199 = scalar_select %p196, %s197, %s198
    %p202 = pneg %p196
    %p203 = scmp.eq.s32.totalorder %s14, 1
    %p204 = por %p202, %p203
    %p205 = scmp.ne.s32.totalorder %s197, %s200
    %p206 = scmp.eq.s32.totalorder %s14, 0
    %p207 = por %p205, %p206
    %p208 = scmp.ne.s32.totalorder %s197, %s200
    %p209 = scmp.eq.s32.totalorder %s19, 1
    %p210 = por %p208, %p209
    %p211 = scmp.ne.s32.totalorder %s200, %s201
    %p212 = scmp.eq.s32.totalorder %s19, 0
    %p213 = por %p211, %p212
    %p214 = scmp.ne.s32.totalorder %s200, %s201
    %p215 = scmp.eq.s32.totalorder %s20, 1
    %p216 = por %p214, %p215
    %p218 = scmp.ne.s32.totalorder %s201, %s217
    %p219 = scmp.eq.s32.totalorder %s20, 0
    %p220 = por %p218, %p219
    %p221 = scmp.le.s32.totalorder 1, %s14
    %p222 = scmp.lt.s32.totalorder %s14, 3
    %p223 = pnand %p221, %p222
    %p224 = pneg %p223
    // Predicated region
    $region9: #{linformer_transformer_forward.11} parent=5 // pred_check
      _
    $region10: #{linformer_transformer_forward.11} parent=5 // pred_check_branch
      %226 = sbr.rel (%p223) target = $region12
    $region11: #{linformer_transformer_forward.11} parent=5 // pred_region
      %s227 = ssub.s32 %s14, 1
      // Predicated region
      $region13: #{linformer_transformer_forward.11} parent=11 // pred_check
        %p228 = pneg %p61
      $region14: #{linformer_transformer_forward.11} parent=11 // pred_check_branch
        %230 = sbr.rel (%p228) target = $region16
      $region15: #{linformer_transformer_forward.11} parent=11 // pred_region
        _
      $region16: #{linformer_transformer_forward.11} parent=11 // pred_fallthru
        _
      // Predicated region
      $region17: #{linformer_transformer_forward.11} parent=11 // pred_check
        %p231 = pneg %p82
      $region18: #{linformer_transformer_forward.11} parent=11 // pred_check_branch
        %233 = sbr.rel (%p231) target = $region20
      $region19: #{linformer_transformer_forward.11} parent=11 // pred_region
        _
      $region20: #{linformer_transformer_forward.11} parent=11 // pred_fallthru
        _
      // Predicated region
      $region21: #{linformer_transformer_forward.11} parent=11 // pred_check
        %p234 = pneg %p103
      $region22: #{linformer_transformer_forward.11} parent=11 // pred_check_branch
        %236 = sbr.rel (%p234) target = $region24
      $region23: #{linformer_transformer_forward.11} parent=11 // pred_region
        _
      $region24: #{linformer_transformer_forward.11} parent=11 // pred_fallthru
        _
      // Predicated region
      $region25: #{linformer_transformer_forward.11} parent=11 // pred_check
        %p237 = pneg %p124
      $region26: #{linformer_transformer_forward.11} parent=11 // pred_check_branch
        %239 = sbr.rel (%p237) target = $region28
      $region27: #{linformer_transformer_forward.11} parent=11 // pred_region
        _
      $region28: #{linformer_transformer_forward.11} parent=11 // pred_fallthru
        _
      // Predicated region
      $region29: #{linformer_transformer_forward.11} parent=11 // pred_check
        %p240 = pneg %p145
      $region30: #{linformer_transformer_forward.11} parent=11 // pred_check_branch
        %242 = sbr.rel (%p240) target = $region32
      $region31: #{linformer_transformer_forward.11} parent=11 // pred_region
        _
      $region32: #{linformer_transformer_forward.11} parent=11 // pred_fallthru
        _
      // Predicated region
      $region33: #{linformer_transformer_forward.11} parent=11 // pred_check
        %p243 = pneg %p166
      $region34: #{linformer_transformer_forward.11} parent=11 // pred_check_branch
        %245 = sbr.rel (%p243) target = $region36
      $region35: #{linformer_transformer_forward.11} parent=11 // pred_region
        _
      $region36: #{linformer_transformer_forward.11} parent=11 // pred_fallthru
        _
      // Predicated region
      $region37: #{linformer_transformer_forward.11} parent=11 // pred_check
        %p246 = pneg %p187
      $region38: #{linformer_transformer_forward.11} parent=11 // pred_check_branch
        %248 = sbr.rel (%p246) target = $region40
      $region39: #{linformer_transformer_forward.11} parent=11 // pred_region
        _
      $region40: #{linformer_transformer_forward.11} parent=11 // pred_fallthru
        _
    $region12: #{linformer_transformer_forward.11} parent=5 // pred_fallthru
      _
    %p249 = scmp.lt.s32.totalorder %s14, 2
    // Predicated region
    $region41: #{linformer_transformer_forward.11} parent=5 // pred_check
      %p250 = pneg %p249
    $region42: #{linformer_transformer_forward.11} parent=5 // pred_check_branch
      %252 = sbr.rel (%p250) target = $region44
    $region43: #{linformer_transformer_forward.11} parent=5 // pred_region
      // Predicated region
      $region45: #{linformer_transformer_forward.11} parent=43 // pred_check
        %p253 = pneg %p34
      $region46: #{linformer_transformer_forward.11} parent=43 // pred_check_branch
        %255 = sbr.rel (%p253) target = $region48
      $region47: #{linformer_transformer_forward.11} parent=43 // pred_region
        %p256 = scmp.lt.s32.totalorder %s14, 1
        %s257 = scalar_select %p256, %s14, 1
        %s258 = smul.addr %s257, 2
        %s259 = smul.addr %s258, 8
        %s260 = scalar_lea.vmem %s0, %s259
      $region48: #{linformer_transformer_forward.11} parent=43 // pred_fallthru
        _
    $region44: #{linformer_transformer_forward.11} parent=5 // pred_fallthru
      _
    %p261 = scmp.le.s32.totalorder 1, %s14
    %p262 = scmp.lt.s32.totalorder %s14, 3
    %p263 = pnand %p261, %p262
    %p264 = pneg %p263
    // Predicated region
    $region49: #{linformer_transformer_forward.11} parent=5 // pred_check
      _
    $region50: #{linformer_transformer_forward.11} parent=5 // pred_check_branch
      %266 = sbr.rel (%p263) target = $region52
    $region51: #{linformer_transformer_forward.11} parent=5 // pred_region
      %s267 = ssub.s32 %s14, 1
      %p268 = scmp.lt.s32.totalorder %s19, 1
      %s269 = scalar_select %p268, %s19, 1
      %s270 = smul.addr %s269, 2
      %s271 = smul.addr %s270, 8
      %s272 = scalar_lea.vmem %s0, %s271
      %p273 = pneg %p40
      %p274 = pneg %p37
      %p275 = pneg %p61
      %p276 = pneg %p58
      %p277 = pneg %p82
      %p278 = pneg %p79
      %p279 = pneg %p103
      %p280 = pneg %p100
      %p281 = pneg %p124
      %p282 = pneg %p121
      %p283 = pneg %p145
      %p284 = pneg %p142
      %p285 = pneg %p166
      %p286 = pneg %p163
      %p287 = pneg %p187
      %p288 = pneg %p184
      %p289 = pneg %p213
      %p290 = pneg %p210
      %p291 = scmp.lt.s32.totalorder %s19, 1
      %s292 = scalar_select %p291, %s19, 1
      %s293 = smul.addr %s292, 2
      %s294 = smul.addr %s293, 8
      %s295 = scalar_lea.vmem %s8, %s294
      %p296 = scmp.lt.s32.totalorder %s19, 1
      %s297 = scalar_select %p296, %s19, 1
      %s298 = smul.addr %s297, 2
      %s299 = smul.addr %s298, 8
      %s300 = scalar_lea.vmem %s0, %s299
      %p301 = scmp.lt.s32.totalorder %s19, 1
      %s302 = scalar_select %p301, %s19, 1
      %s303 = smul.addr %s302, 2
      %s304 = smul.addr %s303, 8
      %s305 = scalar_lea.vmem %s8, %s304
      %v307 = vld [vmem:[%s300] sm:$0xff]
      %v308 = vld [vmem:[%s300 + $0x8] sm:$0xff]
      %309 = vadd.xlane.f32.xlu0 %v307
      %v310 = vpop.xlane.xlu0 %309
      %311 = vadd.xlane.f32.xlu0 %v308
      %v312 = vpop.xlane.xlu0 %311
      %v313 = vrcp.pop 128.0
      %v314 = vmul.f32 128.0, %v313
      %v315 = vsub.f32 1.0, %v314
      %v316 = vmul.f32 %v313, %v315
      %v317 = vadd.f32 %v313, %v316
      %vm318 = vweird.f32 %v313
      %v319 = vsel %vm318, %v313, %v317
      %v320 = vmul.f32 %v310, %v319
      %v321 = vmul.f32 %v312, %v319
      %v322 = vsub.f32 %v307, %v320
      %v323 = vsub.f32 %v308, %v321
      %v324 = vmul.f32 %v322, %v322
      %v325 = vmul.f32 %v323, %v323
      %326 = vadd.xlane.f32.xlu0 %v324
      %v327 = vpop.xlane.xlu0 %326
      %328 = vadd.xlane.f32.xlu0 %v325
      %v329 = vpop.xlane.xlu0 %328
      %v330 = vmul.f32 %v327, %v319
      %v331 = vmul.f32 %v329, %v319
      %v332 = vadd.f32 %v330, 1e-05
      %v333 = vadd.f32 %v331, 1e-05
      %v334 = vrsqrt.pop %v332
      %v335 = vmul.f32 %v334, %v332
      %v336 = vmul.f32 %v335, %v334
      %v337 = vmul.f32 0.5, %v336
      %v338 = vsub.f32 1.5, %v337
      %v339 = vmul.f32 %v334, %v338
      %vm340 = vweird.f32 %v332
      %vm341 = vweird.f32 %v334
      %vm342 = vmor %vm340, %vm341
      %v343 = vsel %vm342, %v334, %v339
      %v344 = vrsqrt.pop %v333
      %v345 = vmul.f32 %v344, %v333
      %v346 = vmul.f32 %v345, %v344
      %v347 = vmul.f32 0.5, %v346
      %v348 = vsub.f32 1.5, %v347
      %v349 = vmul.f32 %v344, %v348
      %vm350 = vweird.f32 %v333
      %vm351 = vweird.f32 %v344
      %vm352 = vmor %vm350, %vm351
      %v353 = vsel %vm352, %v344, %v349
      %v354 = vmul.f32 %v322, %v343
      %v355 = vmul.f32 %v323, %v353
      %v356 = vld [vmem:[%s1] sm:$0x1]
      %v358 = vperm.slane %v356, 0
      %v360 = vmul.f32 %v354, %v358
      %v361 = vmul.f32 %v355, %v358
      %v362 = vld [vmem:[%s2] sm:$0x1]
      %v364 = vperm.slane %v362, 0
      %v366 = vadd.f32 %v360, %v364
      %v367 = vadd.f32 %v361, %v364
      %v368 = vpack.c.bf16 %v367, %v366
      %v369 = vld [vmem:[%s3] sm:$0xf]
      %v370 = vld [vmem:[%s3 + $0x4] sm:$0xf]
      %v371 = vld [vmem:[%s3 + $0x8] sm:$0xf]
      %v372 = vld [vmem:[%s3 + $0xc] sm:$0xf]
      %v373 = vld [vmem:[%s3 + $0x10] sm:$0xf]
      %v374 = vld [vmem:[%s3 + $0x14] sm:$0xf]
      %v375 = vld [vmem:[%s3 + $0x18] sm:$0xf]
      %v376 = vld [vmem:[%s3 + $0x1c] sm:$0xf]
      %v377 = vld [vmem:[%s3 + $0x20] sm:$0xf]
      %v378 = vld [vmem:[%s3 + $0x24] sm:$0xf]
      %v379 = vld [vmem:[%s3 + $0x28] sm:$0xf]
      %v380 = vld [vmem:[%s3 + $0x2c] sm:$0xf]
      %v381 = vld [vmem:[%s3 + $0x30] sm:$0xf]
      %v382 = vld [vmem:[%s3 + $0x34] sm:$0xf]
      %v383 = vld [vmem:[%s3 + $0x38] sm:$0xf]
      %v384 = vld [vmem:[%s3 + $0x3c] sm:$0xf]
      %v401 = vunpack.c.l.b16 %v369
      %v402 = vunpack.c.l.b16 %v370
      %v403 = vunpack.c.l.b16 %v371
      %v404 = vunpack.c.l.b16 %v372
      %v405 = vunpack.c.l.b16 %v373
      %v406 = vunpack.c.l.b16 %v374
      %v407 = vunpack.c.l.b16 %v375
      %v408 = vunpack.c.l.b16 %v376
      %v409 = vunpack.c.l.b16 %v377
      %v410 = vunpack.c.l.b16 %v378
      %v411 = vunpack.c.l.b16 %v379
      %v412 = vunpack.c.l.b16 %v380
      %v413 = vunpack.c.l.b16 %v381
      %v414 = vunpack.c.l.b16 %v382
      %v415 = vunpack.c.l.b16 %v383
      %v416 = vunpack.c.l.b16 %v384
      %v417 = vpack.c.b16 %v402, %v401
      %v418 = vpack.c.b16 %v404, %v403
      %v419 = vpack.c.b16 %v406, %v405
      %v420 = vpack.c.b16 %v408, %v407
      %v421 = vpack.c.b16 %v410, %v409
      %v422 = vpack.c.b16 %v412, %v411
      %v423 = vpack.c.b16 %v414, %v413
      %v424 = vpack.c.b16 %v416, %v415
      %433 = vmatpush.bf16.msra.mxu0 %v424
      %434 = vmatpush.bf16.msra.mxu0 %v423
      %435 = vmatpush.bf16.msra.mxu0 %v422
      %436 = vmatpush.bf16.msra.mxu0 %v421
      %437 = vmatpush.bf16.msra.mxu0 %v420
      %438 = vmatpush.bf16.msra.mxu0 %v419
      %439 = vmatpush.bf16.msra.mxu0 %v418
      %440 = vmatpush.bf16.msra.mxu0 %v417
      %441 = vmatmul.bf16.gmra.mxu0 %v368
      %v442 = vpop.f32.mrf.mxu0
      %v443 = vadd.f32 0.0, %v442
      %v444 = vpop.f32.mrf.mxu0
      %v445 = vadd.f32 0.0, %v444
      %446 = vdwg.mxu0
      %v447 = vld [vmem:[%s4] sm:$0xff]
      %v448 = vld [vmem:[%s4 + $0x8] sm:$0xff]
      %v449 = vld [vmem:[%s4 + $0x10] sm:$0xff]
      %v450 = vld [vmem:[%s4 + $0x18] sm:$0xff]
      %v451 = vld [vmem:[%s4 + $0x20] sm:$0xff]
      %v452 = vld [vmem:[%s4 + $0x28] sm:$0xff]
      %v453 = vld [vmem:[%s4 + $0x30] sm:$0xff]
      %v454 = vld [vmem:[%s4 + $0x38] sm:$0xff]
      %v455 = vld [vmem:[%s4 + $0x40] sm:$0xff]
      %v456 = vld [vmem:[%s4 + $0x48] sm:$0xff]
      %v457 = vld [vmem:[%s4 + $0x50] sm:$0xff]
      %v458 = vld [vmem:[%s4 + $0x58] sm:$0xff]
      %v459 = vld [vmem:[%s4 + $0x60] sm:$0xff]
      %v460 = vld [vmem:[%s4 + $0x68] sm:$0xff]
      %v461 = vld [vmem:[%s4 + $0x70] sm:$0xff]
      %v462 = vld [vmem:[%s4 + $0x78] sm:$0xff]
      %v479 = vunpack.c.l.b16 %v447
      %v480 = vunpack.c.h.b16 %v447
      %v481 = vunpack.c.l.b16 %v448
      %v482 = vunpack.c.h.b16 %v448
      %v483 = vunpack.c.l.b16 %v449
      %v484 = vunpack.c.h.b16 %v449
      %v485 = vunpack.c.l.b16 %v450
      %v486 = vunpack.c.h.b16 %v450
      %v487 = vunpack.c.l.b16 %v451
      %v488 = vunpack.c.h.b16 %v451
      %v489 = vunpack.c.l.b16 %v452
      %v490 = vunpack.c.h.b16 %v452
      %v491 = vunpack.c.l.b16 %v453
      %v492 = vunpack.c.h.b16 %v453
      %v493 = vunpack.c.l.b16 %v454
      %v494 = vunpack.c.h.b16 %v454
      %v495 = vunpack.c.l.b16 %v455
      %v496 = vunpack.c.h.b16 %v455
      %v497 = vunpack.c.l.b16 %v456
      %v498 = vunpack.c.h.b16 %v456
      %v499 = vunpack.c.l.b16 %v457
      %v500 = vunpack.c.h.b16 %v457
      %v501 = vunpack.c.l.b16 %v458
      %v502 = vunpack.c.h.b16 %v458
      %v503 = vunpack.c.l.b16 %v459
      %v504 = vunpack.c.h.b16 %v459
      %v505 = vunpack.c.l.b16 %v460
      %v506 = vunpack.c.h.b16 %v460
      %v507 = vunpack.c.l.b16 %v461
      %v508 = vunpack.c.h.b16 %v461
      %v509 = vunpack.c.l.b16 %v462
      %v510 = vunpack.c.h.b16 %v462
      %v511 = vpack.c.b16 %v481, %v479
      %v512 = vpack.c.b16 %v482, %v480
      %v513 = vpack.c.b16 %v485, %v483
      %v514 = vpack.c.b16 %v486, %v484
      %v515 = vpack.c.b16 %v489, %v487
      %v516 = vpack.c.b16 %v490, %v488
      %v517 = vpack.c.b16 %v493, %v491
      %v518 = vpack.c.b16 %v494, %v492
      %v519 = vpack.c.b16 %v497, %v495
      %v520 = vpack.c.b16 %v498, %v496
      %v521 = vpack.c.b16 %v501, %v499
      %v522 = vpack.c.b16 %v502, %v500
      %v523 = vpack.c.b16 %v505, %v503
      %v524 = vpack.c.b16 %v506, %v504
      %v525 = vpack.c.b16 %v509, %v507
      %v526 = vpack.c.b16 %v510, %v508
      %543 = vmatpush.bf16.msra.mxu0 %v525
      %544 = vmatpush.bf16.msra.mxu0 %v523
      %545 = vmatpush.bf16.msra.mxu0 %v521
      %546 = vmatpush.bf16.msra.mxu0 %v519
      %547 = vmatpush.bf16.msra.mxu0 %v517
      %548 = vmatpush.bf16.msra.mxu0 %v515
      %549 = vmatpush.bf16.msra.mxu0 %v513
      %550 = vmatpush.bf16.msra.mxu0 %v511
      %551 = vmatmul.bf16.gmra.mxu0 %v368
      %v552 = vpop.f32.mrf.mxu0
      %v553 = vadd.f32 0.0, %v552
      %v554 = vpop.f32.mrf.mxu0
      %v555 = vadd.f32 0.0, %v554
      %556 = vdwg.mxu0
      %557 = vmatpush.bf16.msra.mxu0 %v526
      %558 = vmatpush.bf16.msra.mxu0 %v524
      %559 = vmatpush.bf16.msra.mxu0 %v522
      %560 = vmatpush.bf16.msra.mxu0 %v520
      %561 = vmatpush.bf16.msra.mxu0 %v518
      %562 = vmatpush.bf16.msra.mxu0 %v516
      %563 = vmatpush.bf16.msra.mxu0 %v514
      %564 = vmatpush.bf16.msra.mxu0 %v512
      %565 = vmatmul.bf16.gmra.mxu0 %v368
      %v566 = vpop.f32.mrf.mxu0
      %v567 = vadd.f32 0.0, %v566
      %v568 = vpop.f32.mrf.mxu0
      %v569 = vadd.f32 0.0, %v568
      %570 = vdwg.mxu0
      %v571 = vpack.c.bf16 %v567, %v553
      %v572 = vpack.c.bf16 %v569, %v555
      %v573 = vld [vmem:[%s5] sm:$0xff]
      %v574 = vld [vmem:[%s5 + $0x8] sm:$0xff]
      %v575 = vld [vmem:[%s5 + $0x10] sm:$0xff]
      %v576 = vld [vmem:[%s5 + $0x18] sm:$0xff]
      %v579 = vunpack.c.l.b16 %v573
      %v580 = vunpack.c.h.b16 %v573
      %v581 = vunpack.c.l.b16 %v575
      %v582 = vunpack.c.h.b16 %v575
      %v583 = vpack.c.b16 %v581, %v579
      %v584 = vpack.c.b16 %v582, %v580
      %587 = vxpose.binary.xlu0.c.b16.start [1/16] %v584, %v583, 128
      %588 = vxpose.binary.xlu0.c.b16.cont [2/16] 0, 0, 128
      %589 = vxpose.binary.xlu0.c.b16.cont [3/16] 0, 0, 128
      %590 = vxpose.binary.xlu0.c.b16.cont [4/16] 0, 0, 128
      %591 = vxpose.binary.xlu0.c.b16.cont [5/16] 0, 0, 128
      %592 = vxpose.binary.xlu0.c.b16.cont [6/16] 0, 0, 128
      %593 = vxpose.binary.xlu0.c.b16.cont [7/16] 0, 0, 128
      %594 = vxpose.binary.xlu0.c.b16.end [8/16] 0, 0, 128
      %v595 = vpop.trf.xlu0
      %v596 = vpop.trf.xlu0
      %v597 = vpop.trf.xlu0
      %v598 = vpop.trf.xlu0
      %v599 = vpop.trf.xlu0
      %v600 = vpop.trf.xlu0
      %v601 = vpop.trf.xlu0
      %v602 = vpop.trf.xlu0
      %v603 = vpop.trf.xlu0
      %v604 = vpop.trf.xlu0
      %v605 = vpop.trf.xlu0
      %v606 = vpop.trf.xlu0
      %v607 = vpop.trf.xlu0
      %v608 = vpop.trf.xlu0
      %v609 = vpop.trf.xlu0
      %v610 = vpop.trf.xlu0
      %v613 = vunpack.c.l.b16 %v571
      %v614 = vunpack.c.l.b16 %v572
      %v615 = vpack.c.b16 %v614, %v613
      %vm617 = vcmask 130048
      %v619 = vsel %vm617, %v595, 0
      %v622 = vsel %vm617, %v597, 0
      %v625 = vsel %vm617, %v599, 0
      %v628 = vsel %vm617, %v601, 0
      %v631 = vsel %vm617, %v603, 0
      %v634 = vsel %vm617, %v605, 0
      %v637 = vsel %vm617, %v607, 0
      %v640 = vsel %vm617, %v609, 0
      %v643 = vsel %vm617, %v596, 0
      %v646 = vsel %vm617, %v598, 0
      %v649 = vsel %vm617, %v600, 0
      %v652 = vsel %vm617, %v602, 0
      %v655 = vsel %vm617, %v604, 0
      %v658 = vsel %vm617, %v606, 0
      %v661 = vsel %vm617, %v608, 0
      %v664 = vsel %vm617, %v610, 0
      %666 = vmatpush.bf16.msra.mxu0 0
      %667 = vmatpush.bf16.msra.mxu0 0
      %668 = vmatpush.bf16.msra.mxu0 0
      %669 = vmatpush.bf16.msra.mxu0 0
      %670 = vmatpush.bf16.msra.mxu0 0
      %671 = vmatpush.bf16.msra.mxu0 0
      %672 = vmatpush.bf16.msra.mxu0 0
      %673 = vmatpush.bf16.msra.mxu0 %v615
      %674 = vmatmul.bf16.gmra.mxu0 %v619
      %v675 = vpop.f32.mrf.mxu0
      %v676 = vadd.f32 0.0, %v675
      %v677 = vpop.f32.mrf.mxu0
      %v678 = vadd.f32 0.0, %v677
      %679 = vmatmul.bf16.gmra.mxu0 %v622
      %v680 = vpop.f32.mrf.mxu0
      %v681 = vadd.f32 0.0, %v680
      %v682 = vpop.f32.mrf.mxu0
      %v683 = vadd.f32 0.0, %v682
      %684 = vmatmul.bf16.gmra.mxu0 %v625
      %v685 = vpop.f32.mrf.mxu0
      %v686 = vadd.f32 0.0, %v685
      %v687 = vpop.f32.mrf.mxu0
      %v688 = vadd.f32 0.0, %v687
      %689 = vmatmul.bf16.gmra.mxu0 %v628
      %v690 = vpop.f32.mrf.mxu0
      %v691 = vadd.f32 0.0, %v690
      %v692 = vpop.f32.mrf.mxu0
      %v693 = vadd.f32 0.0, %v692
      %694 = vmatmul.bf16.gmra.mxu0 %v631
      %v695 = vpop.f32.mrf.mxu0
      %v696 = vadd.f32 0.0, %v695
      %v697 = vpop.f32.mrf.mxu0
      %v698 = vadd.f32 0.0, %v697
      %699 = vmatmul.bf16.gmra.mxu0 %v634
      %v700 = vpop.f32.mrf.mxu0
      %v701 = vadd.f32 0.0, %v700
      %v702 = vpop.f32.mrf.mxu0
      %v703 = vadd.f32 0.0, %v702
      %704 = vmatmul.bf16.gmra.mxu0 %v637
      %v705 = vpop.f32.mrf.mxu0
      %v706 = vadd.f32 0.0, %v705
      %v707 = vpop.f32.mrf.mxu0
      %v708 = vadd.f32 0.0, %v707
      %709 = vmatmul.bf16.gmra.mxu0 %v640
      %v710 = vpop.f32.mrf.mxu0
      %v711 = vadd.f32 0.0, %v710
      %v712 = vpop.f32.mrf.mxu0
      %v713 = vadd.f32 0.0, %v712
      %714 = vmatmul.bf16.gmra.mxu0 %v643
      %v715 = vpop.f32.mrf.mxu0
      %v716 = vadd.f32 0.0, %v715
      %v717 = vpop.f32.mrf.mxu0
      %v718 = vadd.f32 0.0, %v717
      %719 = vmatmul.bf16.gmra.mxu0 %v646
      %v720 = vpop.f32.mrf.mxu0
      %v721 = vadd.f32 0.0, %v720
      %v722 = vpop.f32.mrf.mxu0
      %v723 = vadd.f32 0.0, %v722
      %724 = vmatmul.bf16.gmra.mxu0 %v649
      %v725 = vpop.f32.mrf.mxu0
      %v726 = vadd.f32 0.0, %v725
      %v727 = vpop.f32.mrf.mxu0
      %v728 = vadd.f32 0.0, %v727
      %729 = vmatmul.bf16.gmra.mxu0 %v652
      %v730 = vpop.f32.mrf.mxu0
      %v731 = vadd.f32 0.0, %v730
      %v732 = vpop.f32.mrf.mxu0
      %v733 = vadd.f32 0.0, %v732
      %734 = vmatmul.bf16.gmra.mxu0 %v655
      %v735 = vpop.f32.mrf.mxu0
      %v736 = vadd.f32 0.0, %v735
      %v737 = vpop.f32.mrf.mxu0
      %v738 = vadd.f32 0.0, %v737
      %739 = vmatmul.bf16.gmra.mxu0 %v658
      %v740 = vpop.f32.mrf.mxu0
      %v741 = vadd.f32 0.0, %v740
      %v742 = vpop.f32.mrf.mxu0
      %v743 = vadd.f32 0.0, %v742
      %744 = vmatmul.bf16.gmra.mxu0 %v661
      %v745 = vpop.f32.mrf.mxu0
      %v746 = vadd.f32 0.0, %v745
      %v747 = vpop.f32.mrf.mxu0
      %v748 = vadd.f32 0.0, %v747
      %749 = vmatmul.bf16.gmra.mxu0 %v664
      %v750 = vpop.f32.mrf.mxu0
      %v751 = vadd.f32 0.0, %v750
      %v752 = vpop.f32.mrf.mxu0
      %v753 = vadd.f32 0.0, %v752
      %754 = vdwg.mxu0
      %v757 = vunpack.c.l.b16 %v574
      %v758 = vunpack.c.h.b16 %v574
      %v759 = vunpack.c.l.b16 %v576
      %v760 = vunpack.c.h.b16 %v576
      %v761 = vpack.c.b16 %v759, %v757
      %v762 = vpack.c.b16 %v760, %v758
      %765 = vxpose.binary.xlu0.c.b16.start [1/16] %v762, %v761, 128
      %766 = vxpose.binary.xlu0.c.b16.cont [2/16] 0, 0, 128
      %767 = vxpose.binary.xlu0.c.b16.cont [3/16] 0, 0, 128
      %768 = vxpose.binary.xlu0.c.b16.cont [4/16] 0, 0, 128
      %769 = vxpose.binary.xlu0.c.b16.cont [5/16] 0, 0, 128
      %770 = vxpose.binary.xlu0.c.b16.cont [6/16] 0, 0, 128
      %771 = vxpose.binary.xlu0.c.b16.cont [7/16] 0, 0, 128
      %772 = vxpose.binary.xlu0.c.b16.end [8/16] 0, 0, 128
      %v773 = vpop.trf.xlu0
      %v774 = vpop.trf.xlu0
      %v775 = vpop.trf.xlu0
      %v776 = vpop.trf.xlu0
      %v777 = vpop.trf.xlu0
      %v778 = vpop.trf.xlu0
      %v779 = vpop.trf.xlu0
      %v780 = vpop.trf.xlu0
      %v781 = vpop.trf.xlu0
      %v782 = vpop.trf.xlu0
      %v783 = vpop.trf.xlu0
      %v784 = vpop.trf.xlu0
      %v785 = vpop.trf.xlu0
      %v786 = vpop.trf.xlu0
      %v787 = vpop.trf.xlu0
      %v788 = vpop.trf.xlu0
      %v789 = vunpack.c.h.b16 %v571
      %v790 = vunpack.c.h.b16 %v572
      %v791 = vpack.c.b16 %v790, %v789
      %v794 = vsel %vm617, %v773, 0
      %v797 = vsel %vm617, %v775, 0
      %v800 = vsel %vm617, %v777, 0
      %v803 = vsel %vm617, %v779, 0
      %v806 = vsel %vm617, %v781, 0
      %v809 = vsel %vm617, %v783, 0
      %v812 = vsel %vm617, %v785, 0
      %v815 = vsel %vm617, %v787, 0
      %v818 = vsel %vm617, %v774, 0
      %v821 = vsel %vm617, %v776, 0
      %v824 = vsel %vm617, %v778, 0
      %v827 = vsel %vm617, %v780, 0
      %v830 = vsel %vm617, %v782, 0
      %v833 = vsel %vm617, %v784, 0
      %v836 = vsel %vm617, %v786, 0
      %v839 = vsel %vm617, %v788, 0
      %841 = vmatpush.bf16.msra.mxu0 0
      %842 = vmatpush.bf16.msra.mxu0 0
      %843 = vmatpush.bf16.msra.mxu0 0
      %844 = vmatpush.bf16.msra.mxu0 0
      %845 = vmatpush.bf16.msra.mxu0 0
      %846 = vmatpush.bf16.msra.mxu0 0
      %847 = vmatpush.bf16.msra.mxu0 0
      %848 = vmatpush.bf16.msra.mxu0 %v791
      %849 = vmatmul.bf16.gmra.mxu0 %v794
      %v850 = vpop.f32.mrf.mxu0
      %v851 = vadd.f32 0.0, %v850
      %v852 = vpop.f32.mrf.mxu0
      %v853 = vadd.f32 0.0, %v852
      %854 = vmatmul.bf16.gmra.mxu0 %v797
      %v855 = vpop.f32.mrf.mxu0
      %v856 = vadd.f32 0.0, %v855
      %v857 = vpop.f32.mrf.mxu0
      %v858 = vadd.f32 0.0, %v857
      %859 = vmatmul.bf16.gmra.mxu0 %v800
      %v860 = vpop.f32.mrf.mxu0
      %v861 = vadd.f32 0.0, %v860
      %v862 = vpop.f32.mrf.mxu0
      %v863 = vadd.f32 0.0, %v862
      %864 = vmatmul.bf16.gmra.mxu0 %v803
      %v865 = vpop.f32.mrf.mxu0
      %v866 = vadd.f32 0.0, %v865
      %v867 = vpop.f32.mrf.mxu0
      %v868 = vadd.f32 0.0, %v867
      %869 = vmatmul.bf16.gmra.mxu0 %v806
      %v870 = vpop.f32.mrf.mxu0
      %v871 = vadd.f32 0.0, %v870
      %v872 = vpop.f32.mrf.mxu0
      %v873 = vadd.f32 0.0, %v872
      %874 = vmatmul.bf16.gmra.mxu0 %v809
      %v875 = vpop.f32.mrf.mxu0
      %v876 = vadd.f32 0.0, %v875
      %v877 = vpop.f32.mrf.mxu0
      %v878 = vadd.f32 0.0, %v877
      %879 = vmatmul.bf16.gmra.mxu0 %v812
      %v880 = vpop.f32.mrf.mxu0
      %v881 = vadd.f32 0.0, %v880
      %v882 = vpop.f32.mrf.mxu0
      %v883 = vadd.f32 0.0, %v882
      %884 = vmatmul.bf16.gmra.mxu0 %v815
      %v885 = vpop.f32.mrf.mxu0
      %v886 = vadd.f32 0.0, %v885
      %v887 = vpop.f32.mrf.mxu0
      %v888 = vadd.f32 0.0, %v887
      %889 = vmatmul.bf16.gmra.mxu0 %v818
      %v890 = vpop.f32.mrf.mxu0
      %v891 = vadd.f32 0.0, %v890
      %v892 = vpop.f32.mrf.mxu0
      %v893 = vadd.f32 0.0, %v892
      %894 = vmatmul.bf16.gmra.mxu0 %v821
      %v895 = vpop.f32.mrf.mxu0
      %v896 = vadd.f32 0.0, %v895
      %v897 = vpop.f32.mrf.mxu0
      %v898 = vadd.f32 0.0, %v897
      %899 = vmatmul.bf16.gmra.mxu0 %v824
      %v900 = vpop.f32.mrf.mxu0
      %v901 = vadd.f32 0.0, %v900
      %v902 = vpop.f32.mrf.mxu0
      %v903 = vadd.f32 0.0, %v902
      %904 = vmatmul.bf16.gmra.mxu0 %v827
      %v905 = vpop.f32.mrf.mxu0
      %v906 = vadd.f32 0.0, %v905
      %v907 = vpop.f32.mrf.mxu0
      %v908 = vadd.f32 0.0, %v907
      %909 = vmatmul.bf16.gmra.mxu0 %v830
      %v910 = vpop.f32.mrf.mxu0
      %v911 = vadd.f32 0.0, %v910
      %v912 = vpop.f32.mrf.mxu0
      %v913 = vadd.f32 0.0, %v912
      %914 = vmatmul.bf16.gmra.mxu0 %v833
      %v915 = vpop.f32.mrf.mxu0
      %v916 = vadd.f32 0.0, %v915
      %v917 = vpop.f32.mrf.mxu0
      %v918 = vadd.f32 0.0, %v917
      %919 = vmatmul.bf16.gmra.mxu0 %v836
      %v920 = vpop.f32.mrf.mxu0
      %v921 = vadd.f32 0.0, %v920
      %v922 = vpop.f32.mrf.mxu0
      %v923 = vadd.f32 0.0, %v922
      %924 = vmatmul.bf16.gmra.mxu0 %v839
      %v925 = vpop.f32.mrf.mxu0
      %v926 = vadd.f32 0.0, %v925
      %v927 = vpop.f32.mrf.mxu0
      %v928 = vadd.f32 0.0, %v927
      %929 = vdwg.mxu0
      %v930 = vpack.c.bf16 %v443, %v443
      %v931 = vpack.c.bf16 %v445, %v445
      %v932 = vpack.c.bf16 %v676, %v676
      %v933 = vpack.c.bf16 %v678, %v678
      %v934 = vpack.c.bf16 %v681, %v681
      %v935 = vpack.c.bf16 %v683, %v683
      %v936 = vpack.c.bf16 %v686, %v686
      %v937 = vpack.c.bf16 %v688, %v688
      %v938 = vpack.c.bf16 %v691, %v691
      %v939 = vpack.c.bf16 %v693, %v693
      %v940 = vpack.c.bf16 %v696, %v696
      %v941 = vpack.c.bf16 %v698, %v698
      %v942 = vpack.c.bf16 %v701, %v701
      %v943 = vpack.c.bf16 %v703, %v703
      %v944 = vpack.c.bf16 %v706, %v706
      %v945 = vpack.c.bf16 %v708, %v708
      %v946 = vpack.c.bf16 %v711, %v711
      %v947 = vpack.c.bf16 %v713, %v713
      %v948 = vpack.c.bf16 %v716, %v716
      %v949 = vpack.c.bf16 %v718, %v718
      %v950 = vpack.c.bf16 %v721, %v721
      %v951 = vpack.c.bf16 %v723, %v723
      %v952 = vpack.c.bf16 %v726, %v726
      %v953 = vpack.c.bf16 %v728, %v728
      %v954 = vpack.c.bf16 %v731, %v731
      %v955 = vpack.c.bf16 %v733, %v733
      %v956 = vpack.c.bf16 %v736, %v736
      %v957 = vpack.c.bf16 %v738, %v738
      %v958 = vpack.c.bf16 %v741, %v741
      %v959 = vpack.c.bf16 %v743, %v743
      %v960 = vpack.c.bf16 %v746, %v746
      %v961 = vpack.c.bf16 %v748, %v748
      %v962 = vpack.c.bf16 %v751, %v751
      %v963 = vpack.c.bf16 %v753, %v753
      %v964 = vpack.c.bf16 %v851, %v851
      %v965 = vpack.c.bf16 %v853, %v853
      %v966 = vpack.c.bf16 %v856, %v856
      %v967 = vpack.c.bf16 %v858, %v858
      %v968 = vpack.c.bf16 %v861, %v861
      %v969 = vpack.c.bf16 %v863, %v863
      %v970 = vpack.c.bf16 %v866, %v866
      %v971 = vpack.c.bf16 %v868, %v868
      %v972 = vpack.c.bf16 %v871, %v871
      %v973 = vpack.c.bf16 %v873, %v873
      %v974 = vpack.c.bf16 %v876, %v876
      %v975 = vpack.c.bf16 %v878, %v878
      %v976 = vpack.c.bf16 %v881, %v881
      %v977 = vpack.c.bf16 %v883, %v883
      %v978 = vpack.c.bf16 %v886, %v886
      %v979 = vpack.c.bf16 %v888, %v888
      %v980 = vpack.c.bf16 %v891, %v891
      %v981 = vpack.c.bf16 %v893, %v893
      %v982 = vpack.c.bf16 %v896, %v896
      %v983 = vpack.c.bf16 %v898, %v898
      %v984 = vpack.c.bf16 %v901, %v901
      %v985 = vpack.c.bf16 %v903, %v903
      %v986 = vpack.c.bf16 %v906, %v906
      %v987 = vpack.c.bf16 %v908, %v908
      %v988 = vpack.c.bf16 %v911, %v911
      %v989 = vpack.c.bf16 %v913, %v913
      %v990 = vpack.c.bf16 %v916, %v916
      %v991 = vpack.c.bf16 %v918, %v918
      %v992 = vpack.c.bf16 %v921, %v921
      %v993 = vpack.c.bf16 %v923, %v923
      %v994 = vpack.c.bf16 %v926, %v926
      %v995 = vpack.c.bf16 %v928, %v928
      %v998 = vunpack.c.l.b16 %v930
      %v999 = vunpack.c.l.b16 %v931
      %v1000 = vpack.c.b16 %v999, %v998
      %v1033 = vunpack.c.l.b16 %v932
      %v1034 = vunpack.c.l.b16 %v933
      %v1035 = vunpack.c.l.b16 %v934
      %v1036 = vunpack.c.l.b16 %v935
      %v1037 = vunpack.c.l.b16 %v936
      %v1038 = vunpack.c.l.b16 %v937
      %v1039 = vunpack.c.l.b16 %v938
      %v1040 = vunpack.c.l.b16 %v939
      %v1041 = vunpack.c.l.b16 %v940
      %v1042 = vunpack.c.l.b16 %v941
      %v1043 = vunpack.c.l.b16 %v942
      %v1044 = vunpack.c.l.b16 %v943
      %v1045 = vunpack.c.l.b16 %v944
      %v1046 = vunpack.c.l.b16 %v945
      %v1047 = vunpack.c.l.b16 %v946
      %v1048 = vunpack.c.l.b16 %v947
      %v1049 = vunpack.c.l.b16 %v948
      %v1050 = vunpack.c.l.b16 %v949
      %v1051 = vunpack.c.l.b16 %v950
      %v1052 = vunpack.c.l.b16 %v951
      %v1053 = vunpack.c.l.b16 %v952
      %v1054 = vunpack.c.l.b16 %v953
      %v1055 = vunpack.c.l.b16 %v954
      %v1056 = vunpack.c.l.b16 %v955
      %v1057 = vunpack.c.l.b16 %v956
      %v1058 = vunpack.c.l.b16 %v957
      %v1059 = vunpack.c.l.b16 %v958
      %v1060 = vunpack.c.l.b16 %v959
      %v1061 = vunpack.c.l.b16 %v960
      %v1062 = vunpack.c.l.b16 %v961
      %v1063 = vunpack.c.l.b16 %v962
      %v1064 = vunpack.c.l.b16 %v963
      %v1065 = vpack.c.b16 %v1034, %v1033
      %v1066 = vpack.c.b16 %v1036, %v1035
      %v1067 = vpack.c.b16 %v1038, %v1037
      %v1068 = vpack.c.b16 %v1040, %v1039
      %v1069 = vpack.c.b16 %v1042, %v1041
      %v1070 = vpack.c.b16 %v1044, %v1043
      %v1071 = vpack.c.b16 %v1046, %v1045
      %v1072 = vpack.c.b16 %v1048, %v1047
      %v1073 = vpack.c.b16 %v1050, %v1049
      %v1074 = vpack.c.b16 %v1052, %v1051
      %v1075 = vpack.c.b16 %v1054, %v1053
      %v1076 = vpack.c.b16 %v1056, %v1055
      %v1077 = vpack.c.b16 %v1058, %v1057
      %v1078 = vpack.c.b16 %v1060, %v1059
      %v1079 = vpack.c.b16 %v1062, %v1061
      %v1080 = vpack.c.b16 %v1064, %v1063
      %vm1081 = vcmask 261120
      %v1083 = vsel %vm1081, %v1000, 0
      %v1086 = vsel %vm1081, %v1065, 0
      %v1089 = vsel %vm1081, %v1066, 0
      %v1092 = vsel %vm1081, %v1067, 0
      %v1095 = vsel %vm1081, %v1068, 0
      %v1098 = vsel %vm1081, %v1069, 0
      %v1101 = vsel %vm1081, %v1070, 0
      %v1104 = vsel %vm1081, %v1071, 0
      %v1107 = vsel %vm1081, %v1072, 0
      %v1110 = vsel %vm1081, %v1073, 0
      %v1113 = vsel %vm1081, %v1074, 0
      %v1116 = vsel %vm1081, %v1075, 0
      %v1119 = vsel %vm1081, %v1076, 0
      %v1122 = vsel %vm1081, %v1077, 0
      %v1125 = vsel %vm1081, %v1078, 0
      %v1128 = vsel %vm1081, %v1079, 0
      %v1131 = vsel %vm1081, %v1080, 0
      %1133 = vmatpush.bf16.xpose.msra.mxu0 %v1107
      %1134 = vmatpush.bf16.xpose.msra.mxu0 %v1104
      %1135 = vmatpush.bf16.xpose.msra.mxu0 %v1101
      %1136 = vmatpush.bf16.xpose.msra.mxu0 %v1098
      %1137 = vmatpush.bf16.xpose.msra.mxu0 %v1095
      %1138 = vmatpush.bf16.xpose.msra.mxu0 %v1092
      %1139 = vmatpush.bf16.xpose.msra.mxu0 %v1089
      %1140 = vmatpush.bf16.xpose.msra.mxu0 %v1086
      %1141 = vmatmul.bf16.gmra.mxu0 %v1083
      %v1142 = vpop.f32.mrf.mxu0
      %v1143 = vadd.f32 0.0, %v1142
      %v1144 = vpop.f32.mrf.mxu0
      %v1145 = vadd.f32 0.0, %v1144
      %1146 = vdwg.mxu0
      %1147 = vmatpush.bf16.xpose.msra.mxu0 %v1131
      %1148 = vmatpush.bf16.xpose.msra.mxu0 %v1128
      %1149 = vmatpush.bf16.xpose.msra.mxu0 %v1125
      %1150 = vmatpush.bf16.xpose.msra.mxu0 %v1122
      %1151 = vmatpush.bf16.xpose.msra.mxu0 %v1119
      %1152 = vmatpush.bf16.xpose.msra.mxu0 %v1116
      %1153 = vmatpush.bf16.xpose.msra.mxu0 %v1113
      %1154 = vmatpush.bf16.xpose.msra.mxu0 %v1110
      %1155 = vmatmul.bf16.gmra.mxu0 %v1083
      %v1156 = vpop.f32.mrf.mxu0
      %v1157 = vadd.f32 0.0, %v1156
      %v1158 = vpop.f32.mrf.mxu0
      %v1159 = vadd.f32 0.0, %v1158
      %1160 = vdwg.mxu0
      %v1161 = vmul.f32 %v1143, 0.17677669
      %v1162 = vmul.f32 %v1157, 0.17677669
      %v1163 = vmul.f32 %v1145, 0.17677669
      %v1164 = vmul.f32 %v1159, 0.17677669
      %v1165 = vmax.f32 %v1161, %v1162
      %1166 = vmax.xlane.f32.xlu0 %v1165
      %v1167 = vpop.xlane.xlu0 %1166
      %v1168 = vmax.f32 %v1163, %v1164
      %1169 = vmax.xlane.f32.xlu0 %v1168
      %v1170 = vpop.xlane.xlu0 %1169
      %v1171 = vsub.f32 %v1161, %v1167
      %v1172 = vsub.f32 %v1162, %v1167
      %v1173 = vsub.f32 %v1163, %v1170
      %v1174 = vsub.f32 %v1164, %v1170
      %v1175 = vmul.f32 %v1171, 1.442695
      %v1176 = vpow.pop %v1175
      %v1177 = vmul.f32 %v1172, 1.442695
      %v1178 = vpow.pop %v1177
      %v1179 = vmul.f32 %v1173, 1.442695
      %v1180 = vpow.pop %v1179
      %v1181 = vmul.f32 %v1174, 1.442695
      %v1182 = vpow.pop %v1181
      %v1183 = vadd.f32 %v1176, %v1178
      %1184 = vadd.xlane.f32.xlu0 %v1183
      %v1185 = vpop.xlane.xlu0 %1184
      %v1186 = vadd.f32 %v1180, %v1182
      %1187 = vadd.xlane.f32.xlu0 %v1186
      %v1188 = vpop.xlane.xlu0 %1187
      %v1189 = vrcp.pop %v1185
      %v1190 = vrcp.pop %v1188
      %v1191 = vmul.f32 %v1176, %v1189
      %v1192 = vmul.f32 %v1178, %v1189
      %v1193 = vmul.f32 %v1180, %v1190
      %v1194 = vmul.f32 %v1182, %v1190
      %v1195 = vpack.c.bf16 %v1193, %v1191
      %v1196 = vpack.c.bf16 %v1194, %v1192
      %v1229 = vunpack.c.l.b16 %v964
      %v1230 = vunpack.c.l.b16 %v965
      %v1231 = vunpack.c.l.b16 %v966
      %v1232 = vunpack.c.l.b16 %v967
      %v1233 = vunpack.c.l.b16 %v968
      %v1234 = vunpack.c.l.b16 %v969
      %v1235 = vunpack.c.l.b16 %v970
      %v1236 = vunpack.c.l.b16 %v971
      %v1237 = vunpack.c.l.b16 %v972
      %v1238 = vunpack.c.l.b16 %v973
      %v1239 = vunpack.c.l.b16 %v974
      %v1240 = vunpack.c.l.b16 %v975
      %v1241 = vunpack.c.l.b16 %v976
      %v1242 = vunpack.c.l.b16 %v977
      %v1243 = vunpack.c.l.b16 %v978
      %v1244 = vunpack.c.l.b16 %v979
      %v1245 = vunpack.c.l.b16 %v980
      %v1246 = vunpack.c.l.b16 %v981
      %v1247 = vunpack.c.l.b16 %v982
      %v1248 = vunpack.c.l.b16 %v983
      %v1249 = vunpack.c.l.b16 %v984
      %v1250 = vunpack.c.l.b16 %v985
      %v1251 = vunpack.c.l.b16 %v986
      %v1252 = vunpack.c.l.b16 %v987
      %v1253 = vunpack.c.l.b16 %v988
      %v1254 = vunpack.c.l.b16 %v989
      %v1255 = vunpack.c.l.b16 %v990
      %v1256 = vunpack.c.l.b16 %v991
      %v1257 = vunpack.c.l.b16 %v992
      %v1258 = vunpack.c.l.b16 %v993
      %v1259 = vunpack.c.l.b16 %v994
      %v1260 = vunpack.c.l.b16 %v995
      %v1261 = vpack.c.b16 %v1230, %v1229
      %v1262 = vpack.c.b16 %v1232, %v1231
      %v1263 = vpack.c.b16 %v1234, %v1233
      %v1264 = vpack.c.b16 %v1236, %v1235
      %v1265 = vpack.c.b16 %v1238, %v1237
      %v1266 = vpack.c.b16 %v1240, %v1239
      %v1267 = vpack.c.b16 %v1242, %v1241
      %v1268 = vpack.c.b16 %v1244, %v1243
      %v1269 = vpack.c.b16 %v1246, %v1245
      %v1270 = vpack.c.b16 %v1248, %v1247
      %v1271 = vpack.c.b16 %v1250, %v1249
      %v1272 = vpack.c.b16 %v1252, %v1251
      %v1273 = vpack.c.b16 %v1254, %v1253
      %v1274 = vpack.c.b16 %v1256, %v1255
      %v1275 = vpack.c.b16 %v1258, %v1257
      %v1276 = vpack.c.b16 %v1260, %v1259
      %1293 = vmatpush.bf16.msra.mxu0 %v1268
      %1294 = vmatpush.bf16.msra.mxu0 %v1267
      %1295 = vmatpush.bf16.msra.mxu0 %v1266
      %1296 = vmatpush.bf16.msra.mxu0 %v1265
      %1297 = vmatpush.bf16.msra.mxu0 %v1264
      %1298 = vmatpush.bf16.msra.mxu0 %v1263
      %1299 = vmatpush.bf16.msra.mxu0 %v1262
      %1300 = vmatpush.bf16.msra.mxu0 %v1261
      %1301 = vmatmul.bf16.gmra.mxu0 %v1195
      %v1302 = vpop.f32.mrf.mxu0
      %v1303 = vadd.f32 0.0, %v1302
      %v1304 = vpop.f32.mrf.mxu0
      %v1305 = vadd.f32 0.0, %v1304
      %1306 = vdwg.mxu0
      %1307 = vmatpush.bf16.msra.mxu0 %v1276
      %1308 = vmatpush.bf16.msra.mxu0 %v1275
      %1309 = vmatpush.bf16.msra.mxu0 %v1274
      %1310 = vmatpush.bf16.msra.mxu0 %v1273
      %1311 = vmatpush.bf16.msra.mxu0 %v1272
      %1312 = vmatpush.bf16.msra.mxu0 %v1271
      %1313 = vmatpush.bf16.msra.mxu0 %v1270
      %1314 = vmatpush.bf16.msra.mxu0 %v1269
      %1315 = vmatmul.bf16.gmra.mxu0 %v1196
      %v1316 = vpop.f32.mrf.mxu0
      %v1317 = vadd.f32 %v1303, %v1316
      %v1318 = vpop.f32.mrf.mxu0
      %v1319 = vadd.f32 %v1305, %v1318
      %1320 = vdwg.mxu0
      %1321 = vrot.lane.b32.xlu0 %v1000, 96
      %v1322 = vpop.permute.xlu0 %1321
      %1323 = vrot.lane.b32.xlu0 %v1065, 96
      %v1324 = vpop.permute.xlu0 %1323
      %1325 = vrot.lane.b32.xlu0 %v1066, 96
      %v1326 = vpop.permute.xlu0 %1325
      %1327 = vrot.lane.b32.xlu0 %v1067, 96
      %v1328 = vpop.permute.xlu0 %1327
      %1329 = vrot.lane.b32.xlu0 %v1068, 96
      %v1330 = vpop.permute.xlu0 %1329
      %1331 = vrot.lane.b32.xlu0 %v1069, 96
      %v1332 = vpop.permute.xlu0 %1331
      %1333 = vrot.lane.b32.xlu0 %v1070, 96
      %v1334 = vpop.permute.xlu0 %1333
      %1335 = vrot.lane.b32.xlu0 %v1071, 96
      %v1336 = vpop.permute.xlu0 %1335
      %1337 = vrot.lane.b32.xlu0 %v1072, 96
      %v1338 = vpop.permute.xlu0 %1337
      %1339 = vrot.lane.b32.xlu0 %v1073, 96
      %v1340 = vpop.permute.xlu0 %1339
      %1341 = vrot.lane.b32.xlu0 %v1074, 96
      %v1342 = vpop.permute.xlu0 %1341
      %1343 = vrot.lane.b32.xlu0 %v1075, 96
      %v1344 = vpop.permute.xlu0 %1343
      %1345 = vrot.lane.b32.xlu0 %v1076, 96
      %v1346 = vpop.permute.xlu0 %1345
      %1347 = vrot.lane.b32.xlu0 %v1077, 96
      %v1348 = vpop.permute.xlu0 %1347
      %1349 = vrot.lane.b32.xlu0 %v1078, 96
      %v1350 = vpop.permute.xlu0 %1349
      %1351 = vrot.lane.b32.xlu0 %v1079, 96
      %v1352 = vpop.permute.xlu0 %1351
      %1353 = vrot.lane.b32.xlu0 %v1080, 96
      %v1354 = vpop.permute.xlu0 %1353
      %v1356 = vsel %vm1081, %v1322, 0
      %v1359 = vsel %vm1081, %v1324, 0
      %v1362 = vsel %vm1081, %v1326, 0
      %v1365 = vsel %vm1081, %v1328, 0
      %v1368 = vsel %vm1081, %v1330, 0
      %v1371 = vsel %vm1081, %v1332, 0
      %v1374 = vsel %vm1081, %v1334, 0
      %v1377 = vsel %vm1081, %v1336, 0
      %v1380 = vsel %vm1081, %v1338, 0
      %v1383 = vsel %vm1081, %v1340, 0
      %v1386 = vsel %vm1081, %v1342, 0
      %v1389 = vsel %vm1081, %v1344, 0
      %v1392 = vsel %vm1081, %v1346, 0
      %v1395 = vsel %vm1081, %v1348, 0
      %v1398 = vsel %vm1081, %v1350, 0
      %v1401 = vsel %vm1081, %v1352, 0
      %v1404 = vsel %vm1081, %v1354, 0
      %1406 = vmatpush.bf16.xpose.msra.mxu0 %v1380
      %1407 = vmatpush.bf16.xpose.msra.mxu0 %v1377
      %1408 = vmatpush.bf16.xpose.msra.mxu0 %v1374
      %1409 = vmatpush.bf16.xpose.msra.mxu0 %v1371
      %1410 = vmatpush.bf16.xpose.msra.mxu0 %v1368
      %1411 = vmatpush.bf16.xpose.msra.mxu0 %v1365
      %1412 = vmatpush.bf16.xpose.msra.mxu0 %v1362
      %1413 = vmatpush.bf16.xpose.msra.mxu0 %v1359
      %1414 = vmatmul.bf16.gmra.mxu0 %v1356
      %v1415 = vpop.f32.mrf.mxu0
      %v1416 = vadd.f32 0.0, %v1415
      %v1417 = vpop.f32.mrf.mxu0
      %v1418 = vadd.f32 0.0, %v1417
      %1419 = vdwg.mxu0
      %1420 = vmatpush.bf16.xpose.msra.mxu0 %v1404
      %1421 = vmatpush.bf16.xpose.msra.mxu0 %v1401
      %1422 = vmatpush.bf16.xpose.msra.mxu0 %v1398
      %1423 = vmatpush.bf16.xpose.msra.mxu0 %v1395
      %1424 = vmatpush.bf16.xpose.msra.mxu0 %v1392
      %1425 = vmatpush.bf16.xpose.msra.mxu0 %v1389
      %1426 = vmatpush.bf16.xpose.msra.mxu0 %v1386
      %1427 = vmatpush.bf16.xpose.msra.mxu0 %v1383
      %1428 = vmatmul.bf16.gmra.mxu0 %v1356
      %v1429 = vpop.f32.mrf.mxu0
      %v1430 = vadd.f32 0.0, %v1429
      %v1431 = vpop.f32.mrf.mxu0
      %v1432 = vadd.f32 0.0, %v1431
      %1433 = vdwg.mxu0
      %v1434 = vmul.f32 %v1416, 0.17677669
      %v1435 = vmul.f32 %v1430, 0.17677669
      %v1436 = vmul.f32 %v1418, 0.17677669
      %v1437 = vmul.f32 %v1432, 0.17677669
      %v1438 = vmax.f32 %v1434, %v1435
      %1439 = vmax.xlane.f32.xlu0 %v1438
      %v1440 = vpop.xlane.xlu0 %1439
      %v1441 = vmax.f32 %v1436, %v1437
      %1442 = vmax.xlane.f32.xlu0 %v1441
      %v1443 = vpop.xlane.xlu0 %1442
      %v1444 = vsub.f32 %v1434, %v1440
      %v1445 = vsub.f32 %v1435, %v1440
      %v1446 = vsub.f32 %v1436, %v1443
      %v1447 = vsub.f32 %v1437, %v1443
      %v1448 = vmul.f32 %v1444, 1.442695
      %v1449 = vpow.pop %v1448
      %v1450 = vmul.f32 %v1445, 1.442695
      %v1451 = vpow.pop %v1450
      %v1452 = vmul.f32 %v1446, 1.442695
      %v1453 = vpow.pop %v1452
      %v1454 = vmul.f32 %v1447, 1.442695
      %v1455 = vpow.pop %v1454
      %v1456 = vadd.f32 %v1449, %v1451
      %1457 = vadd.xlane.f32.xlu0 %v1456
      %v1458 = vpop.xlane.xlu0 %1457
      %v1459 = vadd.f32 %v1453, %v1455
      %1460 = vadd.xlane.f32.xlu0 %v1459
      %v1461 = vpop.xlane.xlu0 %1460
      %v1462 = vrcp.pop %v1458
      %v1463 = vrcp.pop %v1461
      %v1464 = vmul.f32 %v1449, %v1462
      %v1465 = vmul.f32 %v1451, %v1462
      %v1466 = vmul.f32 %v1453, %v1463
      %v1467 = vmul.f32 %v1455, %v1463
      %v1468 = vpack.c.bf16 %v1466, %v1464
      %v1469 = vpack.c.bf16 %v1467, %v1465
      %1470 = vrot.lane.b32.xlu0 %v1261, 96
      %v1471 = vpop.permute.xlu0 %1470
      %1472 = vrot.lane.b32.xlu0 %v1262, 96
      %v1473 = vpop.permute.xlu0 %1472
      %1474 = vrot.lane.b32.xlu0 %v1263, 96
      %v1475 = vpop.permute.xlu0 %1474
      %1476 = vrot.lane.b32.xlu0 %v1264, 96
      %v1477 = vpop.permute.xlu0 %1476
      %1478 = vrot.lane.b32.xlu0 %v1265, 96
      %v1479 = vpop.permute.xlu0 %1478
      %1480 = vrot.lane.b32.xlu0 %v1266, 96
      %v1481 = vpop.permute.xlu0 %1480
      %1482 = vrot.lane.b32.xlu0 %v1267, 96
      %v1483 = vpop.permute.xlu0 %1482
      %1484 = vrot.lane.b32.xlu0 %v1268, 96
      %v1485 = vpop.permute.xlu0 %1484
      %1486 = vrot.lane.b32.xlu0 %v1269, 96
      %v1487 = vpop.permute.xlu0 %1486
      %1488 = vrot.lane.b32.xlu0 %v1270, 96
      %v1489 = vpop.permute.xlu0 %1488
      %1490 = vrot.lane.b32.xlu0 %v1271, 96
      %v1491 = vpop.permute.xlu0 %1490
      %1492 = vrot.lane.b32.xlu0 %v1272, 96
      %v1493 = vpop.permute.xlu0 %1492
      %1494 = vrot.lane.b32.xlu0 %v1273, 96
      %v1495 = vpop.permute.xlu0 %1494
      %1496 = vrot.lane.b32.xlu0 %v1274, 96
      %v1497 = vpop.permute.xlu0 %1496
      %1498 = vrot.lane.b32.xlu0 %v1275, 96
      %v1499 = vpop.permute.xlu0 %1498
      %1500 = vrot.lane.b32.xlu0 %v1276, 96
      %v1501 = vpop.permute.xlu0 %1500
      %1518 = vmatpush.bf16.msra.mxu0 %v1485
      %1519 = vmatpush.bf16.msra.mxu0 %v1483
      %1520 = vmatpush.bf16.msra.mxu0 %v1481
      %1521 = vmatpush.bf16.msra.mxu0 %v1479
      %1522 = vmatpush.bf16.msra.mxu0 %v1477
      %1523 = vmatpush.bf16.msra.mxu0 %v1475
      %1524 = vmatpush.bf16.msra.mxu0 %v1473
      %1525 = vmatpush.bf16.msra.mxu0 %v1471
      %1526 = vmatmul.bf16.gmra.mxu0 %v1468
      %v1527 = vpop.f32.mrf.mxu0
      %v1528 = vadd.f32 0.0, %v1527
      %v1529 = vpop.f32.mrf.mxu0
      %v1530 = vadd.f32 0.0, %v1529
      %1531 = vdwg.mxu0
      %1532 = vmatpush.bf16.msra.mxu0 %v1501
      %1533 = vmatpush.bf16.msra.mxu0 %v1499
      %1534 = vmatpush.bf16.msra.mxu0 %v1497
      %1535 = vmatpush.bf16.msra.mxu0 %v1495
      %1536 = vmatpush.bf16.msra.mxu0 %v1493
      %1537 = vmatpush.bf16.msra.mxu0 %v1491
      %1538 = vmatpush.bf16.msra.mxu0 %v1489
      %1539 = vmatpush.bf16.msra.mxu0 %v1487
      %1540 = vmatmul.bf16.gmra.mxu0 %v1469
      %v1541 = vpop.f32.mrf.mxu0
      %v1542 = vadd.f32 %v1528, %v1541
      %v1543 = vpop.f32.mrf.mxu0
      %v1544 = vadd.f32 %v1530, %v1543
      %1545 = vdwg.mxu0
      %1546 = vrot.lane.b32.xlu0 %v1000, 64
      %v1547 = vpop.permute.xlu0 %1546
      %1548 = vrot.lane.b32.xlu0 %v1065, 64
      %v1549 = vpop.permute.xlu0 %1548
      %1550 = vrot.lane.b32.xlu0 %v1066, 64
      %v1551 = vpop.permute.xlu0 %1550
      %1552 = vrot.lane.b32.xlu0 %v1067, 64
      %v1553 = vpop.permute.xlu0 %1552
      %1554 = vrot.lane.b32.xlu0 %v1068, 64
      %v1555 = vpop.permute.xlu0 %1554
      %1556 = vrot.lane.b32.xlu0 %v1069, 64
      %v1557 = vpop.permute.xlu0 %1556
      %1558 = vrot.lane.b32.xlu0 %v1070, 64
      %v1559 = vpop.permute.xlu0 %1558
      %1560 = vrot.lane.b32.xlu0 %v1071, 64
      %v1561 = vpop.permute.xlu0 %1560
      %1562 = vrot.lane.b32.xlu0 %v1072, 64
      %v1563 = vpop.permute.xlu0 %1562
      %1564 = vrot.lane.b32.xlu0 %v1073, 64
      %v1565 = vpop.permute.xlu0 %1564
      %1566 = vrot.lane.b32.xlu0 %v1074, 64
      %v1567 = vpop.permute.xlu0 %1566
      %1568 = vrot.lane.b32.xlu0 %v1075, 64
      %v1569 = vpop.permute.xlu0 %1568
      %1570 = vrot.lane.b32.xlu0 %v1076, 64
      %v1571 = vpop.permute.xlu0 %1570
      %1572 = vrot.lane.b32.xlu0 %v1077, 64
      %v1573 = vpop.permute.xlu0 %1572
      %1574 = vrot.lane.b32.xlu0 %v1078, 64
      %v1575 = vpop.permute.xlu0 %1574
      %1576 = vrot.lane.b32.xlu0 %v1079, 64
      %v1577 = vpop.permute.xlu0 %1576
      %1578 = vrot.lane.b32.xlu0 %v1080, 64
      %v1579 = vpop.permute.xlu0 %1578
      %v1581 = vsel %vm1081, %v1547, 0
      %v1584 = vsel %vm1081, %v1549, 0
      %v1587 = vsel %vm1081, %v1551, 0
      %v1590 = vsel %vm1081, %v1553, 0
      %v1593 = vsel %vm1081, %v1555, 0
      %v1596 = vsel %vm1081, %v1557, 0
      %v1599 = vsel %vm1081, %v1559, 0
      %v1602 = vsel %vm1081, %v1561, 0
      %v1605 = vsel %vm1081, %v1563, 0
      %v1608 = vsel %vm1081, %v1565, 0
      %v1611 = vsel %vm1081, %v1567, 0
      %v1614 = vsel %vm1081, %v1569, 0
      %v1617 = vsel %vm1081, %v1571, 0
      %v1620 = vsel %vm1081, %v1573, 0
      %v1623 = vsel %vm1081, %v1575, 0
      %v1626 = vsel %vm1081, %v1577, 0
      %v1629 = vsel %vm1081, %v1579, 0
      %1631 = vmatpush.bf16.xpose.msra.mxu0 %v1605
      %1632 = vmatpush.bf16.xpose.msra.mxu0 %v1602
      %1633 = vmatpush.bf16.xpose.msra.mxu0 %v1599
      %1634 = vmatpush.bf16.xpose.msra.mxu0 %v1596
      %1635 = vmatpush.bf16.xpose.msra.mxu0 %v1593
      %1636 = vmatpush.bf16.xpose.msra.mxu0 %v1590
      %1637 = vmatpush.bf16.xpose.msra.mxu0 %v1587
      %1638 = vmatpush.bf16.xpose.msra.mxu0 %v1584
      %1639 = vmatmul.bf16.gmra.mxu0 %v1581
      %v1640 = vpop.f32.mrf.mxu0
      %v1641 = vadd.f32 0.0, %v1640
      %v1642 = vpop.f32.mrf.mxu0
      %v1643 = vadd.f32 0.0, %v1642
      %1644 = vdwg.mxu0
      %1645 = vmatpush.bf16.xpose.msra.mxu0 %v1629
      %1646 = vmatpush.bf16.xpose.msra.mxu0 %v1626
      %1647 = vmatpush.bf16.xpose.msra.mxu0 %v1623
      %1648 = vmatpush.bf16.xpose.msra.mxu0 %v1620
      %1649 = vmatpush.bf16.xpose.msra.mxu0 %v1617
      %1650 = vmatpush.bf16.xpose.msra.mxu0 %v1614
      %1651 = vmatpush.bf16.xpose.msra.mxu0 %v1611
      %1652 = vmatpush.bf16.xpose.msra.mxu0 %v1608
      %1653 = vmatmul.bf16.gmra.mxu0 %v1581
      %v1654 = vpop.f32.mrf.mxu0
      %v1655 = vadd.f32 0.0, %v1654
      %v1656 = vpop.f32.mrf.mxu0
      %v1657 = vadd.f32 0.0, %v1656
      %1658 = vdwg.mxu0
      %v1659 = vmul.f32 %v1641, 0.17677669
      %v1660 = vmul.f32 %v1655, 0.17677669
      %v1661 = vmul.f32 %v1643, 0.17677669
      %v1662 = vmul.f32 %v1657, 0.17677669
      %v1663 = vmax.f32 %v1659, %v1660
      %1664 = vmax.xlane.f32.xlu0 %v1663
      %v1665 = vpop.xlane.xlu0 %1664
      %v1666 = vmax.f32 %v1661, %v1662
      %1667 = vmax.xlane.f32.xlu0 %v1666
      %v1668 = vpop.xlane.xlu0 %1667
      %v1669 = vsub.f32 %v1659, %v1665
      %v1670 = vsub.f32 %v1660, %v1665
      %v1671 = vsub.f32 %v1661, %v1668
      %v1672 = vsub.f32 %v1662, %v1668
      %v1673 = vmul.f32 %v1669, 1.442695
      %v1674 = vpow.pop %v1673
      %v1675 = vmul.f32 %v1670, 1.442695
      %v1676 = vpow.pop %v1675
      %v1677 = vmul.f32 %v1671, 1.442695
      %v1678 = vpow.pop %v1677
      %v1679 = vmul.f32 %v1672, 1.442695
      %v1680 = vpow.pop %v1679
      %v1681 = vadd.f32 %v1674, %v1676
      %1682 = vadd.xlane.f32.xlu0 %v1681
      %v1683 = vpop.xlane.xlu0 %1682
      %v1684 = vadd.f32 %v1678, %v1680
      %1685 = vadd.xlane.f32.xlu0 %v1684
      %v1686 = vpop.xlane.xlu0 %1685
      %v1687 = vrcp.pop %v1683
      %v1688 = vrcp.pop %v1686
      %v1689 = vmul.f32 %v1674, %v1687
      %v1690 = vmul.f32 %v1676, %v1687
      %v1691 = vmul.f32 %v1678, %v1688
      %v1692 = vmul.f32 %v1680, %v1688
      %v1693 = vpack.c.bf16 %v1691, %v1689
      %v1694 = vpack.c.bf16 %v1692, %v1690
      %1695 = vrot.lane.b32.xlu0 %v1261, 64
      %v1696 = vpop.permute.xlu0 %1695
      %1697 = vrot.lane.b32.xlu0 %v1262, 64
      %v1698 = vpop.permute.xlu0 %1697
      %1699 = vrot.lane.b32.xlu0 %v1263, 64
      %v1700 = vpop.permute.xlu0 %1699
      %1701 = vrot.lane.b32.xlu0 %v1264, 64
      %v1702 = vpop.permute.xlu0 %1701
      %1703 = vrot.lane.b32.xlu0 %v1265, 64
      %v1704 = vpop.permute.xlu0 %1703
      %1705 = vrot.lane.b32.xlu0 %v1266, 64
      %v1706 = vpop.permute.xlu0 %1705
      %1707 = vrot.lane.b32.xlu0 %v1267, 64
      %v1708 = vpop.permute.xlu0 %1707
      %1709 = vrot.lane.b32.xlu0 %v1268, 64
      %v1710 = vpop.permute.xlu0 %1709
      %1711 = vrot.lane.b32.xlu0 %v1269, 64
      %v1712 = vpop.permute.xlu0 %1711
      %1713 = vrot.lane.b32.xlu0 %v1270, 64
      %v1714 = vpop.permute.xlu0 %1713
      %1715 = vrot.lane.b32.xlu0 %v1271, 64
      %v1716 = vpop.permute.xlu0 %1715
      %1717 = vrot.lane.b32.xlu0 %v1272, 64
      %v1718 = vpop.permute.xlu0 %1717
      %1719 = vrot.lane.b32.xlu0 %v1273, 64
      %v1720 = vpop.permute.xlu0 %1719
      %1721 = vrot.lane.b32.xlu0 %v1274, 64
      %v1722 = vpop.permute.xlu0 %1721
      %1723 = vrot.lane.b32.xlu0 %v1275, 64
      %v1724 = vpop.permute.xlu0 %1723
      %1725 = vrot.lane.b32.xlu0 %v1276, 64
      %v1726 = vpop.permute.xlu0 %1725
      %1743 = vmatpush.bf16.msra.mxu0 %v1710
      %1744 = vmatpush.bf16.msra.mxu0 %v1708
      %1745 = vmatpush.bf16.msra.mxu0 %v1706
      %1746 = vmatpush.bf16.msra.mxu0 %v1704
      %1747 = vmatpush.bf16.msra.mxu0 %v1702
      %1748 = vmatpush.bf16.msra.mxu0 %v1700
      %1749 = vmatpush.bf16.msra.mxu0 %v1698
      %1750 = vmatpush.bf16.msra.mxu0 %v1696
      %1751 = vmatmul.bf16.gmra.mxu0 %v1693
      %v1752 = vpop.f32.mrf.mxu0
      %v1753 = vadd.f32 0.0, %v1752
      %v1754 = vpop.f32.mrf.mxu0
      %v1755 = vadd.f32 0.0, %v1754
      %1756 = vdwg.mxu0
      %1757 = vmatpush.bf16.msra.mxu0 %v1726
      %1758 = vmatpush.bf16.msra.mxu0 %v1724
      %1759 = vmatpush.bf16.msra.mxu0 %v1722
      %1760 = vmatpush.bf16.msra.mxu0 %v1720
      %1761 = vmatpush.bf16.msra.mxu0 %v1718
      %1762 = vmatpush.bf16.msra.mxu0 %v1716
      %1763 = vmatpush.bf16.msra.mxu0 %v1714
      %1764 = vmatpush.bf16.msra.mxu0 %v1712
      %1765 = vmatmul.bf16.gmra.mxu0 %v1694
      %v1766 = vpop.f32.mrf.mxu0
      %v1767 = vadd.f32 %v1753, %v1766
      %v1768 = vpop.f32.mrf.mxu0
      %v1769 = vadd.f32 %v1755, %v1768
      %1770 = vdwg.mxu0
      %1771 = vrot.lane.b32.xlu0 %v1000, 32
      %v1772 = vpop.permute.xlu0 %1771
      %1773 = vrot.lane.b32.xlu0 %v1065, 32
      %v1774 = vpop.permute.xlu0 %1773
      %1775 = vrot.lane.b32.xlu0 %v1066, 32
      %v1776 = vpop.permute.xlu0 %1775
      %1777 = vrot.lane.b32.xlu0 %v1067, 32
      %v1778 = vpop.permute.xlu0 %1777
      %1779 = vrot.lane.b32.xlu0 %v1068, 32
      %v1780 = vpop.permute.xlu0 %1779
      %1781 = vrot.lane.b32.xlu0 %v1069, 32
      %v1782 = vpop.permute.xlu0 %1781
      %1783 = vrot.lane.b32.xlu0 %v1070, 32
      %v1784 = vpop.permute.xlu0 %1783
      %1785 = vrot.lane.b32.xlu0 %v1071, 32
      %v1786 = vpop.permute.xlu0 %1785
      %1787 = vrot.lane.b32.xlu0 %v1072, 32
      %v1788 = vpop.permute.xlu0 %1787
      %1789 = vrot.lane.b32.xlu0 %v1073, 32
      %v1790 = vpop.permute.xlu0 %1789
      %1791 = vrot.lane.b32.xlu0 %v1074, 32
      %v1792 = vpop.permute.xlu0 %1791
      %1793 = vrot.lane.b32.xlu0 %v1075, 32
      %v1794 = vpop.permute.xlu0 %1793
      %1795 = vrot.lane.b32.xlu0 %v1076, 32
      %v1796 = vpop.permute.xlu0 %1795
      %1797 = vrot.lane.b32.xlu0 %v1077, 32
      %v1798 = vpop.permute.xlu0 %1797
      %1799 = vrot.lane.b32.xlu0 %v1078, 32
      %v1800 = vpop.permute.xlu0 %1799
      %1801 = vrot.lane.b32.xlu0 %v1079, 32
      %v1802 = vpop.permute.xlu0 %1801
      %1803 = vrot.lane.b32.xlu0 %v1080, 32
      %v1804 = vpop.permute.xlu0 %1803
      %v1806 = vsel %vm1081, %v1772, 0
      %v1809 = vsel %vm1081, %v1774, 0
      %v1812 = vsel %vm1081, %v1776, 0
      %v1815 = vsel %vm1081, %v1778, 0
      %v1818 = vsel %vm1081, %v1780, 0
      %v1821 = vsel %vm1081, %v1782, 0
      %v1824 = vsel %vm1081, %v1784, 0
      %v1827 = vsel %vm1081, %v1786, 0
      %v1830 = vsel %vm1081, %v1788, 0
      %v1833 = vsel %vm1081, %v1790, 0
      %v1836 = vsel %vm1081, %v1792, 0
      %v1839 = vsel %vm1081, %v1794, 0
      %v1842 = vsel %vm1081, %v1796, 0
      %v1845 = vsel %vm1081, %v1798, 0
      %v1848 = vsel %vm1081, %v1800, 0
      %v1851 = vsel %vm1081, %v1802, 0
      %v1854 = vsel %vm1081, %v1804, 0
      %1856 = vmatpush.bf16.xpose.msra.mxu0 %v1830
      %1857 = vmatpush.bf16.xpose.msra.mxu0 %v1827
      %1858 = vmatpush.bf16.xpose.msra.mxu0 %v1824
      %1859 = vmatpush.bf16.xpose.msra.mxu0 %v1821
      %1860 = vmatpush.bf16.xpose.msra.mxu0 %v1818
      %1861 = vmatpush.bf16.xpose.msra.mxu0 %v1815
      %1862 = vmatpush.bf16.xpose.msra.mxu0 %v1812
      %1863 = vmatpush.bf16.xpose.msra.mxu0 %v1809
      %1864 = vmatmul.bf16.gmra.mxu0 %v1806
      %v1865 = vpop.f32.mrf.mxu0
      %v1866 = vadd.f32 0.0, %v1865
      %v1867 = vpop.f32.mrf.mxu0
      %v1868 = vadd.f32 0.0, %v1867
      %1869 = vdwg.mxu0
      %1870 = vmatpush.bf16.xpose.msra.mxu0 %v1854
      %1871 = vmatpush.bf16.xpose.msra.mxu0 %v1851
      %1872 = vmatpush.bf16.xpose.msra.mxu0 %v1848
      %1873 = vmatpush.bf16.xpose.msra.mxu0 %v1845
      %1874 = vmatpush.bf16.xpose.msra.mxu0 %v1842
      %1875 = vmatpush.bf16.xpose.msra.mxu0 %v1839
      %1876 = vmatpush.bf16.xpose.msra.mxu0 %v1836
      %1877 = vmatpush.bf16.xpose.msra.mxu0 %v1833
      %1878 = vmatmul.bf16.gmra.mxu0 %v1806
      %v1879 = vpop.f32.mrf.mxu0
      %v1880 = vadd.f32 0.0, %v1879
      %v1881 = vpop.f32.mrf.mxu0
      %v1882 = vadd.f32 0.0, %v1881
      %1883 = vdwg.mxu0
      %v1884 = vmul.f32 %v1866, 0.17677669
      %v1885 = vmul.f32 %v1880, 0.17677669
      %v1886 = vmul.f32 %v1868, 0.17677669
      %v1887 = vmul.f32 %v1882, 0.17677669
      %v1888 = vmax.f32 %v1884, %v1885
      %1889 = vmax.xlane.f32.xlu0 %v1888
      %v1890 = vpop.xlane.xlu0 %1889
      %v1891 = vmax.f32 %v1886, %v1887
      %1892 = vmax.xlane.f32.xlu0 %v1891
      %v1893 = vpop.xlane.xlu0 %1892
      %v1894 = vsub.f32 %v1884, %v1890
      %v1895 = vsub.f32 %v1885, %v1890
      %v1896 = vsub.f32 %v1886, %v1893
      %v1897 = vsub.f32 %v1887, %v1893
      %v1898 = vmul.f32 %v1894, 1.442695
      %v1899 = vpow.pop %v1898
      %v1900 = vmul.f32 %v1895, 1.442695
      %v1901 = vpow.pop %v1900
      %v1902 = vmul.f32 %v1896, 1.442695
      %v1903 = vpow.pop %v1902
      %v1904 = vmul.f32 %v1897, 1.442695
      %v1905 = vpow.pop %v1904
      %v1906 = vadd.f32 %v1899, %v1901
      %1907 = vadd.xlane.f32.xlu0 %v1906
      %v1908 = vpop.xlane.xlu0 %1907
      %v1909 = vadd.f32 %v1903, %v1905
      %1910 = vadd.xlane.f32.xlu0 %v1909
      %v1911 = vpop.xlane.xlu0 %1910
      %v1912 = vrcp.pop %v1908
      %v1913 = vrcp.pop %v1911
      %v1914 = vmul.f32 %v1899, %v1912
      %v1915 = vmul.f32 %v1901, %v1912
      %v1916 = vmul.f32 %v1903, %v1913
      %v1917 = vmul.f32 %v1905, %v1913
      %v1918 = vpack.c.bf16 %v1916, %v1914
      %v1919 = vpack.c.bf16 %v1917, %v1915
      %1920 = vrot.lane.b32.xlu0 %v1261, 32
      %v1921 = vpop.permute.xlu0 %1920
      %1922 = vrot.lane.b32.xlu0 %v1262, 32
      %v1923 = vpop.permute.xlu0 %1922
      %1924 = vrot.lane.b32.xlu0 %v1263, 32
      %v1925 = vpop.permute.xlu0 %1924
      %1926 = vrot.lane.b32.xlu0 %v1264, 32
      %v1927 = vpop.permute.xlu0 %1926
      %1928 = vrot.lane.b32.xlu0 %v1265, 32
      %v1929 = vpop.permute.xlu0 %1928
      %1930 = vrot.lane.b32.xlu0 %v1266, 32
      %v1931 = vpop.permute.xlu0 %1930
      %1932 = vrot.lane.b32.xlu0 %v1267, 32
      %v1933 = vpop.permute.xlu0 %1932
      %1934 = vrot.lane.b32.xlu0 %v1268, 32
      %v1935 = vpop.permute.xlu0 %1934
      %1936 = vrot.lane.b32.xlu0 %v1269, 32
      %v1937 = vpop.permute.xlu0 %1936
      %1938 = vrot.lane.b32.xlu0 %v1270, 32
      %v1939 = vpop.permute.xlu0 %1938
      %1940 = vrot.lane.b32.xlu0 %v1271, 32
      %v1941 = vpop.permute.xlu0 %1940
      %1942 = vrot.lane.b32.xlu0 %v1272, 32
      %v1943 = vpop.permute.xlu0 %1942
      %1944 = vrot.lane.b32.xlu0 %v1273, 32
      %v1945 = vpop.permute.xlu0 %1944
      %1946 = vrot.lane.b32.xlu0 %v1274, 32
      %v1947 = vpop.permute.xlu0 %1946
      %1948 = vrot.lane.b32.xlu0 %v1275, 32
      %v1949 = vpop.permute.xlu0 %1948
      %1950 = vrot.lane.b32.xlu0 %v1276, 32
      %v1951 = vpop.permute.xlu0 %1950
      %1968 = vmatpush.bf16.msra.mxu0 %v1935
      %1969 = vmatpush.bf16.msra.mxu0 %v1933
      %1970 = vmatpush.bf16.msra.mxu0 %v1931
      %1971 = vmatpush.bf16.msra.mxu0 %v1929
      %1972 = vmatpush.bf16.msra.mxu0 %v1927
      %1973 = vmatpush.bf16.msra.mxu0 %v1925
      %1974 = vmatpush.bf16.msra.mxu0 %v1923
      %1975 = vmatpush.bf16.msra.mxu0 %v1921
      %1976 = vmatmul.bf16.gmra.mxu0 %v1918
      %v1977 = vpop.f32.mrf.mxu0
      %v1978 = vadd.f32 0.0, %v1977
      %v1979 = vpop.f32.mrf.mxu0
      %v1980 = vadd.f32 0.0, %v1979
      %1981 = vdwg.mxu0
      %1982 = vmatpush.bf16.msra.mxu0 %v1951
      %1983 = vmatpush.bf16.msra.mxu0 %v1949
      %1984 = vmatpush.bf16.msra.mxu0 %v1947
      %1985 = vmatpush.bf16.msra.mxu0 %v1945
      %1986 = vmatpush.bf16.msra.mxu0 %v1943
      %1987 = vmatpush.bf16.msra.mxu0 %v1941
      %1988 = vmatpush.bf16.msra.mxu0 %v1939
      %1989 = vmatpush.bf16.msra.mxu0 %v1937
      %1990 = vmatmul.bf16.gmra.mxu0 %v1919
      %v1991 = vpop.f32.mrf.mxu0
      %v1992 = vadd.f32 %v1978, %v1991
      %v1993 = vpop.f32.mrf.mxu0
      %v1994 = vadd.f32 %v1980, %v1993
      %1995 = vdwg.mxu0
      %1998 = vrot.lane.b32.xlu0 %v1542, 32
      %v1999 = vpop.permute.xlu0 %1998
      %2000 = vrot.lane.b32.xlu0 %v1544, 32
      %v2001 = vpop.permute.xlu0 %2000
      %2006 = vrot.lane.b32.xlu0 %v1767, 64
      %v2007 = vpop.permute.xlu0 %2006
      %2008 = vrot.lane.b32.xlu0 %v1769, 64
      %v2009 = vpop.permute.xlu0 %2008
      %2014 = vrot.lane.b32.xlu0 %v1992, 96
      %v2015 = vpop.permute.xlu0 %2014
      %2016 = vrot.lane.b32.xlu0 %v1994, 96
      %v2017 = vpop.permute.xlu0 %2016
      %v2020 = vsel %vm1081, %v1317, %v1999
      %v2021 = vsel %vm1081, %v1319, %v2001
      %vm2022 = vcmask 523264
      %v2023 = vsel %vm2022, %v2020, %v2007
      %v2024 = vsel %vm2022, %v2021, %v2009
      %vm2025 = vcmask 785408
      %v2026 = vsel %vm2025, %v2023, %v2015
      %v2027 = vsel %vm2025, %v2024, %v2017
      %v2028 = vpack.c.bf16 %v2027, %v2026
      %v2029 = vld [vmem:[%s6] sm:$0xf]
      %v2030 = vld [vmem:[%s6 + $0x4] sm:$0xf]
      %v2031 = vld [vmem:[%s6 + $0x8] sm:$0xf]
      %v2032 = vld [vmem:[%s6 + $0xc] sm:$0xf]
      %v2033 = vld [vmem:[%s6 + $0x10] sm:$0xf]
      %v2034 = vld [vmem:[%s6 + $0x14] sm:$0xf]
      %v2035 = vld [vmem:[%s6 + $0x18] sm:$0xf]
      %v2036 = vld [vmem:[%s6 + $0x1c] sm:$0xf]
      %v2037 = vld [vmem:[%s6 + $0x20] sm:$0xf]
      %v2038 = vld [vmem:[%s6 + $0x24] sm:$0xf]
      %v2039 = vld [vmem:[%s6 + $0x28] sm:$0xf]
      %v2040 = vld [vmem:[%s6 + $0x2c] sm:$0xf]
      %v2041 = vld [vmem:[%s6 + $0x30] sm:$0xf]
      %v2042 = vld [vmem:[%s6 + $0x34] sm:$0xf]
      %v2043 = vld [vmem:[%s6 + $0x38] sm:$0xf]
      %v2044 = vld [vmem:[%s6 + $0x3c] sm:$0xf]
      %v2045 = vld [vmem:[%s7] sm:$0x1]
      %v2047 = vperm.slane %v2045, 0
      %v2065 = vunpack.c.l.b16 %v2029
      %v2066 = vunpack.c.l.b16 %v2030
      %v2067 = vunpack.c.l.b16 %v2031
      %v2068 = vunpack.c.l.b16 %v2032
      %v2069 = vunpack.c.l.b16 %v2033
      %v2070 = vunpack.c.l.b16 %v2034
      %v2071 = vunpack.c.l.b16 %v2035
      %v2072 = vunpack.c.l.b16 %v2036
      %v2073 = vunpack.c.l.b16 %v2037
      %v2074 = vunpack.c.l.b16 %v2038
      %v2075 = vunpack.c.l.b16 %v2039
      %v2076 = vunpack.c.l.b16 %v2040
      %v2077 = vunpack.c.l.b16 %v2041
      %v2078 = vunpack.c.l.b16 %v2042
      %v2079 = vunpack.c.l.b16 %v2043
      %v2080 = vunpack.c.l.b16 %v2044
      %v2081 = vpack.c.b16 %v2066, %v2065
      %v2082 = vpack.c.b16 %v2068, %v2067
      %v2083 = vpack.c.b16 %v2070, %v2069
      %v2084 = vpack.c.b16 %v2072, %v2071
      %v2085 = vpack.c.b16 %v2074, %v2073
      %v2086 = vpack.c.b16 %v2076, %v2075
      %v2087 = vpack.c.b16 %v2078, %v2077
      %v2088 = vpack.c.b16 %v2080, %v2079
      %2097 = vmatpush.bf16.msra.mxu0 %v2088
      %2098 = vmatpush.bf16.msra.mxu0 %v2087
      %2099 = vmatpush.bf16.msra.mxu0 %v2086
      %2100 = vmatpush.bf16.msra.mxu0 %v2085
      %2101 = vmatpush.bf16.msra.mxu0 %v2084
      %2102 = vmatpush.bf16.msra.mxu0 %v2083
      %2103 = vmatpush.bf16.msra.mxu0 %v2082
      %2104 = vmatpush.bf16.msra.mxu0 %v2081
      %2105 = vmatmul.bf16.gmra.mxu0 %v2028
      %v2106 = vpop.f32.mrf.mxu0
      %v2107 = vadd.f32 %v2047, %v2106
      %v2108 = vpop.f32.mrf.mxu0
      %v2109 = vadd.f32 %v2047, %v2108
      %2110 = vdwg.mxu0
      %v2111 = vadd.f32 %v307, %v2107
      %v2112 = vadd.f32 %v308, %v2109
      %2113 = vst [vmem:[%s305] sm:$0xff] %v2111
      %2114 = vst [vmem:[%s305 + $0x8] sm:$0xff] %v2112
      %p2115 = scmp.lt.s32.totalorder %s19, 1
      %s2116 = scalar_select %p2115, %s19, 1
      %s2117 = smul.addr %s2116, 2
      %s2118 = smul.addr %s2117, 8
      %s2119 = scalar_lea.vmem %s8, %s2118
      // Predicated region
      $region53: #{linformer_transformer_forward.11} parent=51 // pred_check
        %p2120 = pneg %p210
      $region54: #{linformer_transformer_forward.11} parent=51 // pred_check_branch
        %2122 = sbr.rel (%p2120) target = $region56
      $region55: #{linformer_transformer_forward.11} parent=51 // pred_region
        _
      $region56: #{linformer_transformer_forward.11} parent=51 // pred_fallthru
        _
    $region52: #{linformer_transformer_forward.11} parent=5 // pred_fallthru
      _
    %p2123 = scmp.le.s32.totalorder 2, %s14
    // Predicated region
    $region57: #{linformer_transformer_forward.11} parent=5 // pred_check
      %p2124 = pneg %p2123
    $region58: #{linformer_transformer_forward.11} parent=5 // pred_check_branch
      %2126 = sbr.rel (%p2124) target = $region60
    $region59: #{linformer_transformer_forward.11} parent=5 // pred_region
      %s2127 = ssub.s32 %s14, 2
      // Predicated region
      $region61: #{linformer_transformer_forward.11} parent=59 // pred_check
        %p2128 = pneg %p216
      $region62: #{linformer_transformer_forward.11} parent=59 // pred_check_branch
        %2130 = sbr.rel (%p2128) target = $region64
      $region63: #{linformer_transformer_forward.11} parent=59 // pred_region
        %p2131 = scmp.lt.s32.totalorder %s20, 1
        %s2132 = scalar_select %p2131, %s20, 1
        %s2133 = smul.addr %s2132, 2
        %s2134 = smul.addr %s2133, 8
        %s2135 = scalar_lea.vmem %s8, %s2134
      $region64: #{linformer_transformer_forward.11} parent=59 // pred_fallthru
        _
    $region60: #{linformer_transformer_forward.11} parent=5 // pred_fallthru
      _
  $region6: #{linformer_transformer_forward.11} parent=0 // loop_footer
    %s18 = sadd.s32 1, %s14
  $region7: #{linformer_transformer_forward.11} parent=0 // loop_footer_branch
    %13 = sbr.rel target = $region3
  $region8: #{linformer_transformer_forward.11} parent=0 // loop_exit
    _

</llo_original>
